<compile_context>
chip_gen: v6e
topology: v6e:2x2x1
jax: 0.10.0
libtpu: 0.0.40
codegen_flags: <defaults>
</compile_context>

<pallas_src>
import functools

import jax
import jax.numpy as jnp
from jax import lax
from jax.experimental import pallas as pl
from jax.experimental.pallas import tpu as pltpu


# ----------------------------- kernel helpers -------------------------------

def _mm(a, b):
    # (out, in) @ (in, B) -> (out, B), f32 accumulate on the MXU
    return jnp.dot(a, b, preferred_element_type=jnp.float32)


# --------------------------------- kernel -----------------------------------

def _pblnn_kernel(*refs, num_mid, dimh, dimy, smooth, convex, max_it, tol,
                  check_every, approx_recip):
    xT_ref, yT_ref = refs[0], refs[1]
    out_ref = refs[-1]
    params = iter(refs[2:-1])
    nxt = lambda: next(params)[...]

    x = xT_ref[...]                        # (dimx, Bt)  feature-major
    y = yT_ref[...]                        # (dimy, Bt)

    # packed parameters (see pack_pblnn_params for the layout)
    W0_cat = nxt()                         # (2*dimh+dimy, dimx)  [Wuu0; Wyu0; Wu0]
    b0_cat = nxt()                         # (2*dimh+dimy, 1)
    Wy0 = nxt()                            # (dimh, dimy)
    Wy0T = nxt()                           # (dimy, dimh)
    mids_p = [(nxt(), nxt(), nxt(), nxt(), nxt(), nxt()) for _ in range(num_mid)]
    WL_cat = nxt()                         # (dimy+1, dimh)       [WyuL; WzuL]
    bL_cat = nxt()                         # (dimy+1, 1)
    WzLT_c = nxt()                         # (dimh, 1)  clamped + transposed
    WyLT = nxt()                           # (dimy, 1)  transposed

    if approx_recip:
        recip = lambda v: pl.reciprocal(v, approx=True)
    else:
        recip = lambda v: 1.0 / v

    def softplus(a):
        return jnp.maximum(a, 0.0) + jnp.log(1.0 + jnp.exp(-jnp.abs(a)))

    def softplus_sigmoid(a):               # share one EUP exp between both
        e = jnp.exp(-jnp.abs(a))
        inv = recip(1.0 + e)
        sp = jnp.maximum(a, 0.0) + jnp.log(1.0 + e)
        sg = jnp.where(a >= 0.0, inv, e * inv)
        return sp, sg

    def sigmoid(a):
        e = jnp.exp(-jnp.abs(a))
        inv = recip(1.0 + e)
        return jnp.where(a >= 0.0, inv, e * inv)

    # ---- y-independent precompute (the "u" path depends only on x) ----
    h0 = _mm(W0_cat, x) + b0_cat
    prevU = softplus(h0[:dimh, :])
    c0 = h0[dimh:dimh + dimy, :]           # (dimy, Bt)
    k0 = h0[dimh + dimy:, :]               # (dimh, Bt)

    mids = []
    for (Wmid_cat, bmid_cat, Wz_c, Wy, WzT_c, WyT) in mids_p:
        h = _mm(Wmid_cat, prevU) + bmid_cat          # (3*dimh+dimy, Bt)
        u_new = softplus(h[:dimh, :])
        s_t = softplus(h[dimh:2 * dimh, :])          # (dimh, Bt)
        c_t = h[2 * dimh:2 * dimh + dimy, :]         # (dimy, Bt)
        k_t = h[2 * dimh + dimy:, :]                 # (dimh, Bt)
        mids.append((s_t, c_t, k_t, Wz_c, Wy, WzT_c, WyT))
        prevU = u_new

    hL = _mm(WL_cat, prevU) + bL_cat                 # (dimy+1, Bt)
    c_L = hL[:dimy, :]                               # (dimy, Bt)
    s_L = softplus(hL[dimy:, :])                     # (1, Bt)

    # loop-invariant pieces of the analytic gradient (hoisted out of the loop)
    base_gy = WyLT * c_L                             # (dimy, Bt)
    gz_init = WzLT_c * s_L                           # (dimh, Bt)

    inv_smooth = 1.0 / smooth
    step = 2.0 * smooth
    inv_b = 1.0 / y.shape[1]
    # TODO(synk): with >1 batch tile the convergence criterion is per-tile, not
    # the PyTorch global-batch mean (exact when the grid is a single tile).

    def grad_icnn(y1):
        # forward z-path; only sigmoids of the last pre-activation feed the
        # analytic backward, so softplus is skipped where its value is unused.
        a0 = _mm(Wy0, y1 * c0) + k0                  # (dimh, Bt)
        if num_mid == 0:
            sig0 = sigmoid(a0)
            sigs = []
        else:
            prevZ, sig0 = softplus_sigmoid(a0)
            sigs = []
            for t, (s_t, c_t, k_t, Wz_c, Wy, _, _) in enumerate(mids):
                a_t = _mm(Wz_c, prevZ * s_t) + _mm(Wy, y1 * c_t) + k_t
                if t < num_mid - 1:
                    prevZ, sg = softplus_sigmoid(a_t)
                else:
                    sg = sigmoid(a_t)
                sigs.append(sg)

        # analytic d(icnn_output)/dy
        gy = y1 * inv_smooth + base_gy
        gz = gz_init
        for t in range(num_mid - 1, -1, -1):
            s_t, c_t, _, _, _, WzT_c, WyT = mids[t]
            ga = gz * sigs[t]                        # (dimh, Bt)
            gz = _mm(WzT_c, ga) * s_t                # (dimh, Bt)
            gy = gy + _mm(WyT, ga) * c_t             # (dimy, Bt)
        ga0 = gz * sig0
        gy = gy + _mm(Wy0T, ga0) * c0
        return gy

    n_outer = -(-max_it // check_every)
    exact_blocks = (max_it % check_every) == 0

    def cond(carry):
        it, _, crit = carry
        return jnp.logical_and(it < n_outer, crit >= tol)

    def body(carry):
        it, y1, _ = carry
        base = it * check_every
        diff = y
        for j in range(check_every):                 # unrolled inner steps
            g = grad_icnn(y1)
            diff = y - g
            i_glob = base + j
            scale = step / (i_glob + 1).astype(jnp.float32)
            if not exact_blocks:
                scale = jnp.where(i_glob < max_it, scale, 0.0)
            y1 = y1 + scale * diff
        sq = jnp.sum(diff * diff, axis=0, keepdims=True)     # (1, Bt)
        crit = jnp.sum(jnp.sqrt(sq)) * inv_b                 # mean row L2 norm
        return (it + 1, y1, crit)

    y1_init = jnp.ones_like(y)                               # torch.ones(y.size())
    _, y1, _ = lax.while_loop(
        cond, body, (jnp.int32(0), y1_init, jnp.float32(jnp.inf)))

    f_ast1 = y1 + convex * y
    out_ref[...] = jnp.mean(f_ast1, axis=0, keepdims=True)   # f_ast2, (1, Bt)


# -------------------------------- wrapper ------------------------------------

def pblnn_forward(x, y, packed, *, num_mid, smooth, convex, max_it=500,
                  tol=1e-3, block_b=None, check_every=4, approx_recip=True):
    """PBLNN.forward(x, y) (default path: id=None, pr/eval=False).

    block_b: batch-tile width on the lane axis.  Default: single tile when
      B <= 512 (exact PyTorch global-batch criterion; best on v5e/v6e),
      otherwise the largest 128-aligned divisor of B that is <= 512.
      TODO(synk): on v7x pass block_b explicitly so the grid has >= 2 tiles
      (one per TensorCore); chip auto-detection is not wired up.
    """
    B, dimy = y.shape
    dimx = x.shape[1]
    dimh = packed[2].shape[0]          # Wy0 is (dimh, dimy)

    if block_b is None:
        if B <= 512:
            block_b = B
        else:
            block_b = 512
            while block_b > 0 and (B % block_b != 0):
                block_b -= 128
            assert block_b > 0, "B > 512 needs a 128-aligned divisor <= 512"
    assert B % block_b == 0, "batch must divide evenly into batch tiles"
    if block_b != B:
        assert block_b % 128 == 0, "batch tiles must be 128-lane aligned"
    grid = (B // block_b,)

    # feature-major: batch on the 128-lane axis, features on sublanes
    xT = jnp.asarray(x, jnp.float32).T     # (dimx, B)
    yT = jnp.asarray(y, jnp.float32).T     # (dimy, B)

    kernel = functools.partial(
        _pblnn_kernel, num_mid=num_mid, dimh=dimh, dimy=dimy, smooth=smooth,
        convex=convex, max_it=max_it, tol=tol, check_every=check_every,
        approx_recip=approx_recip)

    in_specs = [pl.BlockSpec((dimx, block_b), lambda b: (0, b)),
                pl.BlockSpec((dimy, block_b), lambda b: (0, b))]
    in_specs += [pl.BlockSpec(p.shape, lambda b: (0, 0)) for p in packed]

    out = pl.pallas_call(
        kernel,
        out_shape=jax.ShapeDtypeStruct((1, B), jnp.float32),
        grid=grid,
        in_specs=in_specs,
        out_specs=pl.BlockSpec((1, block_b), lambda b: (0, b)),   # lane-dense
        compiler_params=pltpu.CompilerParams(
            dimension_semantics=("parallel",)),   # megacore-shard tiles on v7x
    )(xT, yT, *packed)
    return out.T                                  # (B, 1)


# --------------------------- deterministic params ----------------------------

def init_pblnn_raw_params(key, dimx, dimy, dimh, num_hidden_layers):
    """PyTorch-default initialisation.  Only the parameters reachable from
    d(icnn)/dy are materialised (Wus[-1] only shifts the ICNN value)."""
    M = num_hidden_layers - 2
    keys = iter(jax.random.split(key, 8 + 8 * max(M, 1)))

    def linear(in_f, out_f, bias=True):
        kw, kb = jax.random.split(next(keys))
        bound = 1.0 / (in_f ** 0.5)
        W = jax.random.uniform(kw, (out_f, in_f), jnp.float32, -bound, bound)
        b = (jax.random.uniform(kb, (out_f,), jnp.float32, -bound, bound)
             if bias else None)
        return W, b

    def positive(in_f, out_f):                      # xavier_normal_
        std = (2.0 / (in_f + out_f)) ** 0.5
        return std * jax.random.normal(next(keys), (out_f, in_f), jnp.float32)

    raw = {}
    raw['Wuu0'], raw['buu0'] = linear(dimx, dimh)
    raw['Wyu0'], raw['byu0'] = linear(dimx, dimy)
    raw['Wy0'] = linear(dimy, dimh, bias=False)[0]
    raw['Wu0'], raw['bu0'] = linear(dimx, dimh)
    mids = []
    for _ in range(M):
        m = {}
        m['Wuu'], m['buu'] = linear(dimh, dimh)
        m['Wzu'], m['bzu'] = linear(dimh, dimh)
        m['Wz'] = positive(dimh, dimh)
        m['Wyu'], m['byu'] = linear(dimh, dimy)
        m['Wy'] = linear(dimy, dimh, bias=False)[0]
        m['Wu'], m['bu'] = linear(dimh, dimh)
        mids.append(m)
    raw['mids'] = mids
    raw['WzuL'], raw['bzuL'] = linear(dimh, 1)
    raw['WzL'] = positive(dimh, 1)
    raw['WyuL'], raw['byuL'] = linear(dimh, dimy)
    raw['WyL'] = linear(dimy, 1, bias=False)[0]
    return raw


def pack_pblnn_params(raw):
    """Clamp / concatenate / pre-transpose the raw PyTorch-layout weights into
    the feature-major slabs the kernel consumes (done once on the host)."""
    A = lambda W: jnp.asarray(W, jnp.float32)
    col = lambda b: A(b).reshape(-1, 1)
    clamp = lambda W: jnp.clip(A(W), 0.0, 1.0e10)   # PositiveLinear

    packed = [
        jnp.concatenate([A(raw['Wuu0']), A(raw['Wyu0']), A(raw['Wu0'])], axis=0),
        jnp.concatenate([col(raw['buu0']), col(raw['byu0']), col(raw['bu0'])],
                        axis=0),
        A(raw['Wy0']),             # (dimh, dimy)  forward
        A(raw['Wy0']).T,           # (dimy, dimh)  backward (pre-transposed)
    ]
    for m in raw['mids']:
        wz = clamp(m['Wz'])
        packed += [
            jnp.concatenate([A(m['Wuu']), A(m['Wzu']), A(m['Wyu']), A(m['Wu'])],
                            axis=0),
            jnp.concatenate([col(m['buu']), col(m['bzu']), col(m['byu']),
                             col(m['bu'])], axis=0),
            wz,                    # (dimh, dimh)  forward
            A(m['Wy']),            # (dimh, dimy)  forward
            wz.T,                  # (dimh, dimh)  backward
            A(m['Wy']).T,          # (dimy, dimh)  backward
        ]
    packed += [
        jnp.concatenate([A(raw['WyuL']), A(raw['WzuL'])], axis=0),   # (dimy+1, dimh)
        jnp.concatenate([col(raw['byuL']), col(raw['bzuL'])], axis=0),
        clamp(raw['WzL']).T,       # (dimh, 1)
        A(raw['WyL']).T,           # (dimy, 1)
    ]
    return packed


# --------------------------- pure-JAX reference -------------------------------

def _icnn_value_ref(raw, x, y, smooth):
    """Mirrors PBLNN.f's ICNN value (up to the y-independent Wus[-1] term,
    which drops out of d/dy)."""
    lin = lambda W, b, v: v @ jnp.asarray(W).T + (0.0 if b is None else jnp.asarray(b))
    clamp = lambda W: jnp.clip(jnp.asarray(W), 0.0, 1.0e10)

    prevU = x
    u = jax.nn.softplus(lin(raw['Wuu0'], raw['buu0'], prevU))
    yu_u = lin(raw['Wyu0'], raw['byu0'], prevU)
    z = jax.nn.softplus(lin(raw['Wy0'], None, y * yu_u)
                        + lin(raw['Wu0'], raw['bu0'], prevU))
    prevZ, prevU = z, u
    for m in raw['mids']:
        u = jax.nn.softplus(lin(m['Wuu'], m['buu'], prevU))
        zu_u = jax.nn.softplus(lin(m['Wzu'], m['bzu'], prevU))
        z_zu = (prevZ * zu_u) @ clamp(m['Wz']).T
        yu_u = lin(m['Wyu'], m['byu'], prevU)
        z_yu = lin(m['Wy'], None, y * yu_u)
        z_u = lin(m['Wu'], m['bu'], prevU)
        z = jax.nn.softplus(z_zu + z_yu + z_u)
        prevU, prevZ = u, z
    zu_u = jax.nn.softplus(lin(raw['WzuL'], raw['bzuL'], prevU))
    z_zu = (prevZ * zu_u) @ clamp(raw['WzL']).T
    yu_u = lin(raw['WyuL'], raw['byuL'], prevU)
    z_yu = lin(raw['WyL'], None, y * yu_u)
    z = z_zu + z_yu                  # (+ Wus[-1](prevU): y-independent, omitted)
    return z + 1.0 / (2.0 * smooth) * jnp.sum(y * y, axis=1, keepdims=True)


def _pblnn_forward_ref(raw, x, y, *, smooth, convex, max_it=500, tol=1e-3):
    step = 2.0 * smooth

    def grad_icnn(y1):
        return jax.grad(lambda yy: jnp.sum(_icnn_value_ref(raw, x, yy, smooth)))(y1)

    def cond(c):
        i, _, crit = c
        return jnp.logical_and(i < max_it, crit >= tol)

    def body(c):
        i, y1, _ = c
        g = grad_icnn(y1)
        d = y - g
        crit = jnp.mean(jnp.sqrt(jnp.sum(d * d, axis=1)))
        y1 = y1 + (step / (i + 1).astype(jnp.float32)) * d
        return (i + 1, y1, crit)

    _, y1, _ = lax.while_loop(
        cond, body, (jnp.int32(0), jnp.ones_like(y), jnp.float32(jnp.inf)))
    return jnp.mean(y1 + convex * y, axis=1, keepdims=True)


# ---------------------------------- main --------------------------------------

if __name__ == "__main__":
    dimx, dimy, dimh = 8, 8, 32
    num_hidden_layers = 3            # -> num_mid = 1
    B = 128                          # batch sits on the 128-lane axis (lane-dense)
    smooth, convex = 1.0, 1.0

    key = jax.random.PRNGKey(0)
    kx, ky, kp = jax.random.split(key, 3)
    x = jax.random.normal(kx, (B, dimx), jnp.float32)
    y = jax.random.normal(ky, (B, dimy), jnp.float32)

    raw = init_pblnn_raw_params(kp, dimx, dimy, dimh, num_hidden_layers)
    packed = pack_pblnn_params(raw)

    out = pblnn_forward(x, y, packed, num_mid=num_hidden_layers - 2,
                        smooth=smooth, convex=convex, max_it=500)
    out = jax.block_until_ready(out)
    assert out.shape == (B, 1), out.shape
    assert bool(jnp.all(jnp.isfinite(out)))

    # Cross-check against a pure-JAX reference that uses jax.grad for the ICNN
    # gradient and checks convergence every iteration (validates the analytic
    # backward, the feature-major layout and the amortized-check loop).
    ref = jax.jit(lambda xx, yy: _pblnn_forward_ref(
        raw, xx, yy, smooth=smooth, convex=convex, max_it=500))(x, y)
    ref = jax.block_until_ready(ref)
    assert bool(jnp.allclose(out, ref, rtol=1e-1, atol=1e-1)), (
        float(jnp.max(jnp.abs(out - ref))))

    print("KERNEL_OK")
</pallas_src>

<mosaic_0001>
module attributes {stable_mosaic.version = 11 : i64} {
  func.func @_pblnn_kernel(%arg0: i32, %arg1: memref<8x128xf32, #tpu.memory_space<vmem>>, %arg2: memref<8x128xf32, #tpu.memory_space<vmem>>, %arg3: memref<72x8xf32, #tpu.memory_space<vmem>>, %arg4: memref<72x1xf32, #tpu.memory_space<vmem>>, %arg5: memref<32x8xf32, #tpu.memory_space<vmem>>, %arg6: memref<8x32xf32, #tpu.memory_space<vmem>>, %arg7: memref<104x32xf32, #tpu.memory_space<vmem>>, %arg8: memref<104x1xf32, #tpu.memory_space<vmem>>, %arg9: memref<32x32xf32, #tpu.memory_space<vmem>>, %arg10: memref<32x8xf32, #tpu.memory_space<vmem>>, %arg11: memref<32x32xf32, #tpu.memory_space<vmem>>, %arg12: memref<8x32xf32, #tpu.memory_space<vmem>>, %arg13: memref<9x32xf32, #tpu.memory_space<vmem>>, %arg14: memref<9x1xf32, #tpu.memory_space<vmem>>, %arg15: memref<32x1xf32, #tpu.memory_space<vmem>>, %arg16: memref<8x1xf32, #tpu.memory_space<vmem>>, %arg17: memref<1x128xf32, #tpu.memory_space<vmem>>) attributes {dimension_semantics = [#tpu.dimension_semantics<parallel>], iteration_bounds = array<i64: 1>, scalar_prefetch = 0 : i64, scratch_operands = 0 : i64, tpu.core_type = #tpu.core_type<tc>, window_params = [{transform_indices = @transform_0, window_bounds = array<i64: 8, 128>}, {transform_indices = @transform_1, window_bounds = array<i64: 8, 128>}, {pipeline_mode = #tpu.pipeline_mode<synchronous>, transform_indices = @transform_2, window_bounds = array<i64: 72, 8>}, {pipeline_mode = #tpu.pipeline_mode<synchronous>, transform_indices = @transform_3, window_bounds = array<i64: 72, 1>}, {pipeline_mode = #tpu.pipeline_mode<synchronous>, transform_indices = @transform_4, window_bounds = array<i64: 32, 8>}, {pipeline_mode = #tpu.pipeline_mode<synchronous>, transform_indices = @transform_5, window_bounds = array<i64: 8, 32>}, {pipeline_mode = #tpu.pipeline_mode<synchronous>, transform_indices = @transform_6, window_bounds = array<i64: 104, 32>}, {pipeline_mode = #tpu.pipeline_mode<synchronous>, transform_indices = @transform_7, window_bounds = array<i64: 104, 1>}, {pipeline_mode = #tpu.pipeline_mode<synchronous>, transform_indices = @transform_8, window_bounds = array<i64: 32, 32>}, {pipeline_mode = #tpu.pipeline_mode<synchronous>, transform_indices = @transform_9, window_bounds = array<i64: 32, 8>}, {pipeline_mode = #tpu.pipeline_mode<synchronous>, transform_indices = @transform_10, window_bounds = array<i64: 32, 32>}, {pipeline_mode = #tpu.pipeline_mode<synchronous>, transform_indices = @transform_11, window_bounds = array<i64: 8, 32>}, {pipeline_mode = #tpu.pipeline_mode<synchronous>, transform_indices = @transform_12, window_bounds = array<i64: 9, 32>}, {pipeline_mode = #tpu.pipeline_mode<synchronous>, transform_indices = @transform_13, window_bounds = array<i64: 9, 1>}, {pipeline_mode = #tpu.pipeline_mode<synchronous>, transform_indices = @transform_14, window_bounds = array<i64: 32, 1>}, {pipeline_mode = #tpu.pipeline_mode<synchronous>, transform_indices = @transform_15, window_bounds = array<i64: 8, 1>}, {transform_indices = @transform_16, window_bounds = array<i64: 1, 128>}]} {
    %c0 = arith.constant 0 : index
    %c0_0 = arith.constant 0 : index
    %0 = vector.load %arg1[%c0, %c0_0] : memref<8x128xf32, #tpu.memory_space<vmem>>, vector<8x128xf32>
    %c0_1 = arith.constant 0 : index
    %c0_2 = arith.constant 0 : index
    %1 = vector.load %arg2[%c0_1, %c0_2] : memref<8x128xf32, #tpu.memory_space<vmem>>, vector<8x128xf32>
    %c0_3 = arith.constant 0 : index
    %c0_4 = arith.constant 0 : index
    %2 = vector.load %arg3[%c0_3, %c0_4] : memref<72x8xf32, #tpu.memory_space<vmem>>, vector<72x8xf32>
    %c0_5 = arith.constant 0 : index
    %c0_6 = arith.constant 0 : index
    %3 = vector.load %arg4[%c0_5, %c0_6] : memref<72x1xf32, #tpu.memory_space<vmem>>, vector<72x1xf32>
    %c0_7 = arith.constant 0 : index
    %c0_8 = arith.constant 0 : index
    %4 = vector.load %arg5[%c0_7, %c0_8] : memref<32x8xf32, #tpu.memory_space<vmem>>, vector<32x8xf32>
    %c0_9 = arith.constant 0 : index
    %c0_10 = arith.constant 0 : index
    %5 = vector.load %arg6[%c0_9, %c0_10] : memref<8x32xf32, #tpu.memory_space<vmem>>, vector<8x32xf32>
    %c0_11 = arith.constant 0 : index
    %c0_12 = arith.constant 0 : index
    %6 = vector.load %arg7[%c0_11, %c0_12] : memref<104x32xf32, #tpu.memory_space<vmem>>, vector<104x32xf32>
    %c0_13 = arith.constant 0 : index
    %c0_14 = arith.constant 0 : index
    %7 = vector.load %arg8[%c0_13, %c0_14] : memref<104x1xf32, #tpu.memory_space<vmem>>, vector<104x1xf32>
    %c0_15 = arith.constant 0 : index
    %c0_16 = arith.constant 0 : index
    %8 = vector.load %arg9[%c0_15, %c0_16] : memref<32x32xf32, #tpu.memory_space<vmem>>, vector<32x32xf32>
    %c0_17 = arith.constant 0 : index
    %c0_18 = arith.constant 0 : index
    %9 = vector.load %arg10[%c0_17, %c0_18] : memref<32x8xf32, #tpu.memory_space<vmem>>, vector<32x8xf32>
    %c0_19 = arith.constant 0 : index
    %c0_20 = arith.constant 0 : index
    %10 = vector.load %arg11[%c0_19, %c0_20] : memref<32x32xf32, #tpu.memory_space<vmem>>, vector<32x32xf32>
    %c0_21 = arith.constant 0 : index
    %c0_22 = arith.constant 0 : index
    %11 = vector.load %arg12[%c0_21, %c0_22] : memref<8x32xf32, #tpu.memory_space<vmem>>, vector<8x32xf32>
    %c0_23 = arith.constant 0 : index
    %c0_24 = arith.constant 0 : index
    %12 = vector.load %arg13[%c0_23, %c0_24] : memref<9x32xf32, #tpu.memory_space<vmem>>, vector<9x32xf32>
    %c0_25 = arith.constant 0 : index
    %c0_26 = arith.constant 0 : index
    %13 = vector.load %arg14[%c0_25, %c0_26] : memref<9x1xf32, #tpu.memory_space<vmem>>, vector<9x1xf32>
    %c0_27 = arith.constant 0 : index
    %c0_28 = arith.constant 0 : index
    %14 = vector.load %arg15[%c0_27, %c0_28] : memref<32x1xf32, #tpu.memory_space<vmem>>, vector<32x1xf32>
    %c0_29 = arith.constant 0 : index
    %c0_30 = arith.constant 0 : index
    %15 = vector.load %arg16[%c0_29, %c0_30] : memref<8x1xf32, #tpu.memory_space<vmem>>, vector<8x1xf32>
    %cst = arith.constant dense<0.000000e+00> : vector<72x128xf32>
    %16 = tpu.matmul %2, %0, %cst {dimension_numbers = #tpu.dot_dimension_numbers<[1], [0], [0], [1], [0, 0, 1, 1], [], []>} : vector<72x8xf32>, vector<8x128xf32>, vector<72x128xf32> -> vector<72x128xf32>
    %17 = vector.broadcast %3 : vector<72x1xf32> to vector<72x128xf32>
    %18 = arith.addf %16, %17 : vector<72x128xf32>
    %19 = vector.extract_strided_slice %18 {offsets = [0, 0], sizes = [32, 128], strides = [1, 1]} : vector<72x128xf32> to vector<32x128xf32>
    %cst_31 = arith.constant 0.000000e+00 : f32
    %20 = vector.broadcast %cst_31 : f32 to vector<32x128xf32>
    %21 = arith.maximumf %19, %20 : vector<32x128xf32>
    %22 = math.absf %19 : vector<32x128xf32>
    %cst_32 = arith.constant 0.000000e+00 : f32
    %23 = vector.broadcast %cst_32 : f32 to vector<32x128xf32>
    %24 = arith.subf %23, %22 : vector<32x128xf32>
    %25 = math.exp %24 : vector<32x128xf32>
    %cst_33 = arith.constant 1.000000e+00 : f32
    %26 = vector.broadcast %cst_33 : f32 to vector<32x128xf32>
    %27 = arith.addf %26, %25 : vector<32x128xf32>
    %28 = math.log %27 : vector<32x128xf32>
    %29 = arith.addf %21, %28 : vector<32x128xf32>
    %30 = vector.extract_strided_slice %18 {offsets = [32, 0], sizes = [8, 128], strides = [1, 1]} : vector<72x128xf32> to vector<8x128xf32>
    %31 = vector.extract_strided_slice %18 {offsets = [40, 0], sizes = [32, 128], strides = [1, 1]} : vector<72x128xf32> to vector<32x128xf32>
    %cst_34 = arith.constant dense<0.000000e+00> : vector<104x128xf32>
    %32 = tpu.matmul %6, %29, %cst_34 {dimension_numbers = #tpu.dot_dimension_numbers<[1], [0], [0], [1], [0, 0, 1, 1], [], []>} : vector<104x32xf32>, vector<32x128xf32>, vector<104x128xf32> -> vector<104x128xf32>
    %33 = vector.broadcast %7 : vector<104x1xf32> to vector<104x128xf32>
    %34 = arith.addf %32, %33 : vector<104x128xf32>
    %35 = vector.extract_strided_slice %34 {offsets = [0, 0], sizes = [32, 128], strides = [1, 1]} : vector<104x128xf32> to vector<32x128xf32>
    %cst_35 = arith.constant 0.000000e+00 : f32
    %36 = vector.broadcast %cst_35 : f32 to vector<32x128xf32>
    %37 = arith.maximumf %35, %36 : vector<32x128xf32>
    %38 = math.absf %35 : vector<32x128xf32>
    %cst_36 = arith.constant 0.000000e+00 : f32
    %39 = vector.broadcast %cst_36 : f32 to vector<32x128xf32>
    %40 = arith.subf %39, %38 : vector<32x128xf32>
    %41 = math.exp %40 : vector<32x128xf32>
    %cst_37 = arith.constant 1.000000e+00 : f32
    %42 = vector.broadcast %cst_37 : f32 to vector<32x128xf32>
    %43 = arith.addf %42, %41 : vector<32x128xf32>
    %44 = math.log %43 : vector<32x128xf32>
    %45 = arith.addf %37, %44 : vector<32x128xf32>
    %46 = vector.extract_strided_slice %34 {offsets = [32, 0], sizes = [32, 128], strides = [1, 1]} : vector<104x128xf32> to vector<32x128xf32>
    %cst_38 = arith.constant 0.000000e+00 : f32
    %47 = vector.broadcast %cst_38 : f32 to vector<32x128xf32>
    %48 = arith.maximumf %46, %47 : vector<32x128xf32>
    %49 = math.absf %46 : vector<32x128xf32>
    %cst_39 = arith.constant 0.000000e+00 : f32
    %50 = vector.broadcast %cst_39 : f32 to vector<32x128xf32>
    %51 = arith.subf %50, %49 : vector<32x128xf32>
    %52 = math.exp %51 : vector<32x128xf32>
    %cst_40 = arith.constant 1.000000e+00 : f32
    %53 = vector.broadcast %cst_40 : f32 to vector<32x128xf32>
    %54 = arith.addf %53, %52 : vector<32x128xf32>
    %55 = math.log %54 : vector<32x128xf32>
    %56 = arith.addf %48, %55 : vector<32x128xf32>
    %57 = vector.extract_strided_slice %34 {offsets = [64, 0], sizes = [8, 128], strides = [1, 1]} : vector<104x128xf32> to vector<8x128xf32>
    %58 = vector.extract_strided_slice %34 {offsets = [72, 0], sizes = [32, 128], strides = [1, 1]} : vector<104x128xf32> to vector<32x128xf32>
    %cst_41 = arith.constant dense<0.000000e+00> : vector<9x128xf32>
    %59 = tpu.matmul %12, %45, %cst_41 {dimension_numbers = #tpu.dot_dimension_numbers<[1], [0], [0], [1], [0, 0, 1, 1], [], []>} : vector<9x32xf32>, vector<32x128xf32>, vector<9x128xf32> -> vector<9x128xf32>
    %60 = vector.broadcast %13 : vector<9x1xf32> to vector<9x128xf32>
    %61 = arith.addf %59, %60 : vector<9x128xf32>
    %62 = vector.extract_strided_slice %61 {offsets = [0, 0], sizes = [8, 128], strides = [1, 1]} : vector<9x128xf32> to vector<8x128xf32>
    %63 = vector.extract_strided_slice %61 {offsets = [8, 0], sizes = [1, 128], strides = [1, 1]} : vector<9x128xf32> to vector<1x128xf32>
    %cst_42 = arith.constant 0.000000e+00 : f32
    %64 = vector.broadcast %cst_42 : f32 to vector<1x128xf32>
    %65 = arith.maximumf %63, %64 : vector<1x128xf32>
    %66 = math.absf %63 : vector<1x128xf32>
    %cst_43 = arith.constant 0.000000e+00 : f32
    %67 = vector.broadcast %cst_43 : f32 to vector<1x128xf32>
    %68 = arith.subf %67, %66 : vector<1x128xf32>
    %69 = math.exp %68 : vector<1x128xf32>
    %cst_44 = arith.constant 1.000000e+00 : f32
    %70 = vector.broadcast %cst_44 : f32 to vector<1x128xf32>
    %71 = arith.addf %70, %69 : vector<1x128xf32>
    %72 = math.log %71 : vector<1x128xf32>
    %73 = arith.addf %65, %72 : vector<1x128xf32>
    %74 = vector.broadcast %15 : vector<8x1xf32> to vector<8x128xf32>
    %75 = arith.mulf %74, %62 : vector<8x128xf32>
    %76 = vector.broadcast %14 : vector<32x1xf32> to vector<32x128xf32>
    %77 = vector.broadcast %73 : vector<1x128xf32> to vector<32x128xf32>
    %78 = arith.mulf %76, %77 : vector<32x128xf32>
    %cst_45 = arith.constant 1.000000e+00 : f32
    %79 = vector.broadcast %cst_45 : f32 to vector<8x128xf32>
    %c0_i32 = arith.constant 0 : i32
    %cst_46 = arith.constant 0x7F800000 : f32
    %80:3 = scf.while (%arg18 = %c0_i32, %arg19 = %79, %arg20 = %cst_46) : (i32, vector<8x128xf32>, f32) -> (i32, vector<8x128xf32>, f32) {
      %c125_i32 = arith.constant 125 : i32
      %89 = arith.cmpi slt, %arg18, %c125_i32 : i32
      %cst_52 = arith.constant 1.000000e-03 : f32
      %90 = arith.cmpf oge, %arg20, %cst_52 : f32
      %91 = arith.andi %89, %90 : i1
      scf.condition(%91) %arg18, %arg19, %arg20 : i32, vector<8x128xf32>, f32
    } do {
    ^bb0(%arg18: i32, %arg19: vector<8x128xf32>, %arg20: f32):
      %c4_i32 = arith.constant 4 : i32
      %89 = arith.muli %arg18, %c4_i32 : i32
      %90 = arith.mulf %arg19, %30 : vector<8x128xf32>
      %cst_52 = arith.constant dense<0.000000e+00> : vector<32x128xf32>
      %91 = tpu.matmul %4, %90, %cst_52 {dimension_numbers = #tpu.dot_dimension_numbers<[1], [0], [0], [1], [0, 0, 1, 1], [], []>} : vector<32x8xf32>, vector<8x128xf32>, vector<32x128xf32> -> vector<32x128xf32>
      %92 = arith.addf %91, %31 : vector<32x128xf32>
      %93 = math.absf %92 : vector<32x128xf32>
      %cst_53 = arith.constant 0.000000e+00 : f32
      %94 = vector.broadcast %cst_53 : f32 to vector<32x128xf32>
      %95 = arith.subf %94, %93 : vector<32x128xf32>
      %96 = math.exp %95 : vector<32x128xf32>
      %cst_54 = arith.constant 1.000000e+00 : f32
      %97 = vector.broadcast %cst_54 : f32 to vector<32x128xf32>
      %98 = arith.addf %97, %96 : vector<32x128xf32>
      %99 = tpu.reciprocal %98 {approx = true} : vector<32x128xf32> -> vector<32x128xf32>
      %cst_55 = arith.constant 0.000000e+00 : f32
      %100 = vector.broadcast %cst_55 : f32 to vector<32x128xf32>
      %101 = arith.maximumf %92, %100 : vector<32x128xf32>
      %cst_56 = arith.constant 1.000000e+00 : f32
      %102 = vector.broadcast %cst_56 : f32 to vector<32x128xf32>
      %103 = arith.addf %102, %96 : vector<32x128xf32>
      %104 = math.log %103 : vector<32x128xf32>
      %105 = arith.addf %101, %104 : vector<32x128xf32>
      %cst_57 = arith.constant 0.000000e+00 : f32
      %106 = vector.broadcast %cst_57 : f32 to vector<32x128xf32>
      %107 = arith.cmpf oge, %92, %106 : vector<32x128xf32>
      %108 = arith.mulf %96, %99 : vector<32x128xf32>
      %109 = arith.select %107, %99, %108 : vector<32x128xi1>, vector<32x128xf32>
      %110 = arith.mulf %105, %56 : vector<32x128xf32>
      %cst_58 = arith.constant dense<0.000000e+00> : vector<32x128xf32>
      %111 = tpu.matmul %8, %110, %cst_58 {dimension_numbers = #tpu.dot_dimension_numbers<[1], [0], [0], [1], [0, 0, 1, 1], [], []>} : vector<32x32xf32>, vector<32x128xf32>, vector<32x128xf32> -> vector<32x128xf32>
      %112 = arith.mulf %arg19, %57 : vector<8x128xf32>
      %cst_59 = arith.constant dense<0.000000e+00> : vector<32x128xf32>
      %113 = tpu.matmul %9, %112, %cst_59 {dimension_numbers = #tpu.dot_dimension_numbers<[1], [0], [0], [1], [0, 0, 1, 1], [], []>} : vector<32x8xf32>, vector<8x128xf32>, vector<32x128xf32> -> vector<32x128xf32>
      %114 = arith.addf %111, %113 : vector<32x128xf32>
      %115 = arith.addf %114, %58 : vector<32x128xf32>
      %116 = math.absf %115 : vector<32x128xf32>
      %cst_60 = arith.constant 0.000000e+00 : f32
      %117 = vector.broadcast %cst_60 : f32 to vector<32x128xf32>
      %118 = arith.subf %117, %116 : vector<32x128xf32>
      %119 = math.exp %118 : vector<32x128xf32>
      %cst_61 = arith.constant 1.000000e+00 : f32
      %120 = vector.broadcast %cst_61 : f32 to vector<32x128xf32>
      %121 = arith.addf %120, %119 : vector<32x128xf32>
      %122 = tpu.reciprocal %121 {approx = true} : vector<32x128xf32> -> vector<32x128xf32>
      %cst_62 = arith.constant 0.000000e+00 : f32
      %123 = vector.broadcast %cst_62 : f32 to vector<32x128xf32>
      %124 = arith.cmpf oge, %115, %123 : vector<32x128xf32>
      %125 = arith.mulf %119, %122 : vector<32x128xf32>
      %126 = arith.select %124, %122, %125 : vector<32x128xi1>, vector<32x128xf32>
      %cst_63 = arith.constant 1.000000e+00 : f32
      %127 = vector.broadcast %cst_63 : f32 to vector<8x128xf32>
      %128 = arith.mulf %arg19, %127 : vector<8x128xf32>
      %129 = arith.addf %128, %75 : vector<8x128xf32>
      %130 = arith.mulf %78, %126 : vector<32x128xf32>
      %cst_64 = arith.constant dense<0.000000e+00> : vector<32x128xf32>
      %131 = tpu.matmul %10, %130, %cst_64 {dimension_numbers = #tpu.dot_dimension_numbers<[1], [0], [0], [1], [0, 0, 1, 1], [], []>} : vector<32x32xf32>, vector<32x128xf32>, vector<32x128xf32> -> vector<32x128xf32>
      %132 = arith.mulf %131, %56 : vector<32x128xf32>
      %cst_65 = arith.constant dense<0.000000e+00> : vector<8x128xf32>
      %133 = tpu.matmul %11, %130, %cst_65 {dimension_numbers = #tpu.dot_dimension_numbers<[1], [0], [0], [1], [0, 0, 1, 1], [], []>} : vector<8x32xf32>, vector<32x128xf32>, vector<8x128xf32> -> vector<8x128xf32>
      %134 = arith.mulf %133, %57 : vector<8x128xf32>
      %135 = arith.addf %129, %134 : vector<8x128xf32>
      %136 = arith.mulf %132, %109 : vector<32x128xf32>
      %cst_66 = arith.constant dense<0.000000e+00> : vector<8x128xf32>
      %137 = tpu.matmul %5, %136, %cst_66 {dimension_numbers = #tpu.dot_dimension_numbers<[1], [0], [0], [1], [0, 0, 1, 1], [], []>} : vector<8x32xf32>, vector<32x128xf32>, vector<8x128xf32> -> vector<8x128xf32>
      %138 = arith.mulf %137, %30 : vector<8x128xf32>
      %139 = arith.addf %135, %138 : vector<8x128xf32>
      %140 = arith.subf %1, %139 : vector<8x128xf32>
      %c0_i32_67 = arith.constant 0 : i32
      %141 = arith.addi %89, %c0_i32_67 : i32
      %c1_i32 = arith.constant 1 : i32
      %142 = arith.addi %141, %c1_i32 : i32
      %143 = arith.sitofp %142 : i32 to f32
      %cst_68 = arith.constant 2.000000e+00 : f32
      %144 = arith.divf %cst_68, %143 : f32
      %145 = vector.broadcast %144 : f32 to vector<8x128xf32>
      %146 = arith.mulf %145, %140 : vector<8x128xf32>
      %147 = arith.addf %arg19, %146 : vector<8x128xf32>
      %148 = arith.mulf %147, %30 : vector<8x128xf32>
      %cst_69 = arith.constant dense<0.000000e+00> : vector<32x128xf32>
      %149 = tpu.matmul %4, %148, %cst_69 {dimension_numbers = #tpu.dot_dimension_numbers<[1], [0], [0], [1], [0, 0, 1, 1], [], []>} : vector<32x8xf32>, vector<8x128xf32>, vector<32x128xf32> -> vector<32x128xf32>
      %150 = arith.addf %149, %31 : vector<32x128xf32>
      %151 = math.absf %150 : vector<32x128xf32>
      %cst_70 = arith.constant 0.000000e+00 : f32
      %152 = vector.broadcast %cst_70 : f32 to vector<32x128xf32>
      %153 = arith.subf %152, %151 : vector<32x128xf32>
      %154 = math.exp %153 : vector<32x128xf32>
      %cst_71 = arith.constant 1.000000e+00 : f32
      %155 = vector.broadcast %cst_71 : f32 to vector<32x128xf32>
      %156 = arith.addf %155, %154 : vector<32x128xf32>
      %157 = tpu.reciprocal %156 {approx = true} : vector<32x128xf32> -> vector<32x128xf32>
      %cst_72 = arith.constant 0.000000e+00 : f32
      %158 = vector.broadcast %cst_72 : f32 to vector<32x128xf32>
      %159 = arith.maximumf %150, %158 : vector<32x128xf32>
      %cst_73 = arith.constant 1.000000e+00 : f32
      %160 = vector.broadcast %cst_73 : f32 to vector<32x128xf32>
      %161 = arith.addf %160, %154 : vector<32x128xf32>
      %162 = math.log %161 : vector<32x128xf32>
      %163 = arith.addf %159, %162 : vector<32x128xf32>
      %cst_74 = arith.constant 0.000000e+00 : f32
      %164 = vector.broadcast %cst_74 : f32 to vector<32x128xf32>
      %165 = arith.cmpf oge, %150, %164 : vector<32x128xf32>
      %166 = arith.mulf %154, %157 : vector<32x128xf32>
      %167 = arith.select %165, %157, %166 : vector<32x128xi1>, vector<32x128xf32>
      %168 = arith.mulf %163, %56 : vector<32x128xf32>
      %cst_75 = arith.constant dense<0.000000e+00> : vector<32x128xf32>
      %169 = tpu.matmul %8, %168, %cst_75 {dimension_numbers = #tpu.dot_dimension_numbers<[1], [0], [0], [1], [0, 0, 1, 1], [], []>} : vector<32x32xf32>, vector<32x128xf32>, vector<32x128xf32> -> vector<32x128xf32>
      %170 = arith.mulf %147, %57 : vector<8x128xf32>
      %cst_76 = arith.constant dense<0.000000e+00> : vector<32x128xf32>
      %171 = tpu.matmul %9, %170, %cst_76 {dimension_numbers = #tpu.dot_dimension_numbers<[1], [0], [0], [1], [0, 0, 1, 1], [], []>} : vector<32x8xf32>, vector<8x128xf32>, vector<32x128xf32> -> vector<32x128xf32>
      %172 = arith.addf %169, %171 : vector<32x128xf32>
      %173 = arith.addf %172, %58 : vector<32x128xf32>
      %174 = math.absf %173 : vector<32x128xf32>
      %cst_77 = arith.constant 0.000000e+00 : f32
      %175 = vector.broadcast %cst_77 : f32 to vector<32x128xf32>
      %176 = arith.subf %175, %174 : vector<32x128xf32>
      %177 = math.exp %176 : vector<32x128xf32>
      %cst_78 = arith.constant 1.000000e+00 : f32
      %178 = vector.broadcast %cst_78 : f32 to vector<32x128xf32>
      %179 = arith.addf %178, %177 : vector<32x128xf32>
      %180 = tpu.reciprocal %179 {approx = true} : vector<32x128xf32> -> vector<32x128xf32>
      %cst_79 = arith.constant 0.000000e+00 : f32
      %181 = vector.broadcast %cst_79 : f32 to vector<32x128xf32>
      %182 = arith.cmpf oge, %173, %181 : vector<32x128xf32>
      %183 = arith.mulf %177, %180 : vector<32x128xf32>
      %184 = arith.select %182, %180, %183 : vector<32x128xi1>, vector<32x128xf32>
      %cst_80 = arith.constant 1.000000e+00 : f32
      %185 = vector.broadcast %cst_80 : f32 to vector<8x128xf32>
      %186 = arith.mulf %147, %185 : vector<8x128xf32>
      %187 = arith.addf %186, %75 : vector<8x128xf32>
      %188 = arith.mulf %78, %184 : vector<32x128xf32>
      %cst_81 = arith.constant dense<0.000000e+00> : vector<32x128xf32>
      %189 = tpu.matmul %10, %188, %cst_81 {dimension_numbers = #tpu.dot_dimension_numbers<[1], [0], [0], [1], [0, 0, 1, 1], [], []>} : vector<32x32xf32>, vector<32x128xf32>, vector<32x128xf32> -> vector<32x128xf32>
      %190 = arith.mulf %189, %56 : vector<32x128xf32>
      %cst_82 = arith.constant dense<0.000000e+00> : vector<8x128xf32>
      %191 = tpu.matmul %11, %188, %cst_82 {dimension_numbers = #tpu.dot_dimension_numbers<[1], [0], [0], [1], [0, 0, 1, 1], [], []>} : vector<8x32xf32>, vector<32x128xf32>, vector<8x128xf32> -> vector<8x128xf32>
      %192 = arith.mulf %191, %57 : vector<8x128xf32>
      %193 = arith.addf %187, %192 : vector<8x128xf32>
      %194 = arith.mulf %190, %167 : vector<32x128xf32>
      %cst_83 = arith.constant dense<0.000000e+00> : vector<8x128xf32>
      %195 = tpu.matmul %5, %194, %cst_83 {dimension_numbers = #tpu.dot_dimension_numbers<[1], [0], [0], [1], [0, 0, 1, 1], [], []>} : vector<8x32xf32>, vector<32x128xf32>, vector<8x128xf32> -> vector<8x128xf32>
      %196 = arith.mulf %195, %30 : vector<8x128xf32>
      %197 = arith.addf %193, %196 : vector<8x128xf32>
      %198 = arith.subf %1, %197 : vector<8x128xf32>
      %c1_i32_84 = arith.constant 1 : i32
      %199 = arith.addi %89, %c1_i32_84 : i32
      %c1_i32_85 = arith.constant 1 : i32
      %200 = arith.addi %199, %c1_i32_85 : i32
      %201 = arith.sitofp %200 : i32 to f32
      %cst_86 = arith.constant 2.000000e+00 : f32
      %202 = arith.divf %cst_86, %201 : f32
      %203 = vector.broadcast %202 : f32 to vector<8x128xf32>
      %204 = arith.mulf %203, %198 : vector<8x128xf32>
      %205 = arith.addf %147, %204 : vector<8x128xf32>
      %206 = arith.mulf %205, %30 : vector<8x128xf32>
      %cst_87 = arith.constant dense<0.000000e+00> : vector<32x128xf32>
      %207 = tpu.matmul %4, %206, %cst_87 {dimension_numbers = #tpu.dot_dimension_numbers<[1], [0], [0], [1], [0, 0, 1, 1], [], []>} : vector<32x8xf32>, vector<8x128xf32>, vector<32x128xf32> -> vector<32x128xf32>
      %208 = arith.addf %207, %31 : vector<32x128xf32>
      %209 = math.absf %208 : vector<32x128xf32>
      %cst_88 = arith.constant 0.000000e+00 : f32
      %210 = vector.broadcast %cst_88 : f32 to vector<32x128xf32>
      %211 = arith.subf %210, %209 : vector<32x128xf32>
      %212 = math.exp %211 : vector<32x128xf32>
      %cst_89 = arith.constant 1.000000e+00 : f32
      %213 = vector.broadcast %cst_89 : f32 to vector<32x128xf32>
      %214 = arith.addf %213, %212 : vector<32x128xf32>
      %215 = tpu.reciprocal %214 {approx = true} : vector<32x128xf32> -> vector<32x128xf32>
      %cst_90 = arith.constant 0.000000e+00 : f32
      %216 = vector.broadcast %cst_90 : f32 to vector<32x128xf32>
      %217 = arith.maximumf %208, %216 : vector<32x128xf32>
      %cst_91 = arith.constant 1.000000e+00 : f32
      %218 = vector.broadcast %cst_91 : f32 to vector<32x128xf32>
      %219 = arith.addf %218, %212 : vector<32x128xf32>
      %220 = math.log %219 : vector<32x128xf32>
      %221 = arith.addf %217, %220 : vector<32x128xf32>
      %cst_92 = arith.constant 0.000000e+00 : f32
      %222 = vector.broadcast %cst_92 : f32 to vector<32x128xf32>
      %223 = arith.cmpf oge, %208, %222 : vector<32x128xf32>
      %224 = arith.mulf %212, %215 : vector<32x128xf32>
      %225 = arith.select %223, %215, %224 : vector<32x128xi1>, vector<32x128xf32>
      %226 = arith.mulf %221, %56 : vector<32x128xf32>
      %cst_93 = arith.constant dense<0.000000e+00> : vector<32x128xf32>
      %227 = tpu.matmul %8, %226, %cst_93 {dimension_numbers = #tpu.dot_dimension_numbers<[1], [0], [0], [1], [0, 0, 1, 1], [], []>} : vector<32x32xf32>, vector<32x128xf32>, vector<32x128xf32> -> vector<32x128xf32>
      %228 = arith.mulf %205, %57 : vector<8x128xf32>
      %cst_94 = arith.constant dense<0.000000e+00> : vector<32x128xf32>
      %229 = tpu.matmul %9, %228, %cst_94 {dimension_numbers = #tpu.dot_dimension_numbers<[1], [0], [0], [1], [0, 0, 1, 1], [], []>} : vector<32x8xf32>, vector<8x128xf32>, vector<32x128xf32> -> vector<32x128xf32>
      %230 = arith.addf %227, %229 : vector<32x128xf32>
      %231 = arith.addf %230, %58 : vector<32x128xf32>
      %232 = math.absf %231 : vector<32x128xf32>
      %cst_95 = arith.constant 0.000000e+00 : f32
      %233 = vector.broadcast %cst_95 : f32 to vector<32x128xf32>
      %234 = arith.subf %233, %232 : vector<32x128xf32>
      %235 = math.exp %234 : vector<32x128xf32>
      %cst_96 = arith.constant 1.000000e+00 : f32
      %236 = vector.broadcast %cst_96 : f32 to vector<32x128xf32>
      %237 = arith.addf %236, %235 : vector<32x128xf32>
      %238 = tpu.reciprocal %237 {approx = true} : vector<32x128xf32> -> vector<32x128xf32>
      %cst_97 = arith.constant 0.000000e+00 : f32
      %239 = vector.broadcast %cst_97 : f32 to vector<32x128xf32>
      %240 = arith.cmpf oge, %231, %239 : vector<32x128xf32>
      %241 = arith.mulf %235, %238 : vector<32x128xf32>
      %242 = arith.select %240, %238, %241 : vector<32x128xi1>, vector<32x128xf32>
      %cst_98 = arith.constant 1.000000e+00 : f32
      %243 = vector.broadcast %cst_98 : f32 to vector<8x128xf32>
      %244 = arith.mulf %205, %243 : vector<8x128xf32>
      %245 = arith.addf %244, %75 : vector<8x128xf32>
      %246 = arith.mulf %78, %242 : vector<32x128xf32>
      %cst_99 = arith.constant dense<0.000000e+00> : vector<32x128xf32>
      %247 = tpu.matmul %10, %246, %cst_99 {dimension_numbers = #tpu.dot_dimension_numbers<[1], [0], [0], [1], [0, 0, 1, 1], [], []>} : vector<32x32xf32>, vector<32x128xf32>, vector<32x128xf32> -> vector<32x128xf32>
      %248 = arith.mulf %247, %56 : vector<32x128xf32>
      %cst_100 = arith.constant dense<0.000000e+00> : vector<8x128xf32>
      %249 = tpu.matmul %11, %246, %cst_100 {dimension_numbers = #tpu.dot_dimension_numbers<[1], [0], [0], [1], [0, 0, 1, 1], [], []>} : vector<8x32xf32>, vector<32x128xf32>, vector<8x128xf32> -> vector<8x128xf32>
      %250 = arith.mulf %249, %57 : vector<8x128xf32>
      %251 = arith.addf %245, %250 : vector<8x128xf32>
      %252 = arith.mulf %248, %225 : vector<32x128xf32>
      %cst_101 = arith.constant dense<0.000000e+00> : vector<8x128xf32>
      %253 = tpu.matmul %5, %252, %cst_101 {dimension_numbers = #tpu.dot_dimension_numbers<[1], [0], [0], [1], [0, 0, 1, 1], [], []>} : vector<8x32xf32>, vector<32x128xf32>, vector<8x128xf32> -> vector<8x128xf32>
      %254 = arith.mulf %253, %30 : vector<8x128xf32>
      %255 = arith.addf %251, %254 : vector<8x128xf32>
      %256 = arith.subf %1, %255 : vector<8x128xf32>
      %c2_i32 = arith.constant 2 : i32
      %257 = arith.addi %89, %c2_i32 : i32
      %c1_i32_102 = arith.constant 1 : i32
      %258 = arith.addi %257, %c1_i32_102 : i32
      %259 = arith.sitofp %258 : i32 to f32
      %cst_103 = arith.constant 2.000000e+00 : f32
      %260 = arith.divf %cst_103, %259 : f32
      %261 = vector.broadcast %260 : f32 to vector<8x128xf32>
      %262 = arith.mulf %261, %256 : vector<8x128xf32>
      %263 = arith.addf %205, %262 : vector<8x128xf32>
      %264 = arith.mulf %263, %30 : vector<8x128xf32>
      %cst_104 = arith.constant dense<0.000000e+00> : vector<32x128xf32>
      %265 = tpu.matmul %4, %264, %cst_104 {dimension_numbers = #tpu.dot_dimension_numbers<[1], [0], [0], [1], [0, 0, 1, 1], [], []>} : vector<32x8xf32>, vector<8x128xf32>, vector<32x128xf32> -> vector<32x128xf32>
      %266 = arith.addf %265, %31 : vector<32x128xf32>
      %267 = math.absf %266 : vector<32x128xf32>
      %cst_105 = arith.constant 0.000000e+00 : f32
      %268 = vector.broadcast %cst_105 : f32 to vector<32x128xf32>
      %269 = arith.subf %268, %267 : vector<32x128xf32>
      %270 = math.exp %269 : vector<32x128xf32>
      %cst_106 = arith.constant 1.000000e+00 : f32
      %271 = vector.broadcast %cst_106 : f32 to vector<32x128xf32>
      %272 = arith.addf %271, %270 : vector<32x128xf32>
      %273 = tpu.reciprocal %272 {approx = true} : vector<32x128xf32> -> vector<32x128xf32>
      %cst_107 = arith.constant 0.000000e+00 : f32
      %274 = vector.broadcast %cst_107 : f32 to vector<32x128xf32>
      %275 = arith.maximumf %266, %274 : vector<32x128xf32>
      %cst_108 = arith.constant 1.000000e+00 : f32
      %276 = vector.broadcast %cst_108 : f32 to vector<32x128xf32>
      %277 = arith.addf %276, %270 : vector<32x128xf32>
      %278 = math.log %277 : vector<32x128xf32>
      %279 = arith.addf %275, %278 : vector<32x128xf32>
      %cst_109 = arith.constant 0.000000e+00 : f32
      %280 = vector.broadcast %cst_109 : f32 to vector<32x128xf32>
      %281 = arith.cmpf oge, %266, %280 : vector<32x128xf32>
      %282 = arith.mulf %270, %273 : vector<32x128xf32>
      %283 = arith.select %281, %273, %282 : vector<32x128xi1>, vector<32x128xf32>
      %284 = arith.mulf %279, %56 : vector<32x128xf32>
      %cst_110 = arith.constant dense<0.000000e+00> : vector<32x128xf32>
      %285 = tpu.matmul %8, %284, %cst_110 {dimension_numbers = #tpu.dot_dimension_numbers<[1], [0], [0], [1], [0, 0, 1, 1], [], []>} : vector<32x32xf32>, vector<32x128xf32>, vector<32x128xf32> -> vector<32x128xf32>
      %286 = arith.mulf %263, %57 : vector<8x128xf32>
      %cst_111 = arith.constant dense<0.000000e+00> : vector<32x128xf32>
      %287 = tpu.matmul %9, %286, %cst_111 {dimension_numbers = #tpu.dot_dimension_numbers<[1], [0], [0], [1], [0, 0, 1, 1], [], []>} : vector<32x8xf32>, vector<8x128xf32>, vector<32x128xf32> -> vector<32x128xf32>
      %288 = arith.addf %285, %287 : vector<32x128xf32>
      %289 = arith.addf %288, %58 : vector<32x128xf32>
      %290 = math.absf %289 : vector<32x128xf32>
      %cst_112 = arith.constant 0.000000e+00 : f32
      %291 = vector.broadcast %cst_112 : f32 to vector<32x128xf32>
      %292 = arith.subf %291, %290 : vector<32x128xf32>
      %293 = math.exp %292 : vector<32x128xf32>
      %cst_113 = arith.constant 1.000000e+00 : f32
      %294 = vector.broadcast %cst_113 : f32 to vector<32x128xf32>
      %295 = arith.addf %294, %293 : vector<32x128xf32>
      %296 = tpu.reciprocal %295 {approx = true} : vector<32x128xf32> -> vector<32x128xf32>
      %cst_114 = arith.constant 0.000000e+00 : f32
      %297 = vector.broadcast %cst_114 : f32 to vector<32x128xf32>
      %298 = arith.cmpf oge, %289, %297 : vector<32x128xf32>
      %299 = arith.mulf %293, %296 : vector<32x128xf32>
      %300 = arith.select %298, %296, %299 : vector<32x128xi1>, vector<32x128xf32>
      %cst_115 = arith.constant 1.000000e+00 : f32
      %301 = vector.broadcast %cst_115 : f32 to vector<8x128xf32>
      %302 = arith.mulf %263, %301 : vector<8x128xf32>
      %303 = arith.addf %302, %75 : vector<8x128xf32>
      %304 = arith.mulf %78, %300 : vector<32x128xf32>
      %cst_116 = arith.constant dense<0.000000e+00> : vector<32x128xf32>
      %305 = tpu.matmul %10, %304, %cst_116 {dimension_numbers = #tpu.dot_dimension_numbers<[1], [0], [0], [1], [0, 0, 1, 1], [], []>} : vector<32x32xf32>, vector<32x128xf32>, vector<32x128xf32> -> vector<32x128xf32>
      %306 = arith.mulf %305, %56 : vector<32x128xf32>
      %cst_117 = arith.constant dense<0.000000e+00> : vector<8x128xf32>
      %307 = tpu.matmul %11, %304, %cst_117 {dimension_numbers = #tpu.dot_dimension_numbers<[1], [0], [0], [1], [0, 0, 1, 1], [], []>} : vector<8x32xf32>, vector<32x128xf32>, vector<8x128xf32> -> vector<8x128xf32>
      %308 = arith.mulf %307, %57 : vector<8x128xf32>
      %309 = arith.addf %303, %308 : vector<8x128xf32>
      %310 = arith.mulf %306, %283 : vector<32x128xf32>
      %cst_118 = arith.constant dense<0.000000e+00> : vector<8x128xf32>
      %311 = tpu.matmul %5, %310, %cst_118 {dimension_numbers = #tpu.dot_dimension_numbers<[1], [0], [0], [1], [0, 0, 1, 1], [], []>} : vector<8x32xf32>, vector<32x128xf32>, vector<8x128xf32> -> vector<8x128xf32>
      %312 = arith.mulf %311, %30 : vector<8x128xf32>
      %313 = arith.addf %309, %312 : vector<8x128xf32>
      %314 = arith.subf %1, %313 : vector<8x128xf32>
      %c3_i32 = arith.constant 3 : i32
      %315 = arith.addi %89, %c3_i32 : i32
      %c1_i32_119 = arith.constant 1 : i32
      %316 = arith.addi %315, %c1_i32_119 : i32
      %317 = arith.sitofp %316 : i32 to f32
      %cst_120 = arith.constant 2.000000e+00 : f32
      %318 = arith.divf %cst_120, %317 : f32
      %319 = vector.broadcast %318 : f32 to vector<8x128xf32>
      %320 = arith.mulf %319, %314 : vector<8x128xf32>
      %321 = arith.addf %263, %320 : vector<8x128xf32>
      %322 = arith.mulf %314, %314 : vector<8x128xf32>
      %cst_121 = arith.constant dense<0.000000e+00> : vector<128xf32>
      %323 = vector.multi_reduction <add>, %322, %cst_121 [0] : vector<8x128xf32> to vector<128xf32>
      %324 = vector.shape_cast %323 : vector<128xf32> to vector<1x128xf32>
      %325 = math.sqrt %324 : vector<1x128xf32>
      %326 = vector.shape_cast %325 : vector<1x128xf32> to vector<1x1x128xf32>
      %cst_122 = arith.constant dense<0.000000e+00> : vector<1xf32>
      %327 = vector.multi_reduction <add>, %326, %cst_122 [1, 2] : vector<1x1x128xf32> to vector<1xf32>
      %328 = vector.shape_cast %327 : vector<1xf32> to vector<1x1x1xf32>
      %329 = vector.extract %328[0, 0, 0] : f32 from vector<1x1x1xf32>
      %cst_123 = arith.constant 7.812500e-03 : f32
      %330 = arith.mulf %329, %cst_123 : f32
      %c1_i32_124 = arith.constant 1 : i32
      %331 = arith.addi %arg18, %c1_i32_124 : i32
      scf.yield %331, %321, %330 : i32, vector<8x128xf32>, f32
    }
    %cst_47 = arith.constant 1.000000e+00 : f32
    %81 = vector.broadcast %cst_47 : f32 to vector<8x128xf32>
    %82 = arith.mulf %81, %1 : vector<8x128xf32>
    %83 = arith.addf %80#1, %82 : vector<8x128xf32>
    %cst_48 = arith.constant dense<0.000000e+00> : vector<128xf32>
    %84 = vector.multi_reduction <add>, %83, %cst_48 [0] : vector<8x128xf32> to vector<128xf32>
    %85 = vector.shape_cast %84 : vector<128xf32> to vector<1x128xf32>
    %cst_49 = arith.constant 8.000000e+00 : f32
    %86 = vector.broadcast %cst_49 : f32 to vector<1x128xf32>
    %87 = arith.divf %85, %86 : vector<1x128xf32>
    %c0_50 = arith.constant 0 : index
    %c0_51 = arith.constant 0 : index
    %88 = vector.load %arg17[%c0_50, %c0_51] : memref<1x128xf32, #tpu.memory_space<vmem>>, vector<1x128xf32>
    tpu.vector_store %arg17[%c0_50, %c0_51], %87 {strides = array<i32>} : memref<1x128xf32, #tpu.memory_space<vmem>>, vector<1x128xf32>,
    return
  }
  func.func @transform_0(%arg0: i32) -> (i32, i32) {
    %c0_i32 = arith.constant 0 : i32
    %c0_i32_0 = arith.constant 0 : i32
    return %c0_i32, %arg0 : i32, i32
  }
  func.func @transform_1(%arg0: i32) -> (i32, i32) {
    %c0_i32 = arith.constant 0 : i32
    %c0_i32_0 = arith.constant 0 : i32
    return %c0_i32, %arg0 : i32, i32
  }
  func.func @transform_2(%arg0: i32) -> (i32, i32) {
    %c0_i32 = arith.constant 0 : i32
    %c0_i32_0 = arith.constant 0 : i32
    %c0_i32_1 = arith.constant 0 : i32
    return %c0_i32, %c0_i32_0 : i32, i32
  }
  func.func @transform_3(%arg0: i32) -> (i32, i32) {
    %c0_i32 = arith.constant 0 : i32
    %c0_i32_0 = arith.constant 0 : i32
    %c0_i32_1 = arith.constant 0 : i32
    return %c0_i32, %c0_i32_0 : i32, i32
  }
  func.func @transform_4(%arg0: i32) -> (i32, i32) {
    %c0_i32 = arith.constant 0 : i32
    %c0_i32_0 = arith.constant 0 : i32
    %c0_i32_1 = arith.constant 0 : i32
    return %c0_i32, %c0_i32_0 : i32, i32
  }
  func.func @transform_5(%arg0: i32) -> (i32, i32) {
    %c0_i32 = arith.constant 0 : i32
    %c0_i32_0 = arith.constant 0 : i32
    %c0_i32_1 = arith.constant 0 : i32
    return %c0_i32, %c0_i32_0 : i32, i32
  }
  func.func @transform_6(%arg0: i32) -> (i32, i32) {
    %c0_i32 = arith.constant 0 : i32
    %c0_i32_0 = arith.constant 0 : i32
    %c0_i32_1 = arith.constant 0 : i32
    return %c0_i32, %c0_i32_0 : i32, i32
  }
  func.func @transform_7(%arg0: i32) -> (i32, i32) {
    %c0_i32 = arith.constant 0 : i32
    %c0_i32_0 = arith.constant 0 : i32
    %c0_i32_1 = arith.constant 0 : i32
    return %c0_i32, %c0_i32_0 : i32, i32
  }
  func.func @transform_8(%arg0: i32) -> (i32, i32) {
    %c0_i32 = arith.constant 0 : i32
    %c0_i32_0 = arith.constant 0 : i32
    %c0_i32_1 = arith.constant 0 : i32
    return %c0_i32, %c0_i32_0 : i32, i32
  }
  func.func @transform_9(%arg0: i32) -> (i32, i32) {
    %c0_i32 = arith.constant 0 : i32
    %c0_i32_0 = arith.constant 0 : i32
    %c0_i32_1 = arith.constant 0 : i32
    return %c0_i32, %c0_i32_0 : i32, i32
  }
  func.func @transform_10(%arg0: i32) -> (i32, i32) {
    %c0_i32 = arith.constant 0 : i32
    %c0_i32_0 = arith.constant 0 : i32
    %c0_i32_1 = arith.constant 0 : i32
    return %c0_i32, %c0_i32_0 : i32, i32
  }
  func.func @transform_11(%arg0: i32) -> (i32, i32) {
    %c0_i32 = arith.constant 0 : i32
    %c0_i32_0 = arith.constant 0 : i32
    %c0_i32_1 = arith.constant 0 : i32
    return %c0_i32, %c0_i32_0 : i32, i32
  }
  func.func @transform_12(%arg0: i32) -> (i32, i32) {
    %c0_i32 = arith.constant 0 : i32
    %c0_i32_0 = arith.constant 0 : i32
    %c0_i32_1 = arith.constant 0 : i32
    return %c0_i32, %c0_i32_0 : i32, i32
  }
  func.func @transform_13(%arg0: i32) -> (i32, i32) {
    %c0_i32 = arith.constant 0 : i32
    %c0_i32_0 = arith.constant 0 : i32
    %c0_i32_1 = arith.constant 0 : i32
    return %c0_i32, %c0_i32_0 : i32, i32
  }
  func.func @transform_14(%arg0: i32) -> (i32, i32) {
    %c0_i32 = arith.constant 0 : i32
    %c0_i32_0 = arith.constant 0 : i32
    %c0_i32_1 = arith.constant 0 : i32
    return %c0_i32, %c0_i32_0 : i32, i32
  }
  func.func @transform_15(%arg0: i32) -> (i32, i32) {
    %c0_i32 = arith.constant 0 : i32
    %c0_i32_0 = arith.constant 0 : i32
    %c0_i32_1 = arith.constant 0 : i32
    return %c0_i32, %c0_i32_0 : i32, i32
  }
  func.func @transform_16(%arg0: i32) -> (i32, i32) {
    %c0_i32 = arith.constant 0 : i32
    %c0_i32_0 = arith.constant 0 : i32
    return %c0_i32, %arg0 : i32, i32
  }
}

</mosaic_0001>

<llo_original>
// kernel: tpu_custom_call.1
$region0: #{tpu_custom_call.1}
  #allocation0 [shape = 'u32[]', space=smem, size = 0x4, offset = 0x4, fixed_abs, tag = 'smem constant byte address 0x4 - core index']
  #allocation1 [shape = 'u32[144,128]{1,0:T(1,128)}', space=vmem, size = 0x12000, scoped, tag = 'internal scratch']
  %s0 = inlined_call_operand.vmem [shape: f32[8,128], index: 0, kind: input, shape index: {}]
  %s1 = inlined_call_operand.vmem [shape: f32[8,128], index: 1, kind: input, shape index: {}]
  %s2 = inlined_call_operand.vmem [shape: f32[72,8], index: 2, kind: input, shape index: {}]
  %s3 = inlined_call_operand.vmem [shape: f32[72,1], index: 3, kind: input, shape index: {}]
  %s4 = inlined_call_operand.vmem [shape: f32[32,8], index: 4, kind: input, shape index: {}]
  %s5 = inlined_call_operand.vmem [shape: f32[8,32], index: 5, kind: input, shape index: {}]
  %s6 = inlined_call_operand.vmem [shape: f32[104,32], index: 6, kind: input, shape index: {}]
  %s7 = inlined_call_operand.vmem [shape: f32[104,1], index: 7, kind: input, shape index: {}]
  %s8 = inlined_call_operand.vmem [shape: f32[32,32], index: 8, kind: input, shape index: {}]
  %s9 = inlined_call_operand.vmem [shape: f32[32,8], index: 9, kind: input, shape index: {}]
  %s10 = inlined_call_operand.vmem [shape: f32[32,32], index: 10, kind: input, shape index: {}]
  %s11 = inlined_call_operand.vmem [shape: f32[8,32], index: 11, kind: input, shape index: {}]
  %s12 = inlined_call_operand.vmem [shape: f32[9,32], index: 12, kind: input, shape index: {}]
  %s13 = inlined_call_operand.vmem [shape: f32[9,1], index: 13, kind: input, shape index: {}]
  %s14 = inlined_call_operand.vmem [shape: f32[32,1], index: 14, kind: input, shape index: {}]
  %s15 = inlined_call_operand.vmem [shape: f32[8,1], index: 15, kind: input, shape index: {}]
  %s16 = inlined_call_operand.hbm [shape: f32[1,128], index: 16, kind: output, shape index: {}]
  %s17 = sld [smem:[#allocation0]]
  $region81: #{tpu_custom_call.1} parent=0
    _
  %s19 = ssub.s32 1, %s17
  %s20 = scalar_select 0, %s19, %s17
  $region1: #{tpu_custom_call.1} parent=0
    #allocation2 [shape = 'u8[512]{0}', space=vmem, size = 0x400, scoped, tag = 'output window, operand 0, single buffered']
    #allocation3 [shape = 's32[1]{0}', space=sflag, size = 0x4, scoped, tag = 'scoped memory for tpu_custom_call.1']
    %21 = vsyncpa [#allocation3], 0
    // Predicated region
    $region2: #{tpu_custom_call.1} parent=1 // pred_check
      _
    $region3: #{tpu_custom_call.1} parent=1 // pred_check_branch
      %23 = sbr.rel (0) target = $region5
    $region4: #{tpu_custom_call.1} parent=1 // pred_region
      _
    $region5: #{tpu_custom_call.1} parent=1 // pred_fallthru
      _
    // Predicated region
    $region6: #{tpu_custom_call.1} parent=1 // pred_check
      _
    $region7: #{tpu_custom_call.1} parent=1 // pred_check_branch
      %25 = sbr.rel (0) target = $region9
    $region8: #{tpu_custom_call.1} parent=1 // pred_region
      _
    $region9: #{tpu_custom_call.1} parent=1 // pred_fallthru
      _
    // Predicated region
    $region10: #{tpu_custom_call.1} parent=1 // pred_check
      _
    $region11: #{tpu_custom_call.1} parent=1 // pred_check_branch
      %27 = sbr.rel (0) target = $region13
    $region12: #{tpu_custom_call.1} parent=1 // pred_region
      _
    $region13: #{tpu_custom_call.1} parent=1 // pred_fallthru
      _
    // Predicated region
    $region14: #{tpu_custom_call.1} parent=1 // pred_check
      _
    $region15: #{tpu_custom_call.1} parent=1 // pred_check_branch
      %29 = sbr.rel (0) target = $region17
    $region16: #{tpu_custom_call.1} parent=1 // pred_region
      _
    $region17: #{tpu_custom_call.1} parent=1 // pred_fallthru
      _
    // Predicated region
    $region18: #{tpu_custom_call.1} parent=1 // pred_check
      _
    $region19: #{tpu_custom_call.1} parent=1 // pred_check_branch
      %31 = sbr.rel (0) target = $region21
    $region20: #{tpu_custom_call.1} parent=1 // pred_region
      _
    $region21: #{tpu_custom_call.1} parent=1 // pred_fallthru
      _
    // Predicated region
    $region22: #{tpu_custom_call.1} parent=1 // pred_check
      _
    $region23: #{tpu_custom_call.1} parent=1 // pred_check_branch
      %33 = sbr.rel (0) target = $region25
    $region24: #{tpu_custom_call.1} parent=1 // pred_region
      _
    $region25: #{tpu_custom_call.1} parent=1 // pred_fallthru
      _
    // Predicated region
    $region26: #{tpu_custom_call.1} parent=1 // pred_check
      _
    $region27: #{tpu_custom_call.1} parent=1 // pred_check_branch
      %35 = sbr.rel (0) target = $region29
    $region28: #{tpu_custom_call.1} parent=1 // pred_region
      _
    $region29: #{tpu_custom_call.1} parent=1 // pred_fallthru
      _
    // Predicated region
    $region30: #{tpu_custom_call.1} parent=1 // pred_check
      _
    $region31: #{tpu_custom_call.1} parent=1 // pred_check_branch
      %37 = sbr.rel (0) target = $region33
    $region32: #{tpu_custom_call.1} parent=1 // pred_region
      _
    $region33: #{tpu_custom_call.1} parent=1 // pred_fallthru
      _
    // Predicated region
    $region34: #{tpu_custom_call.1} parent=1 // pred_check
      _
    $region35: #{tpu_custom_call.1} parent=1 // pred_check_branch
      %39 = sbr.rel (0) target = $region37
    $region36: #{tpu_custom_call.1} parent=1 // pred_region
      _
    $region37: #{tpu_custom_call.1} parent=1 // pred_fallthru
      _
    // Predicated region
    $region38: #{tpu_custom_call.1} parent=1 // pred_check
      _
    $region39: #{tpu_custom_call.1} parent=1 // pred_check_branch
      %41 = sbr.rel (0) target = $region41
    $region40: #{tpu_custom_call.1} parent=1 // pred_region
      _
    $region41: #{tpu_custom_call.1} parent=1 // pred_fallthru
      _
    // Predicated region
    $region42: #{tpu_custom_call.1} parent=1 // pred_check
      _
    $region43: #{tpu_custom_call.1} parent=1 // pred_check_branch
      %43 = sbr.rel (0) target = $region45
    $region44: #{tpu_custom_call.1} parent=1 // pred_region
      _
    $region45: #{tpu_custom_call.1} parent=1 // pred_fallthru
      _
    // Predicated region
    $region46: #{tpu_custom_call.1} parent=1 // pred_check
      _
    $region47: #{tpu_custom_call.1} parent=1 // pred_check_branch
      %45 = sbr.rel (0) target = $region49
    $region48: #{tpu_custom_call.1} parent=1 // pred_region
      _
    $region49: #{tpu_custom_call.1} parent=1 // pred_fallthru
      _
    // Predicated region
    $region50: #{tpu_custom_call.1} parent=1 // pred_check
      _
    $region51: #{tpu_custom_call.1} parent=1 // pred_check_branch
      %47 = sbr.rel (0) target = $region53
    $region52: #{tpu_custom_call.1} parent=1 // pred_region
      _
    $region53: #{tpu_custom_call.1} parent=1 // pred_fallthru
      _
    // Predicated region
    $region54: #{tpu_custom_call.1} parent=1 // pred_check
      _
    $region55: #{tpu_custom_call.1} parent=1 // pred_check_branch
      %49 = sbr.rel (0) target = $region57
    $region56: #{tpu_custom_call.1} parent=1 // pred_region
      _
    $region57: #{tpu_custom_call.1} parent=1 // pred_fallthru
      _
    // Predicated region
    $region58: #{tpu_custom_call.1} parent=1 // pred_check
      _
    $region59: #{tpu_custom_call.1} parent=1 // pred_check_branch
      %51 = sbr.rel (0) target = $region61
    $region60: #{tpu_custom_call.1} parent=1 // pred_region
      _
    $region61: #{tpu_custom_call.1} parent=1 // pred_fallthru
      _
    // Predicated region
    $region62: #{tpu_custom_call.1} parent=1 // pred_check
      _
    $region63: #{tpu_custom_call.1} parent=1 // pred_check_branch
      %53 = sbr.rel (0) target = $region65
    $region64: #{tpu_custom_call.1} parent=1 // pred_region
      _
    $region65: #{tpu_custom_call.1} parent=1 // pred_fallthru
      _
    %v54 = vld [vmem:[%s0] sm:$0xff]
    %v55 = vld [vmem:[%s1] sm:$0xff]
    %v56 = vld [vmem:[%s2] sm:$0xff]
    %v57 = vld [vmem:[%s2 + $0x8] sm:$0xff]
    %v58 = vld [vmem:[%s2 + $0x10] sm:$0xff]
    %v59 = vld [vmem:[%s2 + $0x18] sm:$0xff]
    %v60 = vld [vmem:[%s2 + $0x20] sm:$0xff]
    %v61 = vld [vmem:[%s2 + $0x28] sm:$0xff]
    %v62 = vld [vmem:[%s2 + $0x30] sm:$0xff]
    %v63 = vld [vmem:[%s2 + $0x38] sm:$0xff]
    %v64 = vld [vmem:[%s2 + $0x40] sm:$0xff]
    %v65 = vld [vmem:[%s3] sm:$0xff]
    %v66 = vld [vmem:[%s3 + $0x8] sm:$0xff]
    %v67 = vld [vmem:[%s3 + $0x10] sm:$0xff]
    %v68 = vld [vmem:[%s3 + $0x18] sm:$0xff]
    %v69 = vld [vmem:[%s3 + $0x20] sm:$0xff]
    %v70 = vld [vmem:[%s3 + $0x28] sm:$0xff]
    %v71 = vld [vmem:[%s3 + $0x30] sm:$0xff]
    %v72 = vld [vmem:[%s3 + $0x38] sm:$0xff]
    %v73 = vld [vmem:[%s3 + $0x40] sm:$0xff]
    %v74 = vld [vmem:[%s4] sm:$0xff]
    %v75 = vld [vmem:[%s4 + $0x8] sm:$0xff]
    %v76 = vld [vmem:[%s4 + $0x10] sm:$0xff]
    %v77 = vld [vmem:[%s4 + $0x18] sm:$0xff]
    %v78 = vld [vmem:[%s5] sm:$0xff]
    %v79 = vld [vmem:[%s6] sm:$0xff]
    %v80 = vld [vmem:[%s6 + $0x8] sm:$0xff]
    %v81 = vld [vmem:[%s6 + $0x10] sm:$0xff]
    %v82 = vld [vmem:[%s6 + $0x18] sm:$0xff]
    %v83 = vld [vmem:[%s6 + $0x20] sm:$0xff]
    %v84 = vld [vmem:[%s6 + $0x28] sm:$0xff]
    %v85 = vld [vmem:[%s6 + $0x30] sm:$0xff]
    %v86 = vld [vmem:[%s6 + $0x38] sm:$0xff]
    %v87 = vld [vmem:[%s6 + $0x40] sm:$0xff]
    %v88 = vld [vmem:[%s6 + $0x48] sm:$0xff]
    %v89 = vld [vmem:[%s6 + $0x50] sm:$0xff]
    %v90 = vld [vmem:[%s6 + $0x58] sm:$0xff]
    %v91 = vld [vmem:[%s6 + $0x60] sm:$0xff]
    %v92 = vld [vmem:[%s7] sm:$0xff]
    %v93 = vld [vmem:[%s7 + $0x8] sm:$0xff]
    %v94 = vld [vmem:[%s7 + $0x10] sm:$0xff]
    %v95 = vld [vmem:[%s7 + $0x18] sm:$0xff]
    %v96 = vld [vmem:[%s7 + $0x20] sm:$0xff]
    %v97 = vld [vmem:[%s7 + $0x28] sm:$0xff]
    %v98 = vld [vmem:[%s7 + $0x30] sm:$0xff]
    %v99 = vld [vmem:[%s7 + $0x38] sm:$0xff]
    %v100 = vld [vmem:[%s7 + $0x40] sm:$0xff]
    %v101 = vld [vmem:[%s7 + $0x48] sm:$0xff]
    %v102 = vld [vmem:[%s7 + $0x50] sm:$0xff]
    %v103 = vld [vmem:[%s7 + $0x58] sm:$0xff]
    %v104 = vld [vmem:[%s7 + $0x60] sm:$0xff]
    %v105 = vld [vmem:[%s8] sm:$0xff]
    %v106 = vld [vmem:[%s8 + $0x8] sm:$0xff]
    %v107 = vld [vmem:[%s8 + $0x10] sm:$0xff]
    %v108 = vld [vmem:[%s8 + $0x18] sm:$0xff]
    %v109 = vld [vmem:[%s9] sm:$0xff]
    %v110 = vld [vmem:[%s9 + $0x8] sm:$0xff]
    %v111 = vld [vmem:[%s9 + $0x10] sm:$0xff]
    %v112 = vld [vmem:[%s9 + $0x18] sm:$0xff]
    %v113 = vld [vmem:[%s10] sm:$0xff]
    %v114 = vld [vmem:[%s10 + $0x8] sm:$0xff]
    %v115 = vld [vmem:[%s10 + $0x10] sm:$0xff]
    %v116 = vld [vmem:[%s10 + $0x18] sm:$0xff]
    %v117 = vld [vmem:[%s11] sm:$0xff]
    %v118 = vld [vmem:[%s12] sm:$0xff]
    %v119 = vld [vmem:[%s12 + $0x8] sm:$0x1]
    %v120 = vld [vmem:[%s13] sm:$0xff]
    %v121 = vld [vmem:[%s13 + $0x8] sm:$0x1]
    %v122 = vld [vmem:[%s14] sm:$0xff]
    %v123 = vld [vmem:[%s14 + $0x8] sm:$0xff]
    %v124 = vld [vmem:[%s14 + $0x10] sm:$0xff]
    %v125 = vld [vmem:[%s14 + $0x18] sm:$0xff]
    %v126 = vld [vmem:[%s15] sm:$0xff]
    %128 = vset.pattern.permute.xlu0 0
    %129 = vperm.xlu0 %128, %v65
    %v130 = vpop.permute.xlu0 %129
    %133 = vset.pattern.permute.xlu0 0
    %134 = vperm.xlu0 %133, %v66
    %v135 = vpop.permute.xlu0 %134
    %138 = vset.pattern.permute.xlu0 0
    %139 = vperm.xlu0 %138, %v67
    %v140 = vpop.permute.xlu0 %139
    %143 = vset.pattern.permute.xlu0 0
    %144 = vperm.xlu0 %143, %v68
    %v145 = vpop.permute.xlu0 %144
    %148 = vset.pattern.permute.xlu0 0
    %149 = vperm.xlu0 %148, %v69
    %v150 = vpop.permute.xlu0 %149
    %153 = vset.pattern.permute.xlu0 0
    %154 = vperm.xlu0 %153, %v70
    %v155 = vpop.permute.xlu0 %154
    %158 = vset.pattern.permute.xlu0 0
    %159 = vperm.xlu0 %158, %v71
    %v160 = vpop.permute.xlu0 %159
    %163 = vset.pattern.permute.xlu0 0
    %164 = vperm.xlu0 %163, %v72
    %v165 = vpop.permute.xlu0 %164
    %168 = vset.pattern.permute.xlu0 0
    %169 = vperm.xlu0 %168, %v73
    %v170 = vpop.permute.xlu0 %169
    %vm172 = vcmask 64512
    %v174 = vsel %vm172, %v56, 0
    %v177 = vsel %vm172, %v57, 0
    %v180 = vsel %vm172, %v58, 0
    %v183 = vsel %vm172, %v59, 0
    %v186 = vsel %vm172, %v60, 0
    %v189 = vsel %vm172, %v61, 0
    %v192 = vsel %vm172, %v62, 0
    %v195 = vsel %vm172, %v63, 0
    %v198 = vsel %vm172, %v64, 0
    %200 = vmatprep.subr.mxu0 0.0
    %201 = vmatpush1.msra.mxu0 0.0
    %202 = vmatprep.subr.mxu0 0.0
    %203 = vmatpush1.msra.mxu0 0.0
    %204 = vmatprep.subr.mxu0 0.0
    %205 = vmatpush1.msra.mxu0 0.0
    %206 = vmatprep.subr.mxu0 0.0
    %207 = vmatpush1.msra.mxu0 0.0
    %208 = vmatprep.subr.mxu0 0.0
    %209 = vmatpush1.msra.mxu0 0.0
    %210 = vmatprep.subr.mxu0 0.0
    %211 = vmatpush1.msra.mxu0 0.0
    %212 = vmatprep.subr.mxu0 0.0
    %213 = vmatpush1.msra.mxu0 0.0
    %214 = vmatprep.subr.mxu0 0.0
    %215 = vmatpush1.msra.mxu0 0.0
    %216 = vmatprep.subr.mxu0 0.0
    %217 = vmatpush1.msra.mxu0 0.0
    %218 = vmatprep.subr.mxu0 0.0
    %219 = vmatpush1.msra.mxu0 0.0
    %220 = vmatprep.subr.mxu0 0.0
    %221 = vmatpush1.msra.mxu0 0.0
    %222 = vmatprep.subr.mxu0 0.0
    %223 = vmatpush1.msra.mxu0 0.0
    %224 = vmatprep.subr.mxu0 0.0
    %225 = vmatpush1.msra.mxu0 0.0
    %226 = vmatprep.subr.mxu0 0.0
    %227 = vmatpush1.msra.mxu0 0.0
    %228 = vmatprep.subr.mxu0 0.0
    %229 = vmatpush1.msra.mxu0 0.0
    %230 = vmatprep.subr.mxu0 0.0
    %231 = vmatpush1.msra.mxu0 %v54
    %232 = vmatprep.subr.mxu0 0.0
    %233 = vmatpush2.msra.mxu0 0.0
    %234 = vmatprep.subr.mxu0 0.0
    %235 = vmatpush2.msra.mxu0 0.0
    %236 = vmatprep.subr.mxu0 0.0
    %237 = vmatpush2.msra.mxu0 0.0
    %238 = vmatprep.subr.mxu0 0.0
    %239 = vmatpush2.msra.mxu0 0.0
    %240 = vmatprep.subr.mxu0 0.0
    %241 = vmatpush2.msra.mxu0 0.0
    %242 = vmatprep.subr.mxu0 0.0
    %243 = vmatpush2.msra.mxu0 0.0
    %244 = vmatprep.subr.mxu0 0.0
    %245 = vmatpush2.msra.mxu0 0.0
    %246 = vmatprep.subr.mxu0 0.0
    %247 = vmatpush2.msra.mxu0 0.0
    %248 = vmatprep.subr.mxu0 0.0
    %249 = vmatpush2.msra.mxu0 0.0
    %250 = vmatprep.subr.mxu0 0.0
    %251 = vmatpush2.msra.mxu0 0.0
    %252 = vmatprep.subr.mxu0 0.0
    %253 = vmatpush2.msra.mxu0 0.0
    %254 = vmatprep.subr.mxu0 0.0
    %255 = vmatpush2.msra.mxu0 0.0
    %256 = vmatprep.subr.mxu0 0.0
    %257 = vmatpush2.msra.mxu0 0.0
    %258 = vmatprep.subr.mxu0 0.0
    %259 = vmatpush2.msra.mxu0 0.0
    %260 = vmatprep.subr.mxu0 0.0
    %261 = vmatpush2.msra.mxu0 0.0
    %262 = vmatprep.subr.mxu0 0.0
    %263 = vmatpush2.msra.mxu0 0.0
    %264 = vmatprep.mubr.f32.mxu0 0.0
    %265 = vmatmul.mubr.f32.gmra.mxu0 %v174
    %v266 = vpop.f32.mrf.mxu0
    %v267 = vadd.f32 %v130, %v266
    %v268 = vpop.f32.mrf.mxu0
    %269 = vmatprep.mubr.f32.mxu0 0.0
    %270 = vmatmul.mubr.f32.gmra.mxu0 %v177
    %v271 = vpop.f32.mrf.mxu0
    %v272 = vadd.f32 %v135, %v271
    %v273 = vpop.f32.mrf.mxu0
    %274 = vmatprep.mubr.f32.mxu0 0.0
    %275 = vmatmul.mubr.f32.gmra.mxu0 %v180
    %v276 = vpop.f32.mrf.mxu0
    %v277 = vadd.f32 %v140, %v276
    %v278 = vpop.f32.mrf.mxu0
    %279 = vmatprep.mubr.f32.mxu0 0.0
    %280 = vmatmul.mubr.f32.gmra.mxu0 %v183
    %v281 = vpop.f32.mrf.mxu0
    %v282 = vadd.f32 %v145, %v281
    %v283 = vpop.f32.mrf.mxu0
    %284 = vmatprep.mubr.f32.mxu0 0.0
    %285 = vmatmul.mubr.f32.gmra.mxu0 %v186
    %v286 = vpop.f32.mrf.mxu0
    %v287 = vadd.f32 %v150, %v286
    %v288 = vpop.f32.mrf.mxu0
    %289 = vmatprep.mubr.f32.mxu0 0.0
    %290 = vmatmul.mubr.f32.gmra.mxu0 %v189
    %v291 = vpop.f32.mrf.mxu0
    %v292 = vadd.f32 %v155, %v291
    %v293 = vpop.f32.mrf.mxu0
    %294 = vmatprep.mubr.f32.mxu0 0.0
    %295 = vmatmul.mubr.f32.gmra.mxu0 %v192
    %v296 = vpop.f32.mrf.mxu0
    %v297 = vadd.f32 %v160, %v296
    %v298 = vpop.f32.mrf.mxu0
    %299 = vmatprep.mubr.f32.mxu0 0.0
    %300 = vmatmul.mubr.f32.gmra.mxu0 %v195
    %v301 = vpop.f32.mrf.mxu0
    %v302 = vadd.f32 %v165, %v301
    %v303 = vpop.f32.mrf.mxu0
    %304 = vmatprep.mubr.f32.mxu0 0.0
    %305 = vmatmul.mubr.f32.gmra.mxu0 %v198
    %v306 = vpop.f32.mrf.mxu0
    %v307 = vadd.f32 %v170, %v306
    %v308 = vpop.f32.mrf.mxu0
    %309 = vdwg.mxu0
    %v310 = vmax.f32 %v267, 0.0
    %v311 = vmax.f32 %v272, 0.0
    %v312 = vmax.f32 %v277, 0.0
    %v313 = vmax.f32 %v282, 0.0
    %v314 = vand.u32 2147483647, %v267
    %v315 = vand.u32 2147483647, %v272
    %v316 = vand.u32 2147483647, %v277
    %v317 = vand.u32 2147483647, %v282
    %v318 = vsub.f32 0.0, %v314
    %v319 = vsub.f32 0.0, %v315
    %v320 = vsub.f32 0.0, %v316
    %v321 = vsub.f32 0.0, %v317
    %v322 = vmul.f32 %v318, 1.442695
    %v323 = vpow.pop %v322
    %v324 = vmul.f32 %v319, 1.442695
    %v325 = vpow.pop %v324
    %v326 = vmul.f32 %v320, 1.442695
    %v327 = vpow.pop %v326
    %v328 = vmul.f32 %v321, 1.442695
    %v329 = vpow.pop %v328
    %v330 = vadd.f32 %v323, 1.0
    %v331 = vadd.f32 %v325, 1.0
    %v332 = vadd.f32 %v327, 1.0
    %v333 = vadd.f32 %v329, 1.0
    %v334 = vlog2.pop %v330
    %v335 = vmul.f32 %v334, 0.6931472
    %v336 = vlog2.pop %v331
    %v337 = vmul.f32 %v336, 0.6931472
    %v338 = vlog2.pop %v332
    %v339 = vmul.f32 %v338, 0.6931472
    %v340 = vlog2.pop %v333
    %v341 = vmul.f32 %v340, 0.6931472
    %v342 = vadd.f32 %v310, %v335
    %v343 = vadd.f32 %v311, %v337
    %v344 = vadd.f32 %v312, %v339
    %v345 = vadd.f32 %v313, %v341
    %347 = vset.pattern.permute.xlu0 0
    %348 = vperm.xlu0 %347, %v92
    %v349 = vpop.permute.xlu0 %348
    %352 = vset.pattern.permute.xlu0 0
    %353 = vperm.xlu0 %352, %v93
    %v354 = vpop.permute.xlu0 %353
    %357 = vset.pattern.permute.xlu0 0
    %358 = vperm.xlu0 %357, %v94
    %v359 = vpop.permute.xlu0 %358
    %362 = vset.pattern.permute.xlu0 0
    %363 = vperm.xlu0 %362, %v95
    %v364 = vpop.permute.xlu0 %363
    %367 = vset.pattern.permute.xlu0 0
    %368 = vperm.xlu0 %367, %v96
    %v369 = vpop.permute.xlu0 %368
    %372 = vset.pattern.permute.xlu0 0
    %373 = vperm.xlu0 %372, %v97
    %v374 = vpop.permute.xlu0 %373
    %377 = vset.pattern.permute.xlu0 0
    %378 = vperm.xlu0 %377, %v98
    %v379 = vpop.permute.xlu0 %378
    %382 = vset.pattern.permute.xlu0 0
    %383 = vperm.xlu0 %382, %v99
    %v384 = vpop.permute.xlu0 %383
    %387 = vset.pattern.permute.xlu0 0
    %388 = vperm.xlu0 %387, %v100
    %v389 = vpop.permute.xlu0 %388
    %392 = vset.pattern.permute.xlu0 0
    %393 = vperm.xlu0 %392, %v101
    %v394 = vpop.permute.xlu0 %393
    %397 = vset.pattern.permute.xlu0 0
    %398 = vperm.xlu0 %397, %v102
    %v399 = vpop.permute.xlu0 %398
    %402 = vset.pattern.permute.xlu0 0
    %403 = vperm.xlu0 %402, %v103
    %v404 = vpop.permute.xlu0 %403
    %407 = vset.pattern.permute.xlu0 0
    %408 = vperm.xlu0 %407, %v104
    %v409 = vpop.permute.xlu0 %408
    %vm411 = vcmask 261120
    %v413 = vsel %vm411, %v79, 0
    %v416 = vsel %vm411, %v80, 0
    %v419 = vsel %vm411, %v81, 0
    %v422 = vsel %vm411, %v82, 0
    %v425 = vsel %vm411, %v83, 0
    %v428 = vsel %vm411, %v84, 0
    %v431 = vsel %vm411, %v85, 0
    %v434 = vsel %vm411, %v86, 0
    %v437 = vsel %vm411, %v87, 0
    %v440 = vsel %vm411, %v88, 0
    %v443 = vsel %vm411, %v89, 0
    %v446 = vsel %vm411, %v90, 0
    %v449 = vsel %vm411, %v91, 0
    %451 = vmatprep.subr.mxu0 0.0
    %452 = vmatpush1.msra.mxu0 0.0
    %453 = vmatprep.subr.mxu0 0.0
    %454 = vmatpush1.msra.mxu0 0.0
    %455 = vmatprep.subr.mxu0 0.0
    %456 = vmatpush1.msra.mxu0 0.0
    %457 = vmatprep.subr.mxu0 0.0
    %458 = vmatpush1.msra.mxu0 0.0
    %459 = vmatprep.subr.mxu0 0.0
    %460 = vmatpush1.msra.mxu0 0.0
    %461 = vmatprep.subr.mxu0 0.0
    %462 = vmatpush1.msra.mxu0 0.0
    %463 = vmatprep.subr.mxu0 0.0
    %464 = vmatpush1.msra.mxu0 0.0
    %465 = vmatprep.subr.mxu0 0.0
    %466 = vmatpush1.msra.mxu0 0.0
    %467 = vmatprep.subr.mxu0 0.0
    %468 = vmatpush1.msra.mxu0 0.0
    %469 = vmatprep.subr.mxu0 0.0
    %470 = vmatpush1.msra.mxu0 0.0
    %471 = vmatprep.subr.mxu0 0.0
    %472 = vmatpush1.msra.mxu0 0.0
    %473 = vmatprep.subr.mxu0 0.0
    %474 = vmatpush1.msra.mxu0 0.0
    %475 = vmatprep.subr.mxu0 0.0
    %476 = vmatpush1.msra.mxu0 %v345
    %477 = vmatprep.subr.mxu0 0.0
    %478 = vmatpush1.msra.mxu0 %v344
    %479 = vmatprep.subr.mxu0 0.0
    %480 = vmatpush1.msra.mxu0 %v343
    %481 = vmatprep.subr.mxu0 0.0
    %482 = vmatpush1.msra.mxu0 %v342
    %483 = vmatprep.subr.mxu0 0.0
    %484 = vmatpush2.msra.mxu0 0.0
    %485 = vmatprep.subr.mxu0 0.0
    %486 = vmatpush2.msra.mxu0 0.0
    %487 = vmatprep.subr.mxu0 0.0
    %488 = vmatpush2.msra.mxu0 0.0
    %489 = vmatprep.subr.mxu0 0.0
    %490 = vmatpush2.msra.mxu0 0.0
    %491 = vmatprep.subr.mxu0 0.0
    %492 = vmatpush2.msra.mxu0 0.0
    %493 = vmatprep.subr.mxu0 0.0
    %494 = vmatpush2.msra.mxu0 0.0
    %495 = vmatprep.subr.mxu0 0.0
    %496 = vmatpush2.msra.mxu0 0.0
    %497 = vmatprep.subr.mxu0 0.0
    %498 = vmatpush2.msra.mxu0 0.0
    %499 = vmatprep.subr.mxu0 0.0
    %500 = vmatpush2.msra.mxu0 0.0
    %501 = vmatprep.subr.mxu0 0.0
    %502 = vmatpush2.msra.mxu0 0.0
    %503 = vmatprep.subr.mxu0 0.0
    %504 = vmatpush2.msra.mxu0 0.0
    %505 = vmatprep.subr.mxu0 0.0
    %506 = vmatpush2.msra.mxu0 0.0
    %507 = vmatprep.subr.mxu0 0.0
    %508 = vmatpush2.msra.mxu0 0.0
    %509 = vmatprep.subr.mxu0 0.0
    %510 = vmatpush2.msra.mxu0 0.0
    %511 = vmatprep.subr.mxu0 0.0
    %512 = vmatpush2.msra.mxu0 0.0
    %513 = vmatprep.subr.mxu0 0.0
    %514 = vmatpush2.msra.mxu0 0.0
    %515 = vmatprep.mubr.f32.mxu0 0.0
    %516 = vmatmul.mubr.f32.gmra.mxu0 %v413
    %v517 = vpop.f32.mrf.mxu0
    %v518 = vadd.f32 %v349, %v517
    %v519 = vpop.f32.mrf.mxu0
    %520 = vmatprep.mubr.f32.mxu0 0.0
    %521 = vmatmul.mubr.f32.gmra.mxu0 %v416
    %v522 = vpop.f32.mrf.mxu0
    %v523 = vadd.f32 %v354, %v522
    %v524 = vpop.f32.mrf.mxu0
    %525 = vmatprep.mubr.f32.mxu0 0.0
    %526 = vmatmul.mubr.f32.gmra.mxu0 %v419
    %v527 = vpop.f32.mrf.mxu0
    %v528 = vadd.f32 %v359, %v527
    %v529 = vpop.f32.mrf.mxu0
    %530 = vmatprep.mubr.f32.mxu0 0.0
    %531 = vmatmul.mubr.f32.gmra.mxu0 %v422
    %v532 = vpop.f32.mrf.mxu0
    %v533 = vadd.f32 %v364, %v532
    %v534 = vpop.f32.mrf.mxu0
    %535 = vmatprep.mubr.f32.mxu0 0.0
    %536 = vmatmul.mubr.f32.gmra.mxu0 %v425
    %v537 = vpop.f32.mrf.mxu0
    %v538 = vadd.f32 %v369, %v537
    %v539 = vpop.f32.mrf.mxu0
    %540 = vmatprep.mubr.f32.mxu0 0.0
    %541 = vmatmul.mubr.f32.gmra.mxu0 %v428
    %v542 = vpop.f32.mrf.mxu0
    %v543 = vadd.f32 %v374, %v542
    %v544 = vpop.f32.mrf.mxu0
    %545 = vmatprep.mubr.f32.mxu0 0.0
    %546 = vmatmul.mubr.f32.gmra.mxu0 %v431
    %v547 = vpop.f32.mrf.mxu0
    %v548 = vadd.f32 %v379, %v547
    %v549 = vpop.f32.mrf.mxu0
    %550 = vmatprep.mubr.f32.mxu0 0.0
    %551 = vmatmul.mubr.f32.gmra.mxu0 %v434
    %v552 = vpop.f32.mrf.mxu0
    %v553 = vadd.f32 %v384, %v552
    %v554 = vpop.f32.mrf.mxu0
    %555 = vmatprep.mubr.f32.mxu0 0.0
    %556 = vmatmul.mubr.f32.gmra.mxu0 %v437
    %v557 = vpop.f32.mrf.mxu0
    %v558 = vadd.f32 %v389, %v557
    %v559 = vpop.f32.mrf.mxu0
    %560 = vmatprep.mubr.f32.mxu0 0.0
    %561 = vmatmul.mubr.f32.gmra.mxu0 %v440
    %v562 = vpop.f32.mrf.mxu0
    %v563 = vadd.f32 %v394, %v562
    %v564 = vpop.f32.mrf.mxu0
    %565 = vmatprep.mubr.f32.mxu0 0.0
    %566 = vmatmul.mubr.f32.gmra.mxu0 %v443
    %v567 = vpop.f32.mrf.mxu0
    %v568 = vadd.f32 %v399, %v567
    %v569 = vpop.f32.mrf.mxu0
    %570 = vmatprep.mubr.f32.mxu0 0.0
    %571 = vmatmul.mubr.f32.gmra.mxu0 %v446
    %v572 = vpop.f32.mrf.mxu0
    %v573 = vadd.f32 %v404, %v572
    %v574 = vpop.f32.mrf.mxu0
    %575 = vmatprep.mubr.f32.mxu0 0.0
    %576 = vmatmul.mubr.f32.gmra.mxu0 %v449
    %v577 = vpop.f32.mrf.mxu0
    %v578 = vadd.f32 %v409, %v577
    %v579 = vpop.f32.mrf.mxu0
    %580 = vdwg.mxu0
    %v581 = vmax.f32 %v518, 0.0
    %v582 = vmax.f32 %v523, 0.0
    %v583 = vmax.f32 %v528, 0.0
    %v584 = vmax.f32 %v533, 0.0
    %v585 = vand.u32 2147483647, %v518
    %v586 = vand.u32 2147483647, %v523
    %v587 = vand.u32 2147483647, %v528
    %v588 = vand.u32 2147483647, %v533
    %v589 = vsub.f32 0.0, %v585
    %v590 = vsub.f32 0.0, %v586
    %v591 = vsub.f32 0.0, %v587
    %v592 = vsub.f32 0.0, %v588
    %v593 = vmul.f32 %v589, 1.442695
    %v594 = vpow.pop %v593
    %v595 = vmul.f32 %v590, 1.442695
    %v596 = vpow.pop %v595
    %v597 = vmul.f32 %v591, 1.442695
    %v598 = vpow.pop %v597
    %v599 = vmul.f32 %v592, 1.442695
    %v600 = vpow.pop %v599
    %v601 = vadd.f32 %v594, 1.0
    %v602 = vadd.f32 %v596, 1.0
    %v603 = vadd.f32 %v598, 1.0
    %v604 = vadd.f32 %v600, 1.0
    %v605 = vlog2.pop %v601
    %v606 = vmul.f32 %v605, 0.6931472
    %v607 = vlog2.pop %v602
    %v608 = vmul.f32 %v607, 0.6931472
    %v609 = vlog2.pop %v603
    %v610 = vmul.f32 %v609, 0.6931472
    %v611 = vlog2.pop %v604
    %v612 = vmul.f32 %v611, 0.6931472
    %v613 = vadd.f32 %v581, %v606
    %v614 = vadd.f32 %v582, %v608
    %v615 = vadd.f32 %v583, %v610
    %v616 = vadd.f32 %v584, %v612
    %v617 = vmax.f32 %v538, 0.0
    %v618 = vmax.f32 %v543, 0.0
    %v619 = vmax.f32 %v548, 0.0
    %v620 = vmax.f32 %v553, 0.0
    %v621 = vand.u32 2147483647, %v538
    %v622 = vand.u32 2147483647, %v543
    %v623 = vand.u32 2147483647, %v548
    %v624 = vand.u32 2147483647, %v553
    %v625 = vsub.f32 0.0, %v621
    %v626 = vsub.f32 0.0, %v622
    %v627 = vsub.f32 0.0, %v623
    %v628 = vsub.f32 0.0, %v624
    %v629 = vmul.f32 %v625, 1.442695
    %v630 = vpow.pop %v629
    %v631 = vmul.f32 %v626, 1.442695
    %v632 = vpow.pop %v631
    %v633 = vmul.f32 %v627, 1.442695
    %v634 = vpow.pop %v633
    %v635 = vmul.f32 %v628, 1.442695
    %v636 = vpow.pop %v635
    %v637 = vadd.f32 %v630, 1.0
    %v638 = vadd.f32 %v632, 1.0
    %v639 = vadd.f32 %v634, 1.0
    %v640 = vadd.f32 %v636, 1.0
    %v641 = vlog2.pop %v637
    %v642 = vmul.f32 %v641, 0.6931472
    %v643 = vlog2.pop %v638
    %v644 = vmul.f32 %v643, 0.6931472
    %v645 = vlog2.pop %v639
    %v646 = vmul.f32 %v645, 0.6931472
    %v647 = vlog2.pop %v640
    %v648 = vmul.f32 %v647, 0.6931472
    %v649 = vadd.f32 %v617, %v642
    %v650 = vadd.f32 %v618, %v644
    %v651 = vadd.f32 %v619, %v646
    %v652 = vadd.f32 %v620, %v648
    %654 = vset.pattern.permute.xlu0 0
    %655 = vperm.xlu0 %654, %v120
    %v656 = vpop.permute.xlu0 %655
    %659 = vset.pattern.permute.xlu0 0
    %660 = vperm.xlu0 %659, %v121
    %v661 = vpop.permute.xlu0 %660
    %v664 = vsel %vm411, %v118, 0
    %v667 = vsel %vm411, %v119, 0
    %669 = vmatprep.subr.mxu0 0.0
    %670 = vmatpush1.msra.mxu0 0.0
    %671 = vmatprep.subr.mxu0 0.0
    %672 = vmatpush1.msra.mxu0 0.0
    %673 = vmatprep.subr.mxu0 0.0
    %674 = vmatpush1.msra.mxu0 0.0
    %675 = vmatprep.subr.mxu0 0.0
    %676 = vmatpush1.msra.mxu0 0.0
    %677 = vmatprep.subr.mxu0 0.0
    %678 = vmatpush1.msra.mxu0 0.0
    %679 = vmatprep.subr.mxu0 0.0
    %680 = vmatpush1.msra.mxu0 0.0
    %681 = vmatprep.subr.mxu0 0.0
    %682 = vmatpush1.msra.mxu0 0.0
    %683 = vmatprep.subr.mxu0 0.0
    %684 = vmatpush1.msra.mxu0 0.0
    %685 = vmatprep.subr.mxu0 0.0
    %686 = vmatpush1.msra.mxu0 0.0
    %687 = vmatprep.subr.mxu0 0.0
    %688 = vmatpush1.msra.mxu0 0.0
    %689 = vmatprep.subr.mxu0 0.0
    %690 = vmatpush1.msra.mxu0 0.0
    %691 = vmatprep.subr.mxu0 0.0
    %692 = vmatpush1.msra.mxu0 0.0
    %693 = vmatprep.subr.mxu0 0.0
    %694 = vmatpush1.msra.mxu0 %v616
    %695 = vmatprep.subr.mxu0 0.0
    %696 = vmatpush1.msra.mxu0 %v615
    %697 = vmatprep.subr.mxu0 0.0
    %698 = vmatpush1.msra.mxu0 %v614
    %699 = vmatprep.subr.mxu0 0.0
    %700 = vmatpush1.msra.mxu0 %v613
    %701 = vmatprep.subr.mxu0 0.0
    %702 = vmatpush2.msra.mxu0 0.0
    %703 = vmatprep.subr.mxu0 0.0
    %704 = vmatpush2.msra.mxu0 0.0
    %705 = vmatprep.subr.mxu0 0.0
    %706 = vmatpush2.msra.mxu0 0.0
    %707 = vmatprep.subr.mxu0 0.0
    %708 = vmatpush2.msra.mxu0 0.0
    %709 = vmatprep.subr.mxu0 0.0
    %710 = vmatpush2.msra.mxu0 0.0
    %711 = vmatprep.subr.mxu0 0.0
    %712 = vmatpush2.msra.mxu0 0.0
    %713 = vmatprep.subr.mxu0 0.0
    %714 = vmatpush2.msra.mxu0 0.0
    %715 = vmatprep.subr.mxu0 0.0
    %716 = vmatpush2.msra.mxu0 0.0
    %717 = vmatprep.subr.mxu0 0.0
    %718 = vmatpush2.msra.mxu0 0.0
    %719 = vmatprep.subr.mxu0 0.0
    %720 = vmatpush2.msra.mxu0 0.0
    %721 = vmatprep.subr.mxu0 0.0
    %722 = vmatpush2.msra.mxu0 0.0
    %723 = vmatprep.subr.mxu0 0.0
    %724 = vmatpush2.msra.mxu0 0.0
    %725 = vmatprep.subr.mxu0 0.0
    %726 = vmatpush2.msra.mxu0 0.0
    %727 = vmatprep.subr.mxu0 0.0
    %728 = vmatpush2.msra.mxu0 0.0
    %729 = vmatprep.subr.mxu0 0.0
    %730 = vmatpush2.msra.mxu0 0.0
    %731 = vmatprep.subr.mxu0 0.0
    %732 = vmatpush2.msra.mxu0 0.0
    %733 = vmatprep.mubr.f32.mxu0 0.0
    %734 = vmatmul.mubr.f32.gmra.mxu0 %v664
    %v735 = vpop.f32.mrf.mxu0
    %v736 = vadd.f32 %v656, %v735
    %v737 = vpop.f32.mrf.mxu0
    %738 = vmatprep.mubr.f32.mxu0 0.0
    %739 = vmatmul.mubr.f32.gmra.mxu0 %v667
    %v740 = vpop.f32.mrf.mxu0
    %v741 = vadd.f32 %v661, %v740
    %v742 = vpop.f32.mrf.mxu0
    %743 = vdwg.mxu0
    %v744 = vmax.f32 %v741, 0.0
    %v745 = vand.u32 2147483647, %v741
    %v746 = vsub.f32 0.0, %v745
    %v747 = vmul.f32 %v746, 1.442695
    %v748 = vpow.pop %v747
    %v749 = vadd.f32 %v748, 1.0
    %v750 = vlog2.pop %v749
    %v751 = vmul.f32 %v750, 0.6931472
    %v752 = vadd.f32 %v744, %v751
    %754 = vset.pattern.permute.xlu0 0
    %755 = vperm.xlu0 %754, %v126
    %v756 = vpop.permute.xlu0 %755
    %v758 = vmul.f32 %v756, %v736
    %760 = vset.pattern.permute.xlu0 0
    %761 = vperm.xlu0 %760, %v122
    %v762 = vpop.permute.xlu0 %761
    %765 = vset.pattern.permute.xlu0 0
    %766 = vperm.xlu0 %765, %v123
    %v767 = vpop.permute.xlu0 %766
    %770 = vset.pattern.permute.xlu0 0
    %771 = vperm.xlu0 %770, %v124
    %v772 = vpop.permute.xlu0 %771
    %775 = vset.pattern.permute.xlu0 0
    %776 = vperm.xlu0 %775, %v125
    %v777 = vpop.permute.xlu0 %776
    %v779 = vlaneseq
    %v780 = vshrl.u32 %v779, 7
    %v781 = vsub.s32 0, %v780
    %v782 = vrot.slane %v752, %v781
    %v783 = vmul.f32 %v762, %v782
    %v784 = vmul.f32 %v767, %v782
    %v785 = vmul.f32 %v772, %v782
    %v786 = vmul.f32 %v777, %v782
    // While loop
    $region66: #{tpu_custom_call.1} parent=1 // loop_pre_header
      _
    $region67: #{tpu_custom_call.1} parent=1 // loop_header
      %s788 = sphi 0, %s3298
      %v789 = vphi 1.0, %v3271
      %s790 = sphi inf, %s3297
      %p791 = scmp.lt.s32.totalorder %s788, 125
      %p792 = scmp.ge.f32.partialorder %s790, 0.001
      %p793 = pnand %p791, %p792
      %p794 = pneg %p793
    $region68: #{tpu_custom_call.1} parent=1 // loop_header_branch
      %796 = sbr.rel (%p793) target = $region72
    $region69: #{tpu_custom_call.1} parent=1 // loop_body
      %s797 = smul.u32 %s788, 4
      %v798 = vmul.f32 %v789, %v287
      %v800 = vsel %vm172, %v74, 0
      %v803 = vsel %vm172, %v75, 0
      %v806 = vsel %vm172, %v76, 0
      %v809 = vsel %vm172, %v77, 0
      %811 = vmatprep.subr.mxu0 0.0
      %812 = vmatpush1.msra.mxu0 0.0
      %813 = vmatprep.subr.mxu0 0.0
      %814 = vmatpush1.msra.mxu0 0.0
      %815 = vmatprep.subr.mxu0 0.0
      %816 = vmatpush1.msra.mxu0 0.0
      %817 = vmatprep.subr.mxu0 0.0
      %818 = vmatpush1.msra.mxu0 0.0
      %819 = vmatprep.subr.mxu0 0.0
      %820 = vmatpush1.msra.mxu0 0.0
      %821 = vmatprep.subr.mxu0 0.0
      %822 = vmatpush1.msra.mxu0 0.0
      %823 = vmatprep.subr.mxu0 0.0
      %824 = vmatpush1.msra.mxu0 0.0
      %825 = vmatprep.subr.mxu0 0.0
      %826 = vmatpush1.msra.mxu0 0.0
      %827 = vmatprep.subr.mxu0 0.0
      %828 = vmatpush1.msra.mxu0 0.0
      %829 = vmatprep.subr.mxu0 0.0
      %830 = vmatpush1.msra.mxu0 0.0
      %831 = vmatprep.subr.mxu0 0.0
      %832 = vmatpush1.msra.mxu0 0.0
      %833 = vmatprep.subr.mxu0 0.0
      %834 = vmatpush1.msra.mxu0 0.0
      %835 = vmatprep.subr.mxu0 0.0
      %836 = vmatpush1.msra.mxu0 0.0
      %837 = vmatprep.subr.mxu0 0.0
      %838 = vmatpush1.msra.mxu0 0.0
      %839 = vmatprep.subr.mxu0 0.0
      %840 = vmatpush1.msra.mxu0 0.0
      %841 = vmatprep.subr.mxu0 0.0
      %842 = vmatpush1.msra.mxu0 %v798
      %843 = vmatprep.subr.mxu0 0.0
      %844 = vmatpush2.msra.mxu0 0.0
      %845 = vmatprep.subr.mxu0 0.0
      %846 = vmatpush2.msra.mxu0 0.0
      %847 = vmatprep.subr.mxu0 0.0
      %848 = vmatpush2.msra.mxu0 0.0
      %849 = vmatprep.subr.mxu0 0.0
      %850 = vmatpush2.msra.mxu0 0.0
      %851 = vmatprep.subr.mxu0 0.0
      %852 = vmatpush2.msra.mxu0 0.0
      %853 = vmatprep.subr.mxu0 0.0
      %854 = vmatpush2.msra.mxu0 0.0
      %855 = vmatprep.subr.mxu0 0.0
      %856 = vmatpush2.msra.mxu0 0.0
      %857 = vmatprep.subr.mxu0 0.0
      %858 = vmatpush2.msra.mxu0 0.0
      %859 = vmatprep.subr.mxu0 0.0
      %860 = vmatpush2.msra.mxu0 0.0
      %861 = vmatprep.subr.mxu0 0.0
      %862 = vmatpush2.msra.mxu0 0.0
      %863 = vmatprep.subr.mxu0 0.0
      %864 = vmatpush2.msra.mxu0 0.0
      %865 = vmatprep.subr.mxu0 0.0
      %866 = vmatpush2.msra.mxu0 0.0
      %867 = vmatprep.subr.mxu0 0.0
      %868 = vmatpush2.msra.mxu0 0.0
      %869 = vmatprep.subr.mxu0 0.0
      %870 = vmatpush2.msra.mxu0 0.0
      %871 = vmatprep.subr.mxu0 0.0
      %872 = vmatpush2.msra.mxu0 0.0
      %873 = vmatprep.subr.mxu0 0.0
      %874 = vmatpush2.msra.mxu0 0.0
      %875 = vmatprep.mubr.f32.mxu0 0.0
      %876 = vmatmul.mubr.f32.gmra.mxu0 %v800
      %v877 = vpop.f32.mrf.mxu0
      %v878 = vadd.f32 %v292, %v877
      %v879 = vpop.f32.mrf.mxu0
      %880 = vmatprep.mubr.f32.mxu0 0.0
      %881 = vmatmul.mubr.f32.gmra.mxu0 %v803
      %v882 = vpop.f32.mrf.mxu0
      %v883 = vadd.f32 %v297, %v882
      %v884 = vpop.f32.mrf.mxu0
      %885 = vmatprep.mubr.f32.mxu0 0.0
      %886 = vmatmul.mubr.f32.gmra.mxu0 %v806
      %v887 = vpop.f32.mrf.mxu0
      %v888 = vadd.f32 %v302, %v887
      %v889 = vpop.f32.mrf.mxu0
      %890 = vmatprep.mubr.f32.mxu0 0.0
      %891 = vmatmul.mubr.f32.gmra.mxu0 %v809
      %v892 = vpop.f32.mrf.mxu0
      %v893 = vadd.f32 %v307, %v892
      %v894 = vpop.f32.mrf.mxu0
      %895 = vdwg.mxu0
      %v896 = vand.u32 2147483647, %v878
      %v897 = vand.u32 2147483647, %v883
      %v898 = vand.u32 2147483647, %v888
      %v899 = vand.u32 2147483647, %v893
      %v900 = vsub.f32 0.0, %v896
      %v901 = vsub.f32 0.0, %v897
      %v902 = vsub.f32 0.0, %v898
      %v903 = vsub.f32 0.0, %v899
      %v904 = vmul.f32 %v900, 1.442695
      %v905 = vpow.pop %v904
      %v906 = vmul.f32 %v901, 1.442695
      %v907 = vpow.pop %v906
      %v908 = vmul.f32 %v902, 1.442695
      %v909 = vpow.pop %v908
      %v910 = vmul.f32 %v903, 1.442695
      %v911 = vpow.pop %v910
      %v912 = vadd.f32 %v905, 1.0
      %v913 = vadd.f32 %v907, 1.0
      %v914 = vadd.f32 %v909, 1.0
      %v915 = vadd.f32 %v911, 1.0
      %v916 = vrcp.pop %v912
      %v917 = vrcp.pop %v913
      %v918 = vrcp.pop %v914
      %v919 = vrcp.pop %v915
      %v920 = vmax.f32 %v878, 0.0
      %v921 = vmax.f32 %v883, 0.0
      %v922 = vmax.f32 %v888, 0.0
      %v923 = vmax.f32 %v893, 0.0
      %v924 = vlog2.pop %v912
      %v925 = vmul.f32 %v924, 0.6931472
      %v926 = vlog2.pop %v913
      %v927 = vmul.f32 %v926, 0.6931472
      %v928 = vlog2.pop %v914
      %v929 = vmul.f32 %v928, 0.6931472
      %v930 = vlog2.pop %v915
      %v931 = vmul.f32 %v930, 0.6931472
      %v932 = vadd.f32 %v920, %v925
      %v933 = vadd.f32 %v921, %v927
      %v934 = vadd.f32 %v922, %v929
      %v935 = vadd.f32 %v923, %v931
      %vm936 = vcmp.ge.f32.partialorder %v878, 0.0
      %vm937 = vcmp.ge.f32.partialorder %v883, 0.0
      %vm938 = vcmp.ge.f32.partialorder %v888, 0.0
      %vm939 = vcmp.ge.f32.partialorder %v893, 0.0
      %v940 = vmul.f32 %v905, %v916
      %v941 = vmul.f32 %v907, %v917
      %v942 = vmul.f32 %v909, %v918
      %v943 = vmul.f32 %v911, %v919
      %v944 = vsel %vm936, %v916, %v940
      %v945 = vsel %vm937, %v917, %v941
      %v946 = vsel %vm938, %v918, %v942
      %v947 = vsel %vm939, %v919, %v943
      %v948 = vmul.f32 %v932, %v649
      %v949 = vmul.f32 %v933, %v650
      %v950 = vmul.f32 %v934, %v651
      %v951 = vmul.f32 %v935, %v652
      %v952 = vmul.f32 %v789, %v558
      %v954 = vsel %vm172, %v109, 0
      %v957 = vsel %vm172, %v110, 0
      %v960 = vsel %vm172, %v111, 0
      %v963 = vsel %vm172, %v112, 0
      %965 = vmatprep.subr.mxu0 0.0
      %966 = vmatpush1.msra.mxu0 0.0
      %967 = vmatprep.subr.mxu0 0.0
      %968 = vmatpush1.msra.mxu0 0.0
      %969 = vmatprep.subr.mxu0 0.0
      %970 = vmatpush1.msra.mxu0 0.0
      %971 = vmatprep.subr.mxu0 0.0
      %972 = vmatpush1.msra.mxu0 0.0
      %973 = vmatprep.subr.mxu0 0.0
      %974 = vmatpush1.msra.mxu0 0.0
      %975 = vmatprep.subr.mxu0 0.0
      %976 = vmatpush1.msra.mxu0 0.0
      %977 = vmatprep.subr.mxu0 0.0
      %978 = vmatpush1.msra.mxu0 0.0
      %979 = vmatprep.subr.mxu0 0.0
      %980 = vmatpush1.msra.mxu0 0.0
      %981 = vmatprep.subr.mxu0 0.0
      %982 = vmatpush1.msra.mxu0 0.0
      %983 = vmatprep.subr.mxu0 0.0
      %984 = vmatpush1.msra.mxu0 0.0
      %985 = vmatprep.subr.mxu0 0.0
      %986 = vmatpush1.msra.mxu0 0.0
      %987 = vmatprep.subr.mxu0 0.0
      %988 = vmatpush1.msra.mxu0 0.0
      %989 = vmatprep.subr.mxu0 0.0
      %990 = vmatpush1.msra.mxu0 0.0
      %991 = vmatprep.subr.mxu0 0.0
      %992 = vmatpush1.msra.mxu0 0.0
      %993 = vmatprep.subr.mxu0 0.0
      %994 = vmatpush1.msra.mxu0 0.0
      %995 = vmatprep.subr.mxu0 0.0
      %996 = vmatpush1.msra.mxu0 %v952
      %997 = vmatprep.subr.mxu0 0.0
      %998 = vmatpush2.msra.mxu0 0.0
      %999 = vmatprep.subr.mxu0 0.0
      %1000 = vmatpush2.msra.mxu0 0.0
      %1001 = vmatprep.subr.mxu0 0.0
      %1002 = vmatpush2.msra.mxu0 0.0
      %1003 = vmatprep.subr.mxu0 0.0
      %1004 = vmatpush2.msra.mxu0 0.0
      %1005 = vmatprep.subr.mxu0 0.0
      %1006 = vmatpush2.msra.mxu0 0.0
      %1007 = vmatprep.subr.mxu0 0.0
      %1008 = vmatpush2.msra.mxu0 0.0
      %1009 = vmatprep.subr.mxu0 0.0
      %1010 = vmatpush2.msra.mxu0 0.0
      %1011 = vmatprep.subr.mxu0 0.0
      %1012 = vmatpush2.msra.mxu0 0.0
      %1013 = vmatprep.subr.mxu0 0.0
      %1014 = vmatpush2.msra.mxu0 0.0
      %1015 = vmatprep.subr.mxu0 0.0
      %1016 = vmatpush2.msra.mxu0 0.0
      %1017 = vmatprep.subr.mxu0 0.0
      %1018 = vmatpush2.msra.mxu0 0.0
      %1019 = vmatprep.subr.mxu0 0.0
      %1020 = vmatpush2.msra.mxu0 0.0
      %1021 = vmatprep.subr.mxu0 0.0
      %1022 = vmatpush2.msra.mxu0 0.0
      %1023 = vmatprep.subr.mxu0 0.0
      %1024 = vmatpush2.msra.mxu0 0.0
      %1025 = vmatprep.subr.mxu0 0.0
      %1026 = vmatpush2.msra.mxu0 0.0
      %1027 = vmatprep.subr.mxu0 0.0
      %1028 = vmatpush2.msra.mxu0 0.0
      %1029 = vmatprep.mubr.f32.mxu0 0.0
      %1030 = vmatmul.mubr.f32.gmra.mxu0 %v954
      %v1031 = vpop.f32.mrf.mxu0
      %v1032 = vadd.f32 0.0, %v1031
      %v1033 = vpop.f32.mrf.mxu0
      %1034 = vmatprep.mubr.f32.mxu0 0.0
      %1035 = vmatmul.mubr.f32.gmra.mxu0 %v957
      %v1036 = vpop.f32.mrf.mxu0
      %v1037 = vadd.f32 0.0, %v1036
      %v1038 = vpop.f32.mrf.mxu0
      %1039 = vmatprep.mubr.f32.mxu0 0.0
      %1040 = vmatmul.mubr.f32.gmra.mxu0 %v960
      %v1041 = vpop.f32.mrf.mxu0
      %v1042 = vadd.f32 0.0, %v1041
      %v1043 = vpop.f32.mrf.mxu0
      %1044 = vmatprep.mubr.f32.mxu0 0.0
      %1045 = vmatmul.mubr.f32.gmra.mxu0 %v963
      %v1046 = vpop.f32.mrf.mxu0
      %v1047 = vadd.f32 0.0, %v1046
      %v1048 = vpop.f32.mrf.mxu0
      %1049 = vdwg.mxu0
      %v1051 = vsel %vm411, %v105, 0
      %v1054 = vsel %vm411, %v106, 0
      %v1057 = vsel %vm411, %v107, 0
      %v1060 = vsel %vm411, %v108, 0
      %1062 = vmatprep.subr.mxu0 0.0
      %1063 = vmatpush1.msra.mxu0 0.0
      %1064 = vmatprep.subr.mxu0 0.0
      %1065 = vmatpush1.msra.mxu0 0.0
      %1066 = vmatprep.subr.mxu0 0.0
      %1067 = vmatpush1.msra.mxu0 0.0
      %1068 = vmatprep.subr.mxu0 0.0
      %1069 = vmatpush1.msra.mxu0 0.0
      %1070 = vmatprep.subr.mxu0 0.0
      %1071 = vmatpush1.msra.mxu0 0.0
      %1072 = vmatprep.subr.mxu0 0.0
      %1073 = vmatpush1.msra.mxu0 0.0
      %1074 = vmatprep.subr.mxu0 0.0
      %1075 = vmatpush1.msra.mxu0 0.0
      %1076 = vmatprep.subr.mxu0 0.0
      %1077 = vmatpush1.msra.mxu0 0.0
      %1078 = vmatprep.subr.mxu0 0.0
      %1079 = vmatpush1.msra.mxu0 0.0
      %1080 = vmatprep.subr.mxu0 0.0
      %1081 = vmatpush1.msra.mxu0 0.0
      %1082 = vmatprep.subr.mxu0 0.0
      %1083 = vmatpush1.msra.mxu0 0.0
      %1084 = vmatprep.subr.mxu0 0.0
      %1085 = vmatpush1.msra.mxu0 0.0
      %1086 = vmatprep.subr.mxu0 0.0
      %1087 = vmatpush1.msra.mxu0 %v951
      %1088 = vmatprep.subr.mxu0 0.0
      %1089 = vmatpush1.msra.mxu0 %v950
      %1090 = vmatprep.subr.mxu0 0.0
      %1091 = vmatpush1.msra.mxu0 %v949
      %1092 = vmatprep.subr.mxu0 0.0
      %1093 = vmatpush1.msra.mxu0 %v948
      %1094 = vmatprep.subr.mxu0 0.0
      %1095 = vmatpush2.msra.mxu0 0.0
      %1096 = vmatprep.subr.mxu0 0.0
      %1097 = vmatpush2.msra.mxu0 0.0
      %1098 = vmatprep.subr.mxu0 0.0
      %1099 = vmatpush2.msra.mxu0 0.0
      %1100 = vmatprep.subr.mxu0 0.0
      %1101 = vmatpush2.msra.mxu0 0.0
      %1102 = vmatprep.subr.mxu0 0.0
      %1103 = vmatpush2.msra.mxu0 0.0
      %1104 = vmatprep.subr.mxu0 0.0
      %1105 = vmatpush2.msra.mxu0 0.0
      %1106 = vmatprep.subr.mxu0 0.0
      %1107 = vmatpush2.msra.mxu0 0.0
      %1108 = vmatprep.subr.mxu0 0.0
      %1109 = vmatpush2.msra.mxu0 0.0
      %1110 = vmatprep.subr.mxu0 0.0
      %1111 = vmatpush2.msra.mxu0 0.0
      %1112 = vmatprep.subr.mxu0 0.0
      %1113 = vmatpush2.msra.mxu0 0.0
      %1114 = vmatprep.subr.mxu0 0.0
      %1115 = vmatpush2.msra.mxu0 0.0
      %1116 = vmatprep.subr.mxu0 0.0
      %1117 = vmatpush2.msra.mxu0 0.0
      %1118 = vmatprep.subr.mxu0 0.0
      %1119 = vmatpush2.msra.mxu0 0.0
      %1120 = vmatprep.subr.mxu0 0.0
      %1121 = vmatpush2.msra.mxu0 0.0
      %1122 = vmatprep.subr.mxu0 0.0
      %1123 = vmatpush2.msra.mxu0 0.0
      %1124 = vmatprep.subr.mxu0 0.0
      %1125 = vmatpush2.msra.mxu0 0.0
      %1126 = vmatprep.mubr.f32.mxu0 0.0
      %1127 = vmatmul.mubr.f32.gmra.mxu0 %v1051
      %v1128 = vpop.f32.mrf.mxu0
      %v1129 = vadd.f32 %v1032, %v1128
      %v1130 = vpop.f32.mrf.mxu0
      %1131 = vmatprep.mubr.f32.mxu0 0.0
      %1132 = vmatmul.mubr.f32.gmra.mxu0 %v1054
      %v1133 = vpop.f32.mrf.mxu0
      %v1134 = vadd.f32 %v1037, %v1133
      %v1135 = vpop.f32.mrf.mxu0
      %1136 = vmatprep.mubr.f32.mxu0 0.0
      %1137 = vmatmul.mubr.f32.gmra.mxu0 %v1057
      %v1138 = vpop.f32.mrf.mxu0
      %v1139 = vadd.f32 %v1042, %v1138
      %v1140 = vpop.f32.mrf.mxu0
      %1141 = vmatprep.mubr.f32.mxu0 0.0
      %1142 = vmatmul.mubr.f32.gmra.mxu0 %v1060
      %v1143 = vpop.f32.mrf.mxu0
      %v1144 = vadd.f32 %v1047, %v1143
      %v1145 = vpop.f32.mrf.mxu0
      %1146 = vdwg.mxu0
      %v1147 = vadd.f32 %v1129, %v563
      %v1148 = vadd.f32 %v1134, %v568
      %v1149 = vadd.f32 %v1139, %v573
      %v1150 = vadd.f32 %v1144, %v578
      %v1151 = vand.u32 2147483647, %v1147
      %v1152 = vand.u32 2147483647, %v1148
      %v1153 = vand.u32 2147483647, %v1149
      %v1154 = vand.u32 2147483647, %v1150
      %v1155 = vsub.f32 0.0, %v1151
      %v1156 = vsub.f32 0.0, %v1152
      %v1157 = vsub.f32 0.0, %v1153
      %v1158 = vsub.f32 0.0, %v1154
      %v1159 = vmul.f32 %v1155, 1.442695
      %v1160 = vpow.pop %v1159
      %v1161 = vmul.f32 %v1156, 1.442695
      %v1162 = vpow.pop %v1161
      %v1163 = vmul.f32 %v1157, 1.442695
      %v1164 = vpow.pop %v1163
      %v1165 = vmul.f32 %v1158, 1.442695
      %v1166 = vpow.pop %v1165
      %v1167 = vadd.f32 %v1160, 1.0
      %v1168 = vadd.f32 %v1162, 1.0
      %v1169 = vadd.f32 %v1164, 1.0
      %v1170 = vadd.f32 %v1166, 1.0
      %v1171 = vrcp.pop %v1167
      %v1172 = vrcp.pop %v1168
      %v1173 = vrcp.pop %v1169
      %v1174 = vrcp.pop %v1170
      %vm1175 = vcmp.ge.f32.partialorder %v1147, 0.0
      %vm1176 = vcmp.ge.f32.partialorder %v1148, 0.0
      %vm1177 = vcmp.ge.f32.partialorder %v1149, 0.0
      %vm1178 = vcmp.ge.f32.partialorder %v1150, 0.0
      %v1179 = vmul.f32 %v1160, %v1171
      %v1180 = vmul.f32 %v1162, %v1172
      %v1181 = vmul.f32 %v1164, %v1173
      %v1182 = vmul.f32 %v1166, %v1174
      %v1183 = vsel %vm1175, %v1171, %v1179
      %v1184 = vsel %vm1176, %v1172, %v1180
      %v1185 = vsel %vm1177, %v1173, %v1181
      %v1186 = vsel %vm1178, %v1174, %v1182
      %v1187 = vadd.f32 %v789, %v758
      %v1188 = vmul.f32 %v783, %v1183
      %v1189 = vmul.f32 %v784, %v1184
      %v1190 = vmul.f32 %v785, %v1185
      %v1191 = vmul.f32 %v786, %v1186
      %v1193 = vsel %vm411, %v113, 0
      %v1196 = vsel %vm411, %v114, 0
      %v1199 = vsel %vm411, %v115, 0
      %v1202 = vsel %vm411, %v116, 0
      %1204 = vmatprep.subr.mxu0 0.0
      %1205 = vmatpush1.msra.mxu0 0.0
      %1206 = vmatprep.subr.mxu0 0.0
      %1207 = vmatpush1.msra.mxu0 0.0
      %1208 = vmatprep.subr.mxu0 0.0
      %1209 = vmatpush1.msra.mxu0 0.0
      %1210 = vmatprep.subr.mxu0 0.0
      %1211 = vmatpush1.msra.mxu0 0.0
      %1212 = vmatprep.subr.mxu0 0.0
      %1213 = vmatpush1.msra.mxu0 0.0
      %1214 = vmatprep.subr.mxu0 0.0
      %1215 = vmatpush1.msra.mxu0 0.0
      %1216 = vmatprep.subr.mxu0 0.0
      %1217 = vmatpush1.msra.mxu0 0.0
      %1218 = vmatprep.subr.mxu0 0.0
      %1219 = vmatpush1.msra.mxu0 0.0
      %1220 = vmatprep.subr.mxu0 0.0
      %1221 = vmatpush1.msra.mxu0 0.0
      %1222 = vmatprep.subr.mxu0 0.0
      %1223 = vmatpush1.msra.mxu0 0.0
      %1224 = vmatprep.subr.mxu0 0.0
      %1225 = vmatpush1.msra.mxu0 0.0
      %1226 = vmatprep.subr.mxu0 0.0
      %1227 = vmatpush1.msra.mxu0 0.0
      %1228 = vmatprep.subr.mxu0 0.0
      %1229 = vmatpush1.msra.mxu0 %v1191
      %1230 = vmatprep.subr.mxu0 0.0
      %1231 = vmatpush1.msra.mxu0 %v1190
      %1232 = vmatprep.subr.mxu0 0.0
      %1233 = vmatpush1.msra.mxu0 %v1189
      %1234 = vmatprep.subr.mxu0 0.0
      %1235 = vmatpush1.msra.mxu0 %v1188
      %1236 = vmatprep.subr.mxu0 0.0
      %1237 = vmatpush2.msra.mxu0 0.0
      %1238 = vmatprep.subr.mxu0 0.0
      %1239 = vmatpush2.msra.mxu0 0.0
      %1240 = vmatprep.subr.mxu0 0.0
      %1241 = vmatpush2.msra.mxu0 0.0
      %1242 = vmatprep.subr.mxu0 0.0
      %1243 = vmatpush2.msra.mxu0 0.0
      %1244 = vmatprep.subr.mxu0 0.0
      %1245 = vmatpush2.msra.mxu0 0.0
      %1246 = vmatprep.subr.mxu0 0.0
      %1247 = vmatpush2.msra.mxu0 0.0
      %1248 = vmatprep.subr.mxu0 0.0
      %1249 = vmatpush2.msra.mxu0 0.0
      %1250 = vmatprep.subr.mxu0 0.0
      %1251 = vmatpush2.msra.mxu0 0.0
      %1252 = vmatprep.subr.mxu0 0.0
      %1253 = vmatpush2.msra.mxu0 0.0
      %1254 = vmatprep.subr.mxu0 0.0
      %1255 = vmatpush2.msra.mxu0 0.0
      %1256 = vmatprep.subr.mxu0 0.0
      %1257 = vmatpush2.msra.mxu0 0.0
      %1258 = vmatprep.subr.mxu0 0.0
      %1259 = vmatpush2.msra.mxu0 0.0
      %1260 = vmatprep.subr.mxu0 0.0
      %1261 = vmatpush2.msra.mxu0 0.0
      %1262 = vmatprep.subr.mxu0 0.0
      %1263 = vmatpush2.msra.mxu0 0.0
      %1264 = vmatprep.subr.mxu0 0.0
      %1265 = vmatpush2.msra.mxu0 0.0
      %1266 = vmatprep.subr.mxu0 0.0
      %1267 = vmatpush2.msra.mxu0 0.0
      %1268 = vmatprep.mubr.f32.mxu0 0.0
      %1269 = vmatmul.mubr.f32.gmra.mxu0 %v1193
      %v1270 = vpop.f32.mrf.mxu0
      %v1271 = vadd.f32 0.0, %v1270
      %v1272 = vpop.f32.mrf.mxu0
      %1273 = vmatprep.mubr.f32.mxu0 0.0
      %1274 = vmatmul.mubr.f32.gmra.mxu0 %v1196
      %v1275 = vpop.f32.mrf.mxu0
      %v1276 = vadd.f32 0.0, %v1275
      %v1277 = vpop.f32.mrf.mxu0
      %1278 = vmatprep.mubr.f32.mxu0 0.0
      %1279 = vmatmul.mubr.f32.gmra.mxu0 %v1199
      %v1280 = vpop.f32.mrf.mxu0
      %v1281 = vadd.f32 0.0, %v1280
      %v1282 = vpop.f32.mrf.mxu0
      %1283 = vmatprep.mubr.f32.mxu0 0.0
      %1284 = vmatmul.mubr.f32.gmra.mxu0 %v1202
      %v1285 = vpop.f32.mrf.mxu0
      %v1286 = vadd.f32 0.0, %v1285
      %v1287 = vpop.f32.mrf.mxu0
      %1288 = vdwg.mxu0
      %v1289 = vmul.f32 %v1271, %v649
      %v1290 = vmul.f32 %v1276, %v650
      %v1291 = vmul.f32 %v1281, %v651
      %v1292 = vmul.f32 %v1286, %v652
      %v1294 = vsel %vm411, %v117, 0
      %1296 = vmatprep.subr.mxu0 0.0
      %1297 = vmatpush1.msra.mxu0 0.0
      %1298 = vmatprep.subr.mxu0 0.0
      %1299 = vmatpush1.msra.mxu0 0.0
      %1300 = vmatprep.subr.mxu0 0.0
      %1301 = vmatpush1.msra.mxu0 0.0
      %1302 = vmatprep.subr.mxu0 0.0
      %1303 = vmatpush1.msra.mxu0 0.0
      %1304 = vmatprep.subr.mxu0 0.0
      %1305 = vmatpush1.msra.mxu0 0.0
      %1306 = vmatprep.subr.mxu0 0.0
      %1307 = vmatpush1.msra.mxu0 0.0
      %1308 = vmatprep.subr.mxu0 0.0
      %1309 = vmatpush1.msra.mxu0 0.0
      %1310 = vmatprep.subr.mxu0 0.0
      %1311 = vmatpush1.msra.mxu0 0.0
      %1312 = vmatprep.subr.mxu0 0.0
      %1313 = vmatpush1.msra.mxu0 0.0
      %1314 = vmatprep.subr.mxu0 0.0
      %1315 = vmatpush1.msra.mxu0 0.0
      %1316 = vmatprep.subr.mxu0 0.0
      %1317 = vmatpush1.msra.mxu0 0.0
      %1318 = vmatprep.subr.mxu0 0.0
      %1319 = vmatpush1.msra.mxu0 0.0
      %1320 = vmatprep.subr.mxu0 0.0
      %1321 = vmatpush1.msra.mxu0 %v1191
      %1322 = vmatprep.subr.mxu0 0.0
      %1323 = vmatpush1.msra.mxu0 %v1190
      %1324 = vmatprep.subr.mxu0 0.0
      %1325 = vmatpush1.msra.mxu0 %v1189
      %1326 = vmatprep.subr.mxu0 0.0
      %1327 = vmatpush1.msra.mxu0 %v1188
      %1328 = vmatprep.subr.mxu0 0.0
      %1329 = vmatpush2.msra.mxu0 0.0
      %1330 = vmatprep.subr.mxu0 0.0
      %1331 = vmatpush2.msra.mxu0 0.0
      %1332 = vmatprep.subr.mxu0 0.0
      %1333 = vmatpush2.msra.mxu0 0.0
      %1334 = vmatprep.subr.mxu0 0.0
      %1335 = vmatpush2.msra.mxu0 0.0
      %1336 = vmatprep.subr.mxu0 0.0
      %1337 = vmatpush2.msra.mxu0 0.0
      %1338 = vmatprep.subr.mxu0 0.0
      %1339 = vmatpush2.msra.mxu0 0.0
      %1340 = vmatprep.subr.mxu0 0.0
      %1341 = vmatpush2.msra.mxu0 0.0
      %1342 = vmatprep.subr.mxu0 0.0
      %1343 = vmatpush2.msra.mxu0 0.0
      %1344 = vmatprep.subr.mxu0 0.0
      %1345 = vmatpush2.msra.mxu0 0.0
      %1346 = vmatprep.subr.mxu0 0.0
      %1347 = vmatpush2.msra.mxu0 0.0
      %1348 = vmatprep.subr.mxu0 0.0
      %1349 = vmatpush2.msra.mxu0 0.0
      %1350 = vmatprep.subr.mxu0 0.0
      %1351 = vmatpush2.msra.mxu0 0.0
      %1352 = vmatprep.subr.mxu0 0.0
      %1353 = vmatpush2.msra.mxu0 0.0
      %1354 = vmatprep.subr.mxu0 0.0
      %1355 = vmatpush2.msra.mxu0 0.0
      %1356 = vmatprep.subr.mxu0 0.0
      %1357 = vmatpush2.msra.mxu0 0.0
      %1358 = vmatprep.subr.mxu0 0.0
      %1359 = vmatpush2.msra.mxu0 0.0
      %1360 = vmatprep.mubr.f32.mxu0 0.0
      %1361 = vmatmul.mubr.f32.gmra.mxu0 %v1294
      %v1362 = vpop.f32.mrf.mxu0
      %v1363 = vadd.f32 0.0, %v1362
      %v1364 = vpop.f32.mrf.mxu0
      %1365 = vdwg.mxu0
      %v1366 = vmul.f32 %v1363, %v558
      %v1367 = vadd.f32 %v1187, %v1366
      %v1368 = vmul.f32 %v1289, %v944
      %v1369 = vmul.f32 %v1290, %v945
      %v1370 = vmul.f32 %v1291, %v946
      %v1371 = vmul.f32 %v1292, %v947
      %v1373 = vsel %vm411, %v78, 0
      %1375 = vmatprep.subr.mxu0 0.0
      %1376 = vmatpush1.msra.mxu0 0.0
      %1377 = vmatprep.subr.mxu0 0.0
      %1378 = vmatpush1.msra.mxu0 0.0
      %1379 = vmatprep.subr.mxu0 0.0
      %1380 = vmatpush1.msra.mxu0 0.0
      %1381 = vmatprep.subr.mxu0 0.0
      %1382 = vmatpush1.msra.mxu0 0.0
      %1383 = vmatprep.subr.mxu0 0.0
      %1384 = vmatpush1.msra.mxu0 0.0
      %1385 = vmatprep.subr.mxu0 0.0
      %1386 = vmatpush1.msra.mxu0 0.0
      %1387 = vmatprep.subr.mxu0 0.0
      %1388 = vmatpush1.msra.mxu0 0.0
      %1389 = vmatprep.subr.mxu0 0.0
      %1390 = vmatpush1.msra.mxu0 0.0
      %1391 = vmatprep.subr.mxu0 0.0
      %1392 = vmatpush1.msra.mxu0 0.0
      %1393 = vmatprep.subr.mxu0 0.0
      %1394 = vmatpush1.msra.mxu0 0.0
      %1395 = vmatprep.subr.mxu0 0.0
      %1396 = vmatpush1.msra.mxu0 0.0
      %1397 = vmatprep.subr.mxu0 0.0
      %1398 = vmatpush1.msra.mxu0 0.0
      %1399 = vmatprep.subr.mxu0 0.0
      %1400 = vmatpush1.msra.mxu0 %v1371
      %1401 = vmatprep.subr.mxu0 0.0
      %1402 = vmatpush1.msra.mxu0 %v1370
      %1403 = vmatprep.subr.mxu0 0.0
      %1404 = vmatpush1.msra.mxu0 %v1369
      %1405 = vmatprep.subr.mxu0 0.0
      %1406 = vmatpush1.msra.mxu0 %v1368
      %1407 = vmatprep.subr.mxu0 0.0
      %1408 = vmatpush2.msra.mxu0 0.0
      %1409 = vmatprep.subr.mxu0 0.0
      %1410 = vmatpush2.msra.mxu0 0.0
      %1411 = vmatprep.subr.mxu0 0.0
      %1412 = vmatpush2.msra.mxu0 0.0
      %1413 = vmatprep.subr.mxu0 0.0
      %1414 = vmatpush2.msra.mxu0 0.0
      %1415 = vmatprep.subr.mxu0 0.0
      %1416 = vmatpush2.msra.mxu0 0.0
      %1417 = vmatprep.subr.mxu0 0.0
      %1418 = vmatpush2.msra.mxu0 0.0
      %1419 = vmatprep.subr.mxu0 0.0
      %1420 = vmatpush2.msra.mxu0 0.0
      %1421 = vmatprep.subr.mxu0 0.0
      %1422 = vmatpush2.msra.mxu0 0.0
      %1423 = vmatprep.subr.mxu0 0.0
      %1424 = vmatpush2.msra.mxu0 0.0
      %1425 = vmatprep.subr.mxu0 0.0
      %1426 = vmatpush2.msra.mxu0 0.0
      %1427 = vmatprep.subr.mxu0 0.0
      %1428 = vmatpush2.msra.mxu0 0.0
      %1429 = vmatprep.subr.mxu0 0.0
      %1430 = vmatpush2.msra.mxu0 0.0
      %1431 = vmatprep.subr.mxu0 0.0
      %1432 = vmatpush2.msra.mxu0 0.0
      %1433 = vmatprep.subr.mxu0 0.0
      %1434 = vmatpush2.msra.mxu0 0.0
      %1435 = vmatprep.subr.mxu0 0.0
      %1436 = vmatpush2.msra.mxu0 0.0
      %1437 = vmatprep.subr.mxu0 0.0
      %1438 = vmatpush2.msra.mxu0 0.0
      %1439 = vmatprep.mubr.f32.mxu0 0.0
      %1440 = vmatmul.mubr.f32.gmra.mxu0 %v1373
      %v1441 = vpop.f32.mrf.mxu0
      %v1442 = vadd.f32 0.0, %v1441
      %v1443 = vpop.f32.mrf.mxu0
      %1444 = vdwg.mxu0
      %v1445 = vmul.f32 %v1442, %v287
      %v1446 = vadd.f32 %v1367, %v1445
      %v1447 = vsub.f32 %v55, %v1446
      %s1448 = sadd.s32 %s797, 1
      %s1449 = scvt.s32.f32 %s1448
      %v1450 = vstv %s1449
      %v1451 = vrcp.pop %v1450
      %s1452 = vtos %v1451
      %s1453 = smul.f32 2.0, %s1452
      %v1454 = vstv %s1453
      %v1455 = vmul.f32 %v1454, %v1447
      %v1456 = vadd.f32 %v789, %v1455
      %v1457 = vmul.f32 %v1456, %v287
      %1458 = vmatprep.subr.mxu0 0.0
      %1459 = vmatpush1.msra.mxu0 0.0
      %1460 = vmatprep.subr.mxu0 0.0
      %1461 = vmatpush1.msra.mxu0 0.0
      %1462 = vmatprep.subr.mxu0 0.0
      %1463 = vmatpush1.msra.mxu0 0.0
      %1464 = vmatprep.subr.mxu0 0.0
      %1465 = vmatpush1.msra.mxu0 0.0
      %1466 = vmatprep.subr.mxu0 0.0
      %1467 = vmatpush1.msra.mxu0 0.0
      %1468 = vmatprep.subr.mxu0 0.0
      %1469 = vmatpush1.msra.mxu0 0.0
      %1470 = vmatprep.subr.mxu0 0.0
      %1471 = vmatpush1.msra.mxu0 0.0
      %1472 = vmatprep.subr.mxu0 0.0
      %1473 = vmatpush1.msra.mxu0 0.0
      %1474 = vmatprep.subr.mxu0 0.0
      %1475 = vmatpush1.msra.mxu0 0.0
      %1476 = vmatprep.subr.mxu0 0.0
      %1477 = vmatpush1.msra.mxu0 0.0
      %1478 = vmatprep.subr.mxu0 0.0
      %1479 = vmatpush1.msra.mxu0 0.0
      %1480 = vmatprep.subr.mxu0 0.0
      %1481 = vmatpush1.msra.mxu0 0.0
      %1482 = vmatprep.subr.mxu0 0.0
      %1483 = vmatpush1.msra.mxu0 0.0
      %1484 = vmatprep.subr.mxu0 0.0
      %1485 = vmatpush1.msra.mxu0 0.0
      %1486 = vmatprep.subr.mxu0 0.0
      %1487 = vmatpush1.msra.mxu0 0.0
      %1488 = vmatprep.subr.mxu0 0.0
      %1489 = vmatpush1.msra.mxu0 %v1457
      %1490 = vmatprep.subr.mxu0 0.0
      %1491 = vmatpush2.msra.mxu0 0.0
      %1492 = vmatprep.subr.mxu0 0.0
      %1493 = vmatpush2.msra.mxu0 0.0
      %1494 = vmatprep.subr.mxu0 0.0
      %1495 = vmatpush2.msra.mxu0 0.0
      %1496 = vmatprep.subr.mxu0 0.0
      %1497 = vmatpush2.msra.mxu0 0.0
      %1498 = vmatprep.subr.mxu0 0.0
      %1499 = vmatpush2.msra.mxu0 0.0
      %1500 = vmatprep.subr.mxu0 0.0
      %1501 = vmatpush2.msra.mxu0 0.0
      %1502 = vmatprep.subr.mxu0 0.0
      %1503 = vmatpush2.msra.mxu0 0.0
      %1504 = vmatprep.subr.mxu0 0.0
      %1505 = vmatpush2.msra.mxu0 0.0
      %1506 = vmatprep.subr.mxu0 0.0
      %1507 = vmatpush2.msra.mxu0 0.0
      %1508 = vmatprep.subr.mxu0 0.0
      %1509 = vmatpush2.msra.mxu0 0.0
      %1510 = vmatprep.subr.mxu0 0.0
      %1511 = vmatpush2.msra.mxu0 0.0
      %1512 = vmatprep.subr.mxu0 0.0
      %1513 = vmatpush2.msra.mxu0 0.0
      %1514 = vmatprep.subr.mxu0 0.0
      %1515 = vmatpush2.msra.mxu0 0.0
      %1516 = vmatprep.subr.mxu0 0.0
      %1517 = vmatpush2.msra.mxu0 0.0
      %1518 = vmatprep.subr.mxu0 0.0
      %1519 = vmatpush2.msra.mxu0 0.0
      %1520 = vmatprep.subr.mxu0 0.0
      %1521 = vmatpush2.msra.mxu0 0.0
      %1522 = vmatprep.mubr.f32.mxu0 0.0
      %1523 = vmatmul.mubr.f32.gmra.mxu0 %v800
      %v1524 = vpop.f32.mrf.mxu0
      %v1525 = vadd.f32 %v292, %v1524
      %v1526 = vpop.f32.mrf.mxu0
      %1527 = vmatprep.mubr.f32.mxu0 0.0
      %1528 = vmatmul.mubr.f32.gmra.mxu0 %v803
      %v1529 = vpop.f32.mrf.mxu0
      %v1530 = vadd.f32 %v297, %v1529
      %v1531 = vpop.f32.mrf.mxu0
      %1532 = vmatprep.mubr.f32.mxu0 0.0
      %1533 = vmatmul.mubr.f32.gmra.mxu0 %v806
      %v1534 = vpop.f32.mrf.mxu0
      %v1535 = vadd.f32 %v302, %v1534
      %v1536 = vpop.f32.mrf.mxu0
      %1537 = vmatprep.mubr.f32.mxu0 0.0
      %1538 = vmatmul.mubr.f32.gmra.mxu0 %v809
      %v1539 = vpop.f32.mrf.mxu0
      %v1540 = vadd.f32 %v307, %v1539
      %v1541 = vpop.f32.mrf.mxu0
      %1542 = vdwg.mxu0
      %v1543 = vand.u32 2147483647, %v1525
      %v1544 = vand.u32 2147483647, %v1530
      %v1545 = vand.u32 2147483647, %v1535
      %v1546 = vand.u32 2147483647, %v1540
      %v1547 = vsub.f32 0.0, %v1543
      %v1548 = vsub.f32 0.0, %v1544
      %v1549 = vsub.f32 0.0, %v1545
      %v1550 = vsub.f32 0.0, %v1546
      %v1551 = vmul.f32 %v1547, 1.442695
      %v1552 = vpow.pop %v1551
      %v1553 = vmul.f32 %v1548, 1.442695
      %v1554 = vpow.pop %v1553
      %v1555 = vmul.f32 %v1549, 1.442695
      %v1556 = vpow.pop %v1555
      %v1557 = vmul.f32 %v1550, 1.442695
      %v1558 = vpow.pop %v1557
      %v1559 = vadd.f32 %v1552, 1.0
      %v1560 = vadd.f32 %v1554, 1.0
      %v1561 = vadd.f32 %v1556, 1.0
      %v1562 = vadd.f32 %v1558, 1.0
      %v1563 = vrcp.pop %v1559
      %v1564 = vrcp.pop %v1560
      %v1565 = vrcp.pop %v1561
      %v1566 = vrcp.pop %v1562
      %v1567 = vmax.f32 %v1525, 0.0
      %v1568 = vmax.f32 %v1530, 0.0
      %v1569 = vmax.f32 %v1535, 0.0
      %v1570 = vmax.f32 %v1540, 0.0
      %v1571 = vlog2.pop %v1559
      %v1572 = vmul.f32 %v1571, 0.6931472
      %v1573 = vlog2.pop %v1560
      %v1574 = vmul.f32 %v1573, 0.6931472
      %v1575 = vlog2.pop %v1561
      %v1576 = vmul.f32 %v1575, 0.6931472
      %v1577 = vlog2.pop %v1562
      %v1578 = vmul.f32 %v1577, 0.6931472
      %v1579 = vadd.f32 %v1567, %v1572
      %v1580 = vadd.f32 %v1568, %v1574
      %v1581 = vadd.f32 %v1569, %v1576
      %v1582 = vadd.f32 %v1570, %v1578
      %vm1583 = vcmp.ge.f32.partialorder %v1525, 0.0
      %vm1584 = vcmp.ge.f32.partialorder %v1530, 0.0
      %vm1585 = vcmp.ge.f32.partialorder %v1535, 0.0
      %vm1586 = vcmp.ge.f32.partialorder %v1540, 0.0
      %v1587 = vmul.f32 %v1552, %v1563
      %v1588 = vmul.f32 %v1554, %v1564
      %v1589 = vmul.f32 %v1556, %v1565
      %v1590 = vmul.f32 %v1558, %v1566
      %v1591 = vsel %vm1583, %v1563, %v1587
      %v1592 = vsel %vm1584, %v1564, %v1588
      %v1593 = vsel %vm1585, %v1565, %v1589
      %v1594 = vsel %vm1586, %v1566, %v1590
      %v1595 = vmul.f32 %v1579, %v649
      %v1596 = vmul.f32 %v1580, %v650
      %v1597 = vmul.f32 %v1581, %v651
      %v1598 = vmul.f32 %v1582, %v652
      %v1599 = vmul.f32 %v1456, %v558
      %1600 = vmatprep.subr.mxu0 0.0
      %1601 = vmatpush1.msra.mxu0 0.0
      %1602 = vmatprep.subr.mxu0 0.0
      %1603 = vmatpush1.msra.mxu0 0.0
      %1604 = vmatprep.subr.mxu0 0.0
      %1605 = vmatpush1.msra.mxu0 0.0
      %1606 = vmatprep.subr.mxu0 0.0
      %1607 = vmatpush1.msra.mxu0 0.0
      %1608 = vmatprep.subr.mxu0 0.0
      %1609 = vmatpush1.msra.mxu0 0.0
      %1610 = vmatprep.subr.mxu0 0.0
      %1611 = vmatpush1.msra.mxu0 0.0
      %1612 = vmatprep.subr.mxu0 0.0
      %1613 = vmatpush1.msra.mxu0 0.0
      %1614 = vmatprep.subr.mxu0 0.0
      %1615 = vmatpush1.msra.mxu0 0.0
      %1616 = vmatprep.subr.mxu0 0.0
      %1617 = vmatpush1.msra.mxu0 0.0
      %1618 = vmatprep.subr.mxu0 0.0
      %1619 = vmatpush1.msra.mxu0 0.0
      %1620 = vmatprep.subr.mxu0 0.0
      %1621 = vmatpush1.msra.mxu0 0.0
      %1622 = vmatprep.subr.mxu0 0.0
      %1623 = vmatpush1.msra.mxu0 0.0
      %1624 = vmatprep.subr.mxu0 0.0
      %1625 = vmatpush1.msra.mxu0 0.0
      %1626 = vmatprep.subr.mxu0 0.0
      %1627 = vmatpush1.msra.mxu0 0.0
      %1628 = vmatprep.subr.mxu0 0.0
      %1629 = vmatpush1.msra.mxu0 0.0
      %1630 = vmatprep.subr.mxu0 0.0
      %1631 = vmatpush1.msra.mxu0 %v1599
      %1632 = vmatprep.subr.mxu0 0.0
      %1633 = vmatpush2.msra.mxu0 0.0
      %1634 = vmatprep.subr.mxu0 0.0
      %1635 = vmatpush2.msra.mxu0 0.0
      %1636 = vmatprep.subr.mxu0 0.0
      %1637 = vmatpush2.msra.mxu0 0.0
      %1638 = vmatprep.subr.mxu0 0.0
      %1639 = vmatpush2.msra.mxu0 0.0
      %1640 = vmatprep.subr.mxu0 0.0
      %1641 = vmatpush2.msra.mxu0 0.0
      %1642 = vmatprep.subr.mxu0 0.0
      %1643 = vmatpush2.msra.mxu0 0.0
      %1644 = vmatprep.subr.mxu0 0.0
      %1645 = vmatpush2.msra.mxu0 0.0
      %1646 = vmatprep.subr.mxu0 0.0
      %1647 = vmatpush2.msra.mxu0 0.0
      %1648 = vmatprep.subr.mxu0 0.0
      %1649 = vmatpush2.msra.mxu0 0.0
      %1650 = vmatprep.subr.mxu0 0.0
      %1651 = vmatpush2.msra.mxu0 0.0
      %1652 = vmatprep.subr.mxu0 0.0
      %1653 = vmatpush2.msra.mxu0 0.0
      %1654 = vmatprep.subr.mxu0 0.0
      %1655 = vmatpush2.msra.mxu0 0.0
      %1656 = vmatprep.subr.mxu0 0.0
      %1657 = vmatpush2.msra.mxu0 0.0
      %1658 = vmatprep.subr.mxu0 0.0
      %1659 = vmatpush2.msra.mxu0 0.0
      %1660 = vmatprep.subr.mxu0 0.0
      %1661 = vmatpush2.msra.mxu0 0.0
      %1662 = vmatprep.subr.mxu0 0.0
      %1663 = vmatpush2.msra.mxu0 0.0
      %1664 = vmatprep.mubr.f32.mxu0 0.0
      %1665 = vmatmul.mubr.f32.gmra.mxu0 %v954
      %v1666 = vpop.f32.mrf.mxu0
      %v1667 = vadd.f32 0.0, %v1666
      %v1668 = vpop.f32.mrf.mxu0
      %1669 = vmatprep.mubr.f32.mxu0 0.0
      %1670 = vmatmul.mubr.f32.gmra.mxu0 %v957
      %v1671 = vpop.f32.mrf.mxu0
      %v1672 = vadd.f32 0.0, %v1671
      %v1673 = vpop.f32.mrf.mxu0
      %1674 = vmatprep.mubr.f32.mxu0 0.0
      %1675 = vmatmul.mubr.f32.gmra.mxu0 %v960
      %v1676 = vpop.f32.mrf.mxu0
      %v1677 = vadd.f32 0.0, %v1676
      %v1678 = vpop.f32.mrf.mxu0
      %1679 = vmatprep.mubr.f32.mxu0 0.0
      %1680 = vmatmul.mubr.f32.gmra.mxu0 %v963
      %v1681 = vpop.f32.mrf.mxu0
      %v1682 = vadd.f32 0.0, %v1681
      %v1683 = vpop.f32.mrf.mxu0
      %1684 = vdwg.mxu0
      %1685 = vmatprep.subr.mxu0 0.0
      %1686 = vmatpush1.msra.mxu0 0.0
      %1687 = vmatprep.subr.mxu0 0.0
      %1688 = vmatpush1.msra.mxu0 0.0
      %1689 = vmatprep.subr.mxu0 0.0
      %1690 = vmatpush1.msra.mxu0 0.0
      %1691 = vmatprep.subr.mxu0 0.0
      %1692 = vmatpush1.msra.mxu0 0.0
      %1693 = vmatprep.subr.mxu0 0.0
      %1694 = vmatpush1.msra.mxu0 0.0
      %1695 = vmatprep.subr.mxu0 0.0
      %1696 = vmatpush1.msra.mxu0 0.0
      %1697 = vmatprep.subr.mxu0 0.0
      %1698 = vmatpush1.msra.mxu0 0.0
      %1699 = vmatprep.subr.mxu0 0.0
      %1700 = vmatpush1.msra.mxu0 0.0
      %1701 = vmatprep.subr.mxu0 0.0
      %1702 = vmatpush1.msra.mxu0 0.0
      %1703 = vmatprep.subr.mxu0 0.0
      %1704 = vmatpush1.msra.mxu0 0.0
      %1705 = vmatprep.subr.mxu0 0.0
      %1706 = vmatpush1.msra.mxu0 0.0
      %1707 = vmatprep.subr.mxu0 0.0
      %1708 = vmatpush1.msra.mxu0 0.0
      %1709 = vmatprep.subr.mxu0 0.0
      %1710 = vmatpush1.msra.mxu0 %v1598
      %1711 = vmatprep.subr.mxu0 0.0
      %1712 = vmatpush1.msra.mxu0 %v1597
      %1713 = vmatprep.subr.mxu0 0.0
      %1714 = vmatpush1.msra.mxu0 %v1596
      %1715 = vmatprep.subr.mxu0 0.0
      %1716 = vmatpush1.msra.mxu0 %v1595
      %1717 = vmatprep.subr.mxu0 0.0
      %1718 = vmatpush2.msra.mxu0 0.0
      %1719 = vmatprep.subr.mxu0 0.0
      %1720 = vmatpush2.msra.mxu0 0.0
      %1721 = vmatprep.subr.mxu0 0.0
      %1722 = vmatpush2.msra.mxu0 0.0
      %1723 = vmatprep.subr.mxu0 0.0
      %1724 = vmatpush2.msra.mxu0 0.0
      %1725 = vmatprep.subr.mxu0 0.0
      %1726 = vmatpush2.msra.mxu0 0.0
      %1727 = vmatprep.subr.mxu0 0.0
      %1728 = vmatpush2.msra.mxu0 0.0
      %1729 = vmatprep.subr.mxu0 0.0
      %1730 = vmatpush2.msra.mxu0 0.0
      %1731 = vmatprep.subr.mxu0 0.0
      %1732 = vmatpush2.msra.mxu0 0.0
      %1733 = vmatprep.subr.mxu0 0.0
      %1734 = vmatpush2.msra.mxu0 0.0
      %1735 = vmatprep.subr.mxu0 0.0
      %1736 = vmatpush2.msra.mxu0 0.0
      %1737 = vmatprep.subr.mxu0 0.0
      %1738 = vmatpush2.msra.mxu0 0.0
      %1739 = vmatprep.subr.mxu0 0.0
      %1740 = vmatpush2.msra.mxu0 0.0
      %1741 = vmatprep.subr.mxu0 0.0
      %1742 = vmatpush2.msra.mxu0 0.0
      %1743 = vmatprep.subr.mxu0 0.0
      %1744 = vmatpush2.msra.mxu0 0.0
      %1745 = vmatprep.subr.mxu0 0.0
      %1746 = vmatpush2.msra.mxu0 0.0
      %1747 = vmatprep.subr.mxu0 0.0
      %1748 = vmatpush2.msra.mxu0 0.0
      %1749 = vmatprep.mubr.f32.mxu0 0.0
      %1750 = vmatmul.mubr.f32.gmra.mxu0 %v1051
      %v1751 = vpop.f32.mrf.mxu0
      %v1752 = vadd.f32 %v1667, %v1751
      %v1753 = vpop.f32.mrf.mxu0
      %1754 = vmatprep.mubr.f32.mxu0 0.0
      %1755 = vmatmul.mubr.f32.gmra.mxu0 %v1054
      %v1756 = vpop.f32.mrf.mxu0
      %v1757 = vadd.f32 %v1672, %v1756
      %v1758 = vpop.f32.mrf.mxu0
      %1759 = vmatprep.mubr.f32.mxu0 0.0
      %1760 = vmatmul.mubr.f32.gmra.mxu0 %v1057
      %v1761 = vpop.f32.mrf.mxu0
      %v1762 = vadd.f32 %v1677, %v1761
      %v1763 = vpop.f32.mrf.mxu0
      %1764 = vmatprep.mubr.f32.mxu0 0.0
      %1765 = vmatmul.mubr.f32.gmra.mxu0 %v1060
      %v1766 = vpop.f32.mrf.mxu0
      %v1767 = vadd.f32 %v1682, %v1766
      %v1768 = vpop.f32.mrf.mxu0
      %1769 = vdwg.mxu0
      %v1770 = vadd.f32 %v1752, %v563
      %v1771 = vadd.f32 %v1757, %v568
      %v1772 = vadd.f32 %v1762, %v573
      %v1773 = vadd.f32 %v1767, %v578
      %v1774 = vand.u32 2147483647, %v1770
      %v1775 = vand.u32 2147483647, %v1771
      %v1776 = vand.u32 2147483647, %v1772
      %v1777 = vand.u32 2147483647, %v1773
      %v1778 = vsub.f32 0.0, %v1774
      %v1779 = vsub.f32 0.0, %v1775
      %v1780 = vsub.f32 0.0, %v1776
      %v1781 = vsub.f32 0.0, %v1777
      %v1782 = vmul.f32 %v1778, 1.442695
      %v1783 = vpow.pop %v1782
      %v1784 = vmul.f32 %v1779, 1.442695
      %v1785 = vpow.pop %v1784
      %v1786 = vmul.f32 %v1780, 1.442695
      %v1787 = vpow.pop %v1786
      %v1788 = vmul.f32 %v1781, 1.442695
      %v1789 = vpow.pop %v1788
      %v1790 = vadd.f32 %v1783, 1.0
      %v1791 = vadd.f32 %v1785, 1.0
      %v1792 = vadd.f32 %v1787, 1.0
      %v1793 = vadd.f32 %v1789, 1.0
      %v1794 = vrcp.pop %v1790
      %v1795 = vrcp.pop %v1791
      %v1796 = vrcp.pop %v1792
      %v1797 = vrcp.pop %v1793
      %vm1798 = vcmp.ge.f32.partialorder %v1770, 0.0
      %vm1799 = vcmp.ge.f32.partialorder %v1771, 0.0
      %vm1800 = vcmp.ge.f32.partialorder %v1772, 0.0
      %vm1801 = vcmp.ge.f32.partialorder %v1773, 0.0
      %v1802 = vmul.f32 %v1783, %v1794
      %v1803 = vmul.f32 %v1785, %v1795
      %v1804 = vmul.f32 %v1787, %v1796
      %v1805 = vmul.f32 %v1789, %v1797
      %v1806 = vsel %vm1798, %v1794, %v1802
      %v1807 = vsel %vm1799, %v1795, %v1803
      %v1808 = vsel %vm1800, %v1796, %v1804
      %v1809 = vsel %vm1801, %v1797, %v1805
      %v1810 = vadd.f32 %v1456, %v758
      %v1811 = vmul.f32 %v783, %v1806
      %v1812 = vmul.f32 %v784, %v1807
      %v1813 = vmul.f32 %v785, %v1808
      %v1814 = vmul.f32 %v786, %v1809
      %1815 = vmatprep.subr.mxu0 0.0
      %1816 = vmatpush1.msra.mxu0 0.0
      %1817 = vmatprep.subr.mxu0 0.0
      %1818 = vmatpush1.msra.mxu0 0.0
      %1819 = vmatprep.subr.mxu0 0.0
      %1820 = vmatpush1.msra.mxu0 0.0
      %1821 = vmatprep.subr.mxu0 0.0
      %1822 = vmatpush1.msra.mxu0 0.0
      %1823 = vmatprep.subr.mxu0 0.0
      %1824 = vmatpush1.msra.mxu0 0.0
      %1825 = vmatprep.subr.mxu0 0.0
      %1826 = vmatpush1.msra.mxu0 0.0
      %1827 = vmatprep.subr.mxu0 0.0
      %1828 = vmatpush1.msra.mxu0 0.0
      %1829 = vmatprep.subr.mxu0 0.0
      %1830 = vmatpush1.msra.mxu0 0.0
      %1831 = vmatprep.subr.mxu0 0.0
      %1832 = vmatpush1.msra.mxu0 0.0
      %1833 = vmatprep.subr.mxu0 0.0
      %1834 = vmatpush1.msra.mxu0 0.0
      %1835 = vmatprep.subr.mxu0 0.0
      %1836 = vmatpush1.msra.mxu0 0.0
      %1837 = vmatprep.subr.mxu0 0.0
      %1838 = vmatpush1.msra.mxu0 0.0
      %1839 = vmatprep.subr.mxu0 0.0
      %1840 = vmatpush1.msra.mxu0 %v1814
      %1841 = vmatprep.subr.mxu0 0.0
      %1842 = vmatpush1.msra.mxu0 %v1813
      %1843 = vmatprep.subr.mxu0 0.0
      %1844 = vmatpush1.msra.mxu0 %v1812
      %1845 = vmatprep.subr.mxu0 0.0
      %1846 = vmatpush1.msra.mxu0 %v1811
      %1847 = vmatprep.subr.mxu0 0.0
      %1848 = vmatpush2.msra.mxu0 0.0
      %1849 = vmatprep.subr.mxu0 0.0
      %1850 = vmatpush2.msra.mxu0 0.0
      %1851 = vmatprep.subr.mxu0 0.0
      %1852 = vmatpush2.msra.mxu0 0.0
      %1853 = vmatprep.subr.mxu0 0.0
      %1854 = vmatpush2.msra.mxu0 0.0
      %1855 = vmatprep.subr.mxu0 0.0
      %1856 = vmatpush2.msra.mxu0 0.0
      %1857 = vmatprep.subr.mxu0 0.0
      %1858 = vmatpush2.msra.mxu0 0.0
      %1859 = vmatprep.subr.mxu0 0.0
      %1860 = vmatpush2.msra.mxu0 0.0
      %1861 = vmatprep.subr.mxu0 0.0
      %1862 = vmatpush2.msra.mxu0 0.0
      %1863 = vmatprep.subr.mxu0 0.0
      %1864 = vmatpush2.msra.mxu0 0.0
      %1865 = vmatprep.subr.mxu0 0.0
      %1866 = vmatpush2.msra.mxu0 0.0
      %1867 = vmatprep.subr.mxu0 0.0
      %1868 = vmatpush2.msra.mxu0 0.0
      %1869 = vmatprep.subr.mxu0 0.0
      %1870 = vmatpush2.msra.mxu0 0.0
      %1871 = vmatprep.subr.mxu0 0.0
      %1872 = vmatpush2.msra.mxu0 0.0
      %1873 = vmatprep.subr.mxu0 0.0
      %1874 = vmatpush2.msra.mxu0 0.0
      %1875 = vmatprep.subr.mxu0 0.0
      %1876 = vmatpush2.msra.mxu0 0.0
      %1877 = vmatprep.subr.mxu0 0.0
      %1878 = vmatpush2.msra.mxu0 0.0
      %1879 = vmatprep.mubr.f32.mxu0 0.0
      %1880 = vmatmul.mubr.f32.gmra.mxu0 %v1193
      %v1881 = vpop.f32.mrf.mxu0
      %v1882 = vadd.f32 0.0, %v1881
      %v1883 = vpop.f32.mrf.mxu0
      %1884 = vmatprep.mubr.f32.mxu0 0.0
      %1885 = vmatmul.mubr.f32.gmra.mxu0 %v1196
      %v1886 = vpop.f32.mrf.mxu0
      %v1887 = vadd.f32 0.0, %v1886
      %v1888 = vpop.f32.mrf.mxu0
      %1889 = vmatprep.mubr.f32.mxu0 0.0
      %1890 = vmatmul.mubr.f32.gmra.mxu0 %v1199
      %v1891 = vpop.f32.mrf.mxu0
      %v1892 = vadd.f32 0.0, %v1891
      %v1893 = vpop.f32.mrf.mxu0
      %1894 = vmatprep.mubr.f32.mxu0 0.0
      %1895 = vmatmul.mubr.f32.gmra.mxu0 %v1202
      %v1896 = vpop.f32.mrf.mxu0
      %v1897 = vadd.f32 0.0, %v1896
      %v1898 = vpop.f32.mrf.mxu0
      %1899 = vdwg.mxu0
      %v1900 = vmul.f32 %v1882, %v649
      %v1901 = vmul.f32 %v1887, %v650
      %v1902 = vmul.f32 %v1892, %v651
      %v1903 = vmul.f32 %v1897, %v652
      %1904 = vmatprep.subr.mxu0 0.0
      %1905 = vmatpush1.msra.mxu0 0.0
      %1906 = vmatprep.subr.mxu0 0.0
      %1907 = vmatpush1.msra.mxu0 0.0
      %1908 = vmatprep.subr.mxu0 0.0
      %1909 = vmatpush1.msra.mxu0 0.0
      %1910 = vmatprep.subr.mxu0 0.0
      %1911 = vmatpush1.msra.mxu0 0.0
      %1912 = vmatprep.subr.mxu0 0.0
      %1913 = vmatpush1.msra.mxu0 0.0
      %1914 = vmatprep.subr.mxu0 0.0
      %1915 = vmatpush1.msra.mxu0 0.0
      %1916 = vmatprep.subr.mxu0 0.0
      %1917 = vmatpush1.msra.mxu0 0.0
      %1918 = vmatprep.subr.mxu0 0.0
      %1919 = vmatpush1.msra.mxu0 0.0
      %1920 = vmatprep.subr.mxu0 0.0
      %1921 = vmatpush1.msra.mxu0 0.0
      %1922 = vmatprep.subr.mxu0 0.0
      %1923 = vmatpush1.msra.mxu0 0.0
      %1924 = vmatprep.subr.mxu0 0.0
      %1925 = vmatpush1.msra.mxu0 0.0
      %1926 = vmatprep.subr.mxu0 0.0
      %1927 = vmatpush1.msra.mxu0 0.0
      %1928 = vmatprep.subr.mxu0 0.0
      %1929 = vmatpush1.msra.mxu0 %v1814
      %1930 = vmatprep.subr.mxu0 0.0
      %1931 = vmatpush1.msra.mxu0 %v1813
      %1932 = vmatprep.subr.mxu0 0.0
      %1933 = vmatpush1.msra.mxu0 %v1812
      %1934 = vmatprep.subr.mxu0 0.0
      %1935 = vmatpush1.msra.mxu0 %v1811
      %1936 = vmatprep.subr.mxu0 0.0
      %1937 = vmatpush2.msra.mxu0 0.0
      %1938 = vmatprep.subr.mxu0 0.0
      %1939 = vmatpush2.msra.mxu0 0.0
      %1940 = vmatprep.subr.mxu0 0.0
      %1941 = vmatpush2.msra.mxu0 0.0
      %1942 = vmatprep.subr.mxu0 0.0
      %1943 = vmatpush2.msra.mxu0 0.0
      %1944 = vmatprep.subr.mxu0 0.0
      %1945 = vmatpush2.msra.mxu0 0.0
      %1946 = vmatprep.subr.mxu0 0.0
      %1947 = vmatpush2.msra.mxu0 0.0
      %1948 = vmatprep.subr.mxu0 0.0
      %1949 = vmatpush2.msra.mxu0 0.0
      %1950 = vmatprep.subr.mxu0 0.0
      %1951 = vmatpush2.msra.mxu0 0.0
      %1952 = vmatprep.subr.mxu0 0.0
      %1953 = vmatpush2.msra.mxu0 0.0
      %1954 = vmatprep.subr.mxu0 0.0
      %1955 = vmatpush2.msra.mxu0 0.0
      %1956 = vmatprep.subr.mxu0 0.0
      %1957 = vmatpush2.msra.mxu0 0.0
      %1958 = vmatprep.subr.mxu0 0.0
      %1959 = vmatpush2.msra.mxu0 0.0
      %1960 = vmatprep.subr.mxu0 0.0
      %1961 = vmatpush2.msra.mxu0 0.0
      %1962 = vmatprep.subr.mxu0 0.0
      %1963 = vmatpush2.msra.mxu0 0.0
      %1964 = vmatprep.subr.mxu0 0.0
      %1965 = vmatpush2.msra.mxu0 0.0
      %1966 = vmatprep.subr.mxu0 0.0
      %1967 = vmatpush2.msra.mxu0 0.0
      %1968 = vmatprep.mubr.f32.mxu0 0.0
      %1969 = vmatmul.mubr.f32.gmra.mxu0 %v1294
      %v1970 = vpop.f32.mrf.mxu0
      %v1971 = vadd.f32 0.0, %v1970
      %v1972 = vpop.f32.mrf.mxu0
      %1973 = vdwg.mxu0
      %v1974 = vmul.f32 %v1971, %v558
      %v1975 = vadd.f32 %v1810, %v1974
      %v1976 = vmul.f32 %v1900, %v1591
      %v1977 = vmul.f32 %v1901, %v1592
      %v1978 = vmul.f32 %v1902, %v1593
      %v1979 = vmul.f32 %v1903, %v1594
      %1980 = vmatprep.subr.mxu0 0.0
      %1981 = vmatpush1.msra.mxu0 0.0
      %1982 = vmatprep.subr.mxu0 0.0
      %1983 = vmatpush1.msra.mxu0 0.0
      %1984 = vmatprep.subr.mxu0 0.0
      %1985 = vmatpush1.msra.mxu0 0.0
      %1986 = vmatprep.subr.mxu0 0.0
      %1987 = vmatpush1.msra.mxu0 0.0
      %1988 = vmatprep.subr.mxu0 0.0
      %1989 = vmatpush1.msra.mxu0 0.0
      %1990 = vmatprep.subr.mxu0 0.0
      %1991 = vmatpush1.msra.mxu0 0.0
      %1992 = vmatprep.subr.mxu0 0.0
      %1993 = vmatpush1.msra.mxu0 0.0
      %1994 = vmatprep.subr.mxu0 0.0
      %1995 = vmatpush1.msra.mxu0 0.0
      %1996 = vmatprep.subr.mxu0 0.0
      %1997 = vmatpush1.msra.mxu0 0.0
      %1998 = vmatprep.subr.mxu0 0.0
      %1999 = vmatpush1.msra.mxu0 0.0
      %2000 = vmatprep.subr.mxu0 0.0
      %2001 = vmatpush1.msra.mxu0 0.0
      %2002 = vmatprep.subr.mxu0 0.0
      %2003 = vmatpush1.msra.mxu0 0.0
      %2004 = vmatprep.subr.mxu0 0.0
      %2005 = vmatpush1.msra.mxu0 %v1979
      %2006 = vmatprep.subr.mxu0 0.0
      %2007 = vmatpush1.msra.mxu0 %v1978
      %2008 = vmatprep.subr.mxu0 0.0
      %2009 = vmatpush1.msra.mxu0 %v1977
      %2010 = vmatprep.subr.mxu0 0.0
      %2011 = vmatpush1.msra.mxu0 %v1976
      %2012 = vmatprep.subr.mxu0 0.0
      %2013 = vmatpush2.msra.mxu0 0.0
      %2014 = vmatprep.subr.mxu0 0.0
      %2015 = vmatpush2.msra.mxu0 0.0
      %2016 = vmatprep.subr.mxu0 0.0
      %2017 = vmatpush2.msra.mxu0 0.0
      %2018 = vmatprep.subr.mxu0 0.0
      %2019 = vmatpush2.msra.mxu0 0.0
      %2020 = vmatprep.subr.mxu0 0.0
      %2021 = vmatpush2.msra.mxu0 0.0
      %2022 = vmatprep.subr.mxu0 0.0
      %2023 = vmatpush2.msra.mxu0 0.0
      %2024 = vmatprep.subr.mxu0 0.0
      %2025 = vmatpush2.msra.mxu0 0.0
      %2026 = vmatprep.subr.mxu0 0.0
      %2027 = vmatpush2.msra.mxu0 0.0
      %2028 = vmatprep.subr.mxu0 0.0
      %2029 = vmatpush2.msra.mxu0 0.0
      %2030 = vmatprep.subr.mxu0 0.0
      %2031 = vmatpush2.msra.mxu0 0.0
      %2032 = vmatprep.subr.mxu0 0.0
      %2033 = vmatpush2.msra.mxu0 0.0
      %2034 = vmatprep.subr.mxu0 0.0
      %2035 = vmatpush2.msra.mxu0 0.0
      %2036 = vmatprep.subr.mxu0 0.0
      %2037 = vmatpush2.msra.mxu0 0.0
      %2038 = vmatprep.subr.mxu0 0.0
      %2039 = vmatpush2.msra.mxu0 0.0
      %2040 = vmatprep.subr.mxu0 0.0
      %2041 = vmatpush2.msra.mxu0 0.0
      %2042 = vmatprep.subr.mxu0 0.0
      %2043 = vmatpush2.msra.mxu0 0.0
      %2044 = vmatprep.mubr.f32.mxu0 0.0
      %2045 = vmatmul.mubr.f32.gmra.mxu0 %v1373
      %v2046 = vpop.f32.mrf.mxu0
      %v2047 = vadd.f32 0.0, %v2046
      %v2048 = vpop.f32.mrf.mxu0
      %2049 = vdwg.mxu0
      %v2050 = vmul.f32 %v2047, %v287
      %v2051 = vadd.f32 %v1975, %v2050
      %v2052 = vsub.f32 %v55, %v2051
      %s2053 = sadd.s32 %s797, 2
      %s2054 = scvt.s32.f32 %s2053
      %v2055 = vstv %s2054
      %v2056 = vrcp.pop %v2055
      %s2057 = vtos %v2056
      %s2058 = smul.f32 2.0, %s2057
      %v2059 = vstv %s2058
      %v2060 = vmul.f32 %v2059, %v2052
      %v2061 = vadd.f32 %v1456, %v2060
      %v2062 = vmul.f32 %v2061, %v287
      %2063 = vmatprep.subr.mxu0 0.0
      %2064 = vmatpush1.msra.mxu0 0.0
      %2065 = vmatprep.subr.mxu0 0.0
      %2066 = vmatpush1.msra.mxu0 0.0
      %2067 = vmatprep.subr.mxu0 0.0
      %2068 = vmatpush1.msra.mxu0 0.0
      %2069 = vmatprep.subr.mxu0 0.0
      %2070 = vmatpush1.msra.mxu0 0.0
      %2071 = vmatprep.subr.mxu0 0.0
      %2072 = vmatpush1.msra.mxu0 0.0
      %2073 = vmatprep.subr.mxu0 0.0
      %2074 = vmatpush1.msra.mxu0 0.0
      %2075 = vmatprep.subr.mxu0 0.0
      %2076 = vmatpush1.msra.mxu0 0.0
      %2077 = vmatprep.subr.mxu0 0.0
      %2078 = vmatpush1.msra.mxu0 0.0
      %2079 = vmatprep.subr.mxu0 0.0
      %2080 = vmatpush1.msra.mxu0 0.0
      %2081 = vmatprep.subr.mxu0 0.0
      %2082 = vmatpush1.msra.mxu0 0.0
      %2083 = vmatprep.subr.mxu0 0.0
      %2084 = vmatpush1.msra.mxu0 0.0
      %2085 = vmatprep.subr.mxu0 0.0
      %2086 = vmatpush1.msra.mxu0 0.0
      %2087 = vmatprep.subr.mxu0 0.0
      %2088 = vmatpush1.msra.mxu0 0.0
      %2089 = vmatprep.subr.mxu0 0.0
      %2090 = vmatpush1.msra.mxu0 0.0
      %2091 = vmatprep.subr.mxu0 0.0
      %2092 = vmatpush1.msra.mxu0 0.0
      %2093 = vmatprep.subr.mxu0 0.0
      %2094 = vmatpush1.msra.mxu0 %v2062
      %2095 = vmatprep.subr.mxu0 0.0
      %2096 = vmatpush2.msra.mxu0 0.0
      %2097 = vmatprep.subr.mxu0 0.0
      %2098 = vmatpush2.msra.mxu0 0.0
      %2099 = vmatprep.subr.mxu0 0.0
      %2100 = vmatpush2.msra.mxu0 0.0
      %2101 = vmatprep.subr.mxu0 0.0
      %2102 = vmatpush2.msra.mxu0 0.0
      %2103 = vmatprep.subr.mxu0 0.0
      %2104 = vmatpush2.msra.mxu0 0.0
      %2105 = vmatprep.subr.mxu0 0.0
      %2106 = vmatpush2.msra.mxu0 0.0
      %2107 = vmatprep.subr.mxu0 0.0
      %2108 = vmatpush2.msra.mxu0 0.0
      %2109 = vmatprep.subr.mxu0 0.0
      %2110 = vmatpush2.msra.mxu0 0.0
      %2111 = vmatprep.subr.mxu0 0.0
      %2112 = vmatpush2.msra.mxu0 0.0
      %2113 = vmatprep.subr.mxu0 0.0
      %2114 = vmatpush2.msra.mxu0 0.0
      %2115 = vmatprep.subr.mxu0 0.0
      %2116 = vmatpush2.msra.mxu0 0.0
      %2117 = vmatprep.subr.mxu0 0.0
      %2118 = vmatpush2.msra.mxu0 0.0
      %2119 = vmatprep.subr.mxu0 0.0
      %2120 = vmatpush2.msra.mxu0 0.0
      %2121 = vmatprep.subr.mxu0 0.0
      %2122 = vmatpush2.msra.mxu0 0.0
      %2123 = vmatprep.subr.mxu0 0.0
      %2124 = vmatpush2.msra.mxu0 0.0
      %2125 = vmatprep.subr.mxu0 0.0
      %2126 = vmatpush2.msra.mxu0 0.0
      %2127 = vmatprep.mubr.f32.mxu0 0.0
      %2128 = vmatmul.mubr.f32.gmra.mxu0 %v800
      %v2129 = vpop.f32.mrf.mxu0
      %v2130 = vadd.f32 %v292, %v2129
      %v2131 = vpop.f32.mrf.mxu0
      %2132 = vmatprep.mubr.f32.mxu0 0.0
      %2133 = vmatmul.mubr.f32.gmra.mxu0 %v803
      %v2134 = vpop.f32.mrf.mxu0
      %v2135 = vadd.f32 %v297, %v2134
      %v2136 = vpop.f32.mrf.mxu0
      %2137 = vmatprep.mubr.f32.mxu0 0.0
      %2138 = vmatmul.mubr.f32.gmra.mxu0 %v806
      %v2139 = vpop.f32.mrf.mxu0
      %v2140 = vadd.f32 %v302, %v2139
      %v2141 = vpop.f32.mrf.mxu0
      %2142 = vmatprep.mubr.f32.mxu0 0.0
      %2143 = vmatmul.mubr.f32.gmra.mxu0 %v809
      %v2144 = vpop.f32.mrf.mxu0
      %v2145 = vadd.f32 %v307, %v2144
      %v2146 = vpop.f32.mrf.mxu0
      %2147 = vdwg.mxu0
      %v2148 = vand.u32 2147483647, %v2130
      %v2149 = vand.u32 2147483647, %v2135
      %v2150 = vand.u32 2147483647, %v2140
      %v2151 = vand.u32 2147483647, %v2145
      %v2152 = vsub.f32 0.0, %v2148
      %v2153 = vsub.f32 0.0, %v2149
      %v2154 = vsub.f32 0.0, %v2150
      %v2155 = vsub.f32 0.0, %v2151
      %v2156 = vmul.f32 %v2152, 1.442695
      %v2157 = vpow.pop %v2156
      %v2158 = vmul.f32 %v2153, 1.442695
      %v2159 = vpow.pop %v2158
      %v2160 = vmul.f32 %v2154, 1.442695
      %v2161 = vpow.pop %v2160
      %v2162 = vmul.f32 %v2155, 1.442695
      %v2163 = vpow.pop %v2162
      %v2164 = vadd.f32 %v2157, 1.0
      %v2165 = vadd.f32 %v2159, 1.0
      %v2166 = vadd.f32 %v2161, 1.0
      %v2167 = vadd.f32 %v2163, 1.0
      %v2168 = vrcp.pop %v2164
      %v2169 = vrcp.pop %v2165
      %v2170 = vrcp.pop %v2166
      %v2171 = vrcp.pop %v2167
      %v2172 = vmax.f32 %v2130, 0.0
      %v2173 = vmax.f32 %v2135, 0.0
      %v2174 = vmax.f32 %v2140, 0.0
      %v2175 = vmax.f32 %v2145, 0.0
      %v2176 = vlog2.pop %v2164
      %v2177 = vmul.f32 %v2176, 0.6931472
      %v2178 = vlog2.pop %v2165
      %v2179 = vmul.f32 %v2178, 0.6931472
      %v2180 = vlog2.pop %v2166
      %v2181 = vmul.f32 %v2180, 0.6931472
      %v2182 = vlog2.pop %v2167
      %v2183 = vmul.f32 %v2182, 0.6931472
      %v2184 = vadd.f32 %v2172, %v2177
      %v2185 = vadd.f32 %v2173, %v2179
      %v2186 = vadd.f32 %v2174, %v2181
      %v2187 = vadd.f32 %v2175, %v2183
      %vm2188 = vcmp.ge.f32.partialorder %v2130, 0.0
      %vm2189 = vcmp.ge.f32.partialorder %v2135, 0.0
      %vm2190 = vcmp.ge.f32.partialorder %v2140, 0.0
      %vm2191 = vcmp.ge.f32.partialorder %v2145, 0.0
      %v2192 = vmul.f32 %v2157, %v2168
      %v2193 = vmul.f32 %v2159, %v2169
      %v2194 = vmul.f32 %v2161, %v2170
      %v2195 = vmul.f32 %v2163, %v2171
      %v2196 = vsel %vm2188, %v2168, %v2192
      %v2197 = vsel %vm2189, %v2169, %v2193
      %v2198 = vsel %vm2190, %v2170, %v2194
      %v2199 = vsel %vm2191, %v2171, %v2195
      %v2200 = vmul.f32 %v2184, %v649
      %v2201 = vmul.f32 %v2185, %v650
      %v2202 = vmul.f32 %v2186, %v651
      %v2203 = vmul.f32 %v2187, %v652
      %v2204 = vmul.f32 %v2061, %v558
      %2205 = vmatprep.subr.mxu0 0.0
      %2206 = vmatpush1.msra.mxu0 0.0
      %2207 = vmatprep.subr.mxu0 0.0
      %2208 = vmatpush1.msra.mxu0 0.0
      %2209 = vmatprep.subr.mxu0 0.0
      %2210 = vmatpush1.msra.mxu0 0.0
      %2211 = vmatprep.subr.mxu0 0.0
      %2212 = vmatpush1.msra.mxu0 0.0
      %2213 = vmatprep.subr.mxu0 0.0
      %2214 = vmatpush1.msra.mxu0 0.0
      %2215 = vmatprep.subr.mxu0 0.0
      %2216 = vmatpush1.msra.mxu0 0.0
      %2217 = vmatprep.subr.mxu0 0.0
      %2218 = vmatpush1.msra.mxu0 0.0
      %2219 = vmatprep.subr.mxu0 0.0
      %2220 = vmatpush1.msra.mxu0 0.0
      %2221 = vmatprep.subr.mxu0 0.0
      %2222 = vmatpush1.msra.mxu0 0.0
      %2223 = vmatprep.subr.mxu0 0.0
      %2224 = vmatpush1.msra.mxu0 0.0
      %2225 = vmatprep.subr.mxu0 0.0
      %2226 = vmatpush1.msra.mxu0 0.0
      %2227 = vmatprep.subr.mxu0 0.0
      %2228 = vmatpush1.msra.mxu0 0.0
      %2229 = vmatprep.subr.mxu0 0.0
      %2230 = vmatpush1.msra.mxu0 0.0
      %2231 = vmatprep.subr.mxu0 0.0
      %2232 = vmatpush1.msra.mxu0 0.0
      %2233 = vmatprep.subr.mxu0 0.0
      %2234 = vmatpush1.msra.mxu0 0.0
      %2235 = vmatprep.subr.mxu0 0.0
      %2236 = vmatpush1.msra.mxu0 %v2204
      %2237 = vmatprep.subr.mxu0 0.0
      %2238 = vmatpush2.msra.mxu0 0.0
      %2239 = vmatprep.subr.mxu0 0.0
      %2240 = vmatpush2.msra.mxu0 0.0
      %2241 = vmatprep.subr.mxu0 0.0
      %2242 = vmatpush2.msra.mxu0 0.0
      %2243 = vmatprep.subr.mxu0 0.0
      %2244 = vmatpush2.msra.mxu0 0.0
      %2245 = vmatprep.subr.mxu0 0.0
      %2246 = vmatpush2.msra.mxu0 0.0
      %2247 = vmatprep.subr.mxu0 0.0
      %2248 = vmatpush2.msra.mxu0 0.0
      %2249 = vmatprep.subr.mxu0 0.0
      %2250 = vmatpush2.msra.mxu0 0.0
      %2251 = vmatprep.subr.mxu0 0.0
      %2252 = vmatpush2.msra.mxu0 0.0
      %2253 = vmatprep.subr.mxu0 0.0
      %2254 = vmatpush2.msra.mxu0 0.0
      %2255 = vmatprep.subr.mxu0 0.0
      %2256 = vmatpush2.msra.mxu0 0.0
      %2257 = vmatprep.subr.mxu0 0.0
      %2258 = vmatpush2.msra.mxu0 0.0
      %2259 = vmatprep.subr.mxu0 0.0
      %2260 = vmatpush2.msra.mxu0 0.0
      %2261 = vmatprep.subr.mxu0 0.0
      %2262 = vmatpush2.msra.mxu0 0.0
      %2263 = vmatprep.subr.mxu0 0.0
      %2264 = vmatpush2.msra.mxu0 0.0
      %2265 = vmatprep.subr.mxu0 0.0
      %2266 = vmatpush2.msra.mxu0 0.0
      %2267 = vmatprep.subr.mxu0 0.0
      %2268 = vmatpush2.msra.mxu0 0.0
      %2269 = vmatprep.mubr.f32.mxu0 0.0
      %2270 = vmatmul.mubr.f32.gmra.mxu0 %v954
      %v2271 = vpop.f32.mrf.mxu0
      %v2272 = vadd.f32 0.0, %v2271
      %v2273 = vpop.f32.mrf.mxu0
      %2274 = vmatprep.mubr.f32.mxu0 0.0
      %2275 = vmatmul.mubr.f32.gmra.mxu0 %v957
      %v2276 = vpop.f32.mrf.mxu0
      %v2277 = vadd.f32 0.0, %v2276
      %v2278 = vpop.f32.mrf.mxu0
      %2279 = vmatprep.mubr.f32.mxu0 0.0
      %2280 = vmatmul.mubr.f32.gmra.mxu0 %v960
      %v2281 = vpop.f32.mrf.mxu0
      %v2282 = vadd.f32 0.0, %v2281
      %v2283 = vpop.f32.mrf.mxu0
      %2284 = vmatprep.mubr.f32.mxu0 0.0
      %2285 = vmatmul.mubr.f32.gmra.mxu0 %v963
      %v2286 = vpop.f32.mrf.mxu0
      %v2287 = vadd.f32 0.0, %v2286
      %v2288 = vpop.f32.mrf.mxu0
      %2289 = vdwg.mxu0
      %2290 = vmatprep.subr.mxu0 0.0
      %2291 = vmatpush1.msra.mxu0 0.0
      %2292 = vmatprep.subr.mxu0 0.0
      %2293 = vmatpush1.msra.mxu0 0.0
      %2294 = vmatprep.subr.mxu0 0.0
      %2295 = vmatpush1.msra.mxu0 0.0
      %2296 = vmatprep.subr.mxu0 0.0
      %2297 = vmatpush1.msra.mxu0 0.0
      %2298 = vmatprep.subr.mxu0 0.0
      %2299 = vmatpush1.msra.mxu0 0.0
      %2300 = vmatprep.subr.mxu0 0.0
      %2301 = vmatpush1.msra.mxu0 0.0
      %2302 = vmatprep.subr.mxu0 0.0
      %2303 = vmatpush1.msra.mxu0 0.0
      %2304 = vmatprep.subr.mxu0 0.0
      %2305 = vmatpush1.msra.mxu0 0.0
      %2306 = vmatprep.subr.mxu0 0.0
      %2307 = vmatpush1.msra.mxu0 0.0
      %2308 = vmatprep.subr.mxu0 0.0
      %2309 = vmatpush1.msra.mxu0 0.0
      %2310 = vmatprep.subr.mxu0 0.0
      %2311 = vmatpush1.msra.mxu0 0.0
      %2312 = vmatprep.subr.mxu0 0.0
      %2313 = vmatpush1.msra.mxu0 0.0
      %2314 = vmatprep.subr.mxu0 0.0
      %2315 = vmatpush1.msra.mxu0 %v2203
      %2316 = vmatprep.subr.mxu0 0.0
      %2317 = vmatpush1.msra.mxu0 %v2202
      %2318 = vmatprep.subr.mxu0 0.0
      %2319 = vmatpush1.msra.mxu0 %v2201
      %2320 = vmatprep.subr.mxu0 0.0
      %2321 = vmatpush1.msra.mxu0 %v2200
      %2322 = vmatprep.subr.mxu0 0.0
      %2323 = vmatpush2.msra.mxu0 0.0
      %2324 = vmatprep.subr.mxu0 0.0
      %2325 = vmatpush2.msra.mxu0 0.0
      %2326 = vmatprep.subr.mxu0 0.0
      %2327 = vmatpush2.msra.mxu0 0.0
      %2328 = vmatprep.subr.mxu0 0.0
      %2329 = vmatpush2.msra.mxu0 0.0
      %2330 = vmatprep.subr.mxu0 0.0
      %2331 = vmatpush2.msra.mxu0 0.0
      %2332 = vmatprep.subr.mxu0 0.0
      %2333 = vmatpush2.msra.mxu0 0.0
      %2334 = vmatprep.subr.mxu0 0.0
      %2335 = vmatpush2.msra.mxu0 0.0
      %2336 = vmatprep.subr.mxu0 0.0
      %2337 = vmatpush2.msra.mxu0 0.0
      %2338 = vmatprep.subr.mxu0 0.0
      %2339 = vmatpush2.msra.mxu0 0.0
      %2340 = vmatprep.subr.mxu0 0.0
      %2341 = vmatpush2.msra.mxu0 0.0
      %2342 = vmatprep.subr.mxu0 0.0
      %2343 = vmatpush2.msra.mxu0 0.0
      %2344 = vmatprep.subr.mxu0 0.0
      %2345 = vmatpush2.msra.mxu0 0.0
      %2346 = vmatprep.subr.mxu0 0.0
      %2347 = vmatpush2.msra.mxu0 0.0
      %2348 = vmatprep.subr.mxu0 0.0
      %2349 = vmatpush2.msra.mxu0 0.0
      %2350 = vmatprep.subr.mxu0 0.0
      %2351 = vmatpush2.msra.mxu0 0.0
      %2352 = vmatprep.subr.mxu0 0.0
      %2353 = vmatpush2.msra.mxu0 0.0
      %2354 = vmatprep.mubr.f32.mxu0 0.0
      %2355 = vmatmul.mubr.f32.gmra.mxu0 %v1051
      %v2356 = vpop.f32.mrf.mxu0
      %v2357 = vadd.f32 %v2272, %v2356
      %v2358 = vpop.f32.mrf.mxu0
      %2359 = vmatprep.mubr.f32.mxu0 0.0
      %2360 = vmatmul.mubr.f32.gmra.mxu0 %v1054
      %v2361 = vpop.f32.mrf.mxu0
      %v2362 = vadd.f32 %v2277, %v2361
      %v2363 = vpop.f32.mrf.mxu0
      %2364 = vmatprep.mubr.f32.mxu0 0.0
      %2365 = vmatmul.mubr.f32.gmra.mxu0 %v1057
      %v2366 = vpop.f32.mrf.mxu0
      %v2367 = vadd.f32 %v2282, %v2366
      %v2368 = vpop.f32.mrf.mxu0
      %2369 = vmatprep.mubr.f32.mxu0 0.0
      %2370 = vmatmul.mubr.f32.gmra.mxu0 %v1060
      %v2371 = vpop.f32.mrf.mxu0
      %v2372 = vadd.f32 %v2287, %v2371
      %v2373 = vpop.f32.mrf.mxu0
      %2374 = vdwg.mxu0
      %v2375 = vadd.f32 %v2357, %v563
      %v2376 = vadd.f32 %v2362, %v568
      %v2377 = vadd.f32 %v2367, %v573
      %v2378 = vadd.f32 %v2372, %v578
      %v2379 = vand.u32 2147483647, %v2375
      %v2380 = vand.u32 2147483647, %v2376
      %v2381 = vand.u32 2147483647, %v2377
      %v2382 = vand.u32 2147483647, %v2378
      %v2383 = vsub.f32 0.0, %v2379
      %v2384 = vsub.f32 0.0, %v2380
      %v2385 = vsub.f32 0.0, %v2381
      %v2386 = vsub.f32 0.0, %v2382
      %v2387 = vmul.f32 %v2383, 1.442695
      %v2388 = vpow.pop %v2387
      %v2389 = vmul.f32 %v2384, 1.442695
      %v2390 = vpow.pop %v2389
      %v2391 = vmul.f32 %v2385, 1.442695
      %v2392 = vpow.pop %v2391
      %v2393 = vmul.f32 %v2386, 1.442695
      %v2394 = vpow.pop %v2393
      %v2395 = vadd.f32 %v2388, 1.0
      %v2396 = vadd.f32 %v2390, 1.0
      %v2397 = vadd.f32 %v2392, 1.0
      %v2398 = vadd.f32 %v2394, 1.0
      %v2399 = vrcp.pop %v2395
      %v2400 = vrcp.pop %v2396
      %v2401 = vrcp.pop %v2397
      %v2402 = vrcp.pop %v2398
      %vm2403 = vcmp.ge.f32.partialorder %v2375, 0.0
      %vm2404 = vcmp.ge.f32.partialorder %v2376, 0.0
      %vm2405 = vcmp.ge.f32.partialorder %v2377, 0.0
      %vm2406 = vcmp.ge.f32.partialorder %v2378, 0.0
      %v2407 = vmul.f32 %v2388, %v2399
      %v2408 = vmul.f32 %v2390, %v2400
      %v2409 = vmul.f32 %v2392, %v2401
      %v2410 = vmul.f32 %v2394, %v2402
      %v2411 = vsel %vm2403, %v2399, %v2407
      %v2412 = vsel %vm2404, %v2400, %v2408
      %v2413 = vsel %vm2405, %v2401, %v2409
      %v2414 = vsel %vm2406, %v2402, %v2410
      %v2415 = vadd.f32 %v2061, %v758
      %v2416 = vmul.f32 %v783, %v2411
      %v2417 = vmul.f32 %v784, %v2412
      %v2418 = vmul.f32 %v785, %v2413
      %v2419 = vmul.f32 %v786, %v2414
      %2420 = vmatprep.subr.mxu0 0.0
      %2421 = vmatpush1.msra.mxu0 0.0
      %2422 = vmatprep.subr.mxu0 0.0
      %2423 = vmatpush1.msra.mxu0 0.0
      %2424 = vmatprep.subr.mxu0 0.0
      %2425 = vmatpush1.msra.mxu0 0.0
      %2426 = vmatprep.subr.mxu0 0.0
      %2427 = vmatpush1.msra.mxu0 0.0
      %2428 = vmatprep.subr.mxu0 0.0
      %2429 = vmatpush1.msra.mxu0 0.0
      %2430 = vmatprep.subr.mxu0 0.0
      %2431 = vmatpush1.msra.mxu0 0.0
      %2432 = vmatprep.subr.mxu0 0.0
      %2433 = vmatpush1.msra.mxu0 0.0
      %2434 = vmatprep.subr.mxu0 0.0
      %2435 = vmatpush1.msra.mxu0 0.0
      %2436 = vmatprep.subr.mxu0 0.0
      %2437 = vmatpush1.msra.mxu0 0.0
      %2438 = vmatprep.subr.mxu0 0.0
      %2439 = vmatpush1.msra.mxu0 0.0
      %2440 = vmatprep.subr.mxu0 0.0
      %2441 = vmatpush1.msra.mxu0 0.0
      %2442 = vmatprep.subr.mxu0 0.0
      %2443 = vmatpush1.msra.mxu0 0.0
      %2444 = vmatprep.subr.mxu0 0.0
      %2445 = vmatpush1.msra.mxu0 %v2419
      %2446 = vmatprep.subr.mxu0 0.0
      %2447 = vmatpush1.msra.mxu0 %v2418
      %2448 = vmatprep.subr.mxu0 0.0
      %2449 = vmatpush1.msra.mxu0 %v2417
      %2450 = vmatprep.subr.mxu0 0.0
      %2451 = vmatpush1.msra.mxu0 %v2416
      %2452 = vmatprep.subr.mxu0 0.0
      %2453 = vmatpush2.msra.mxu0 0.0
      %2454 = vmatprep.subr.mxu0 0.0
      %2455 = vmatpush2.msra.mxu0 0.0
      %2456 = vmatprep.subr.mxu0 0.0
      %2457 = vmatpush2.msra.mxu0 0.0
      %2458 = vmatprep.subr.mxu0 0.0
      %2459 = vmatpush2.msra.mxu0 0.0
      %2460 = vmatprep.subr.mxu0 0.0
      %2461 = vmatpush2.msra.mxu0 0.0
      %2462 = vmatprep.subr.mxu0 0.0
      %2463 = vmatpush2.msra.mxu0 0.0
      %2464 = vmatprep.subr.mxu0 0.0
      %2465 = vmatpush2.msra.mxu0 0.0
      %2466 = vmatprep.subr.mxu0 0.0
      %2467 = vmatpush2.msra.mxu0 0.0
      %2468 = vmatprep.subr.mxu0 0.0
      %2469 = vmatpush2.msra.mxu0 0.0
      %2470 = vmatprep.subr.mxu0 0.0
      %2471 = vmatpush2.msra.mxu0 0.0
      %2472 = vmatprep.subr.mxu0 0.0
      %2473 = vmatpush2.msra.mxu0 0.0
      %2474 = vmatprep.subr.mxu0 0.0
      %2475 = vmatpush2.msra.mxu0 0.0
      %2476 = vmatprep.subr.mxu0 0.0
      %2477 = vmatpush2.msra.mxu0 0.0
      %2478 = vmatprep.subr.mxu0 0.0
      %2479 = vmatpush2.msra.mxu0 0.0
      %2480 = vmatprep.subr.mxu0 0.0
      %2481 = vmatpush2.msra.mxu0 0.0
      %2482 = vmatprep.subr.mxu0 0.0
      %2483 = vmatpush2.msra.mxu0 0.0
      %2484 = vmatprep.mubr.f32.mxu0 0.0
      %2485 = vmatmul.mubr.f32.gmra.mxu0 %v1193
      %v2486 = vpop.f32.mrf.mxu0
      %v2487 = vadd.f32 0.0, %v2486
      %v2488 = vpop.f32.mrf.mxu0
      %2489 = vmatprep.mubr.f32.mxu0 0.0
      %2490 = vmatmul.mubr.f32.gmra.mxu0 %v1196
      %v2491 = vpop.f32.mrf.mxu0
      %v2492 = vadd.f32 0.0, %v2491
      %v2493 = vpop.f32.mrf.mxu0
      %2494 = vmatprep.mubr.f32.mxu0 0.0
      %2495 = vmatmul.mubr.f32.gmra.mxu0 %v1199
      %v2496 = vpop.f32.mrf.mxu0
      %v2497 = vadd.f32 0.0, %v2496
      %v2498 = vpop.f32.mrf.mxu0
      %2499 = vmatprep.mubr.f32.mxu0 0.0
      %2500 = vmatmul.mubr.f32.gmra.mxu0 %v1202
      %v2501 = vpop.f32.mrf.mxu0
      %v2502 = vadd.f32 0.0, %v2501
      %v2503 = vpop.f32.mrf.mxu0
      %2504 = vdwg.mxu0
      %v2505 = vmul.f32 %v2487, %v649
      %v2506 = vmul.f32 %v2492, %v650
      %v2507 = vmul.f32 %v2497, %v651
      %v2508 = vmul.f32 %v2502, %v652
      %2509 = vmatprep.subr.mxu0 0.0
      %2510 = vmatpush1.msra.mxu0 0.0
      %2511 = vmatprep.subr.mxu0 0.0
      %2512 = vmatpush1.msra.mxu0 0.0
      %2513 = vmatprep.subr.mxu0 0.0
      %2514 = vmatpush1.msra.mxu0 0.0
      %2515 = vmatprep.subr.mxu0 0.0
      %2516 = vmatpush1.msra.mxu0 0.0
      %2517 = vmatprep.subr.mxu0 0.0
      %2518 = vmatpush1.msra.mxu0 0.0
      %2519 = vmatprep.subr.mxu0 0.0
      %2520 = vmatpush1.msra.mxu0 0.0
      %2521 = vmatprep.subr.mxu0 0.0
      %2522 = vmatpush1.msra.mxu0 0.0
      %2523 = vmatprep.subr.mxu0 0.0
      %2524 = vmatpush1.msra.mxu0 0.0
      %2525 = vmatprep.subr.mxu0 0.0
      %2526 = vmatpush1.msra.mxu0 0.0
      %2527 = vmatprep.subr.mxu0 0.0
      %2528 = vmatpush1.msra.mxu0 0.0
      %2529 = vmatprep.subr.mxu0 0.0
      %2530 = vmatpush1.msra.mxu0 0.0
      %2531 = vmatprep.subr.mxu0 0.0
      %2532 = vmatpush1.msra.mxu0 0.0
      %2533 = vmatprep.subr.mxu0 0.0
      %2534 = vmatpush1.msra.mxu0 %v2419
      %2535 = vmatprep.subr.mxu0 0.0
      %2536 = vmatpush1.msra.mxu0 %v2418
      %2537 = vmatprep.subr.mxu0 0.0
      %2538 = vmatpush1.msra.mxu0 %v2417
      %2539 = vmatprep.subr.mxu0 0.0
      %2540 = vmatpush1.msra.mxu0 %v2416
      %2541 = vmatprep.subr.mxu0 0.0
      %2542 = vmatpush2.msra.mxu0 0.0
      %2543 = vmatprep.subr.mxu0 0.0
      %2544 = vmatpush2.msra.mxu0 0.0
      %2545 = vmatprep.subr.mxu0 0.0
      %2546 = vmatpush2.msra.mxu0 0.0
      %2547 = vmatprep.subr.mxu0 0.0
      %2548 = vmatpush2.msra.mxu0 0.0
      %2549 = vmatprep.subr.mxu0 0.0
      %2550 = vmatpush2.msra.mxu0 0.0
      %2551 = vmatprep.subr.mxu0 0.0
      %2552 = vmatpush2.msra.mxu0 0.0
      %2553 = vmatprep.subr.mxu0 0.0
      %2554 = vmatpush2.msra.mxu0 0.0
      %2555 = vmatprep.subr.mxu0 0.0
      %2556 = vmatpush2.msra.mxu0 0.0
      %2557 = vmatprep.subr.mxu0 0.0
      %2558 = vmatpush2.msra.mxu0 0.0
      %2559 = vmatprep.subr.mxu0 0.0
      %2560 = vmatpush2.msra.mxu0 0.0
      %2561 = vmatprep.subr.mxu0 0.0
      %2562 = vmatpush2.msra.mxu0 0.0
      %2563 = vmatprep.subr.mxu0 0.0
      %2564 = vmatpush2.msra.mxu0 0.0
      %2565 = vmatprep.subr.mxu0 0.0
      %2566 = vmatpush2.msra.mxu0 0.0
      %2567 = vmatprep.subr.mxu0 0.0
      %2568 = vmatpush2.msra.mxu0 0.0
      %2569 = vmatprep.subr.mxu0 0.0
      %2570 = vmatpush2.msra.mxu0 0.0
      %2571 = vmatprep.subr.mxu0 0.0
      %2572 = vmatpush2.msra.mxu0 0.0
      %2573 = vmatprep.mubr.f32.mxu0 0.0
      %2574 = vmatmul.mubr.f32.gmra.mxu0 %v1294
      %v2575 = vpop.f32.mrf.mxu0
      %v2576 = vadd.f32 0.0, %v2575
      %v2577 = vpop.f32.mrf.mxu0
      %2578 = vdwg.mxu0
      %v2579 = vmul.f32 %v2576, %v558
      %v2580 = vadd.f32 %v2415, %v2579
      %v2581 = vmul.f32 %v2505, %v2196
      %v2582 = vmul.f32 %v2506, %v2197
      %v2583 = vmul.f32 %v2507, %v2198
      %v2584 = vmul.f32 %v2508, %v2199
      %2585 = vmatprep.subr.mxu0 0.0
      %2586 = vmatpush1.msra.mxu0 0.0
      %2587 = vmatprep.subr.mxu0 0.0
      %2588 = vmatpush1.msra.mxu0 0.0
      %2589 = vmatprep.subr.mxu0 0.0
      %2590 = vmatpush1.msra.mxu0 0.0
      %2591 = vmatprep.subr.mxu0 0.0
      %2592 = vmatpush1.msra.mxu0 0.0
      %2593 = vmatprep.subr.mxu0 0.0
      %2594 = vmatpush1.msra.mxu0 0.0
      %2595 = vmatprep.subr.mxu0 0.0
      %2596 = vmatpush1.msra.mxu0 0.0
      %2597 = vmatprep.subr.mxu0 0.0
      %2598 = vmatpush1.msra.mxu0 0.0
      %2599 = vmatprep.subr.mxu0 0.0
      %2600 = vmatpush1.msra.mxu0 0.0
      %2601 = vmatprep.subr.mxu0 0.0
      %2602 = vmatpush1.msra.mxu0 0.0
      %2603 = vmatprep.subr.mxu0 0.0
      %2604 = vmatpush1.msra.mxu0 0.0
      %2605 = vmatprep.subr.mxu0 0.0
      %2606 = vmatpush1.msra.mxu0 0.0
      %2607 = vmatprep.subr.mxu0 0.0
      %2608 = vmatpush1.msra.mxu0 0.0
      %2609 = vmatprep.subr.mxu0 0.0
      %2610 = vmatpush1.msra.mxu0 %v2584
      %2611 = vmatprep.subr.mxu0 0.0
      %2612 = vmatpush1.msra.mxu0 %v2583
      %2613 = vmatprep.subr.mxu0 0.0
      %2614 = vmatpush1.msra.mxu0 %v2582
      %2615 = vmatprep.subr.mxu0 0.0
      %2616 = vmatpush1.msra.mxu0 %v2581
      %2617 = vmatprep.subr.mxu0 0.0
      %2618 = vmatpush2.msra.mxu0 0.0
      %2619 = vmatprep.subr.mxu0 0.0
      %2620 = vmatpush2.msra.mxu0 0.0
      %2621 = vmatprep.subr.mxu0 0.0
      %2622 = vmatpush2.msra.mxu0 0.0
      %2623 = vmatprep.subr.mxu0 0.0
      %2624 = vmatpush2.msra.mxu0 0.0
      %2625 = vmatprep.subr.mxu0 0.0
      %2626 = vmatpush2.msra.mxu0 0.0
      %2627 = vmatprep.subr.mxu0 0.0
      %2628 = vmatpush2.msra.mxu0 0.0
      %2629 = vmatprep.subr.mxu0 0.0
      %2630 = vmatpush2.msra.mxu0 0.0
      %2631 = vmatprep.subr.mxu0 0.0
      %2632 = vmatpush2.msra.mxu0 0.0
      %2633 = vmatprep.subr.mxu0 0.0
      %2634 = vmatpush2.msra.mxu0 0.0
      %2635 = vmatprep.subr.mxu0 0.0
      %2636 = vmatpush2.msra.mxu0 0.0
      %2637 = vmatprep.subr.mxu0 0.0
      %2638 = vmatpush2.msra.mxu0 0.0
      %2639 = vmatprep.subr.mxu0 0.0
      %2640 = vmatpush2.msra.mxu0 0.0
      %2641 = vmatprep.subr.mxu0 0.0
      %2642 = vmatpush2.msra.mxu0 0.0
      %2643 = vmatprep.subr.mxu0 0.0
      %2644 = vmatpush2.msra.mxu0 0.0
      %2645 = vmatprep.subr.mxu0 0.0
      %2646 = vmatpush2.msra.mxu0 0.0
      %2647 = vmatprep.subr.mxu0 0.0
      %2648 = vmatpush2.msra.mxu0 0.0
      %2649 = vmatprep.mubr.f32.mxu0 0.0
      %2650 = vmatmul.mubr.f32.gmra.mxu0 %v1373
      %v2651 = vpop.f32.mrf.mxu0
      %v2652 = vadd.f32 0.0, %v2651
      %v2653 = vpop.f32.mrf.mxu0
      %2654 = vdwg.mxu0
      %v2655 = vmul.f32 %v2652, %v287
      %v2656 = vadd.f32 %v2580, %v2655
      %v2657 = vsub.f32 %v55, %v2656
      %s2658 = sadd.s32 %s797, 3
      %s2659 = scvt.s32.f32 %s2658
      %v2660 = vstv %s2659
      %v2661 = vrcp.pop %v2660
      %s2662 = vtos %v2661
      %s2663 = smul.f32 2.0, %s2662
      %v2664 = vstv %s2663
      %v2665 = vmul.f32 %v2664, %v2657
      %v2666 = vadd.f32 %v2061, %v2665
      %v2667 = vmul.f32 %v2666, %v287
      %2668 = vmatprep.subr.mxu0 0.0
      %2669 = vmatpush1.msra.mxu0 0.0
      %2670 = vmatprep.subr.mxu0 0.0
      %2671 = vmatpush1.msra.mxu0 0.0
      %2672 = vmatprep.subr.mxu0 0.0
      %2673 = vmatpush1.msra.mxu0 0.0
      %2674 = vmatprep.subr.mxu0 0.0
      %2675 = vmatpush1.msra.mxu0 0.0
      %2676 = vmatprep.subr.mxu0 0.0
      %2677 = vmatpush1.msra.mxu0 0.0
      %2678 = vmatprep.subr.mxu0 0.0
      %2679 = vmatpush1.msra.mxu0 0.0
      %2680 = vmatprep.subr.mxu0 0.0
      %2681 = vmatpush1.msra.mxu0 0.0
      %2682 = vmatprep.subr.mxu0 0.0
      %2683 = vmatpush1.msra.mxu0 0.0
      %2684 = vmatprep.subr.mxu0 0.0
      %2685 = vmatpush1.msra.mxu0 0.0
      %2686 = vmatprep.subr.mxu0 0.0
      %2687 = vmatpush1.msra.mxu0 0.0
      %2688 = vmatprep.subr.mxu0 0.0
      %2689 = vmatpush1.msra.mxu0 0.0
      %2690 = vmatprep.subr.mxu0 0.0
      %2691 = vmatpush1.msra.mxu0 0.0
      %2692 = vmatprep.subr.mxu0 0.0
      %2693 = vmatpush1.msra.mxu0 0.0
      %2694 = vmatprep.subr.mxu0 0.0
      %2695 = vmatpush1.msra.mxu0 0.0
      %2696 = vmatprep.subr.mxu0 0.0
      %2697 = vmatpush1.msra.mxu0 0.0
      %2698 = vmatprep.subr.mxu0 0.0
      %2699 = vmatpush1.msra.mxu0 %v2667
      %2700 = vmatprep.subr.mxu0 0.0
      %2701 = vmatpush2.msra.mxu0 0.0
      %2702 = vmatprep.subr.mxu0 0.0
      %2703 = vmatpush2.msra.mxu0 0.0
      %2704 = vmatprep.subr.mxu0 0.0
      %2705 = vmatpush2.msra.mxu0 0.0
      %2706 = vmatprep.subr.mxu0 0.0
      %2707 = vmatpush2.msra.mxu0 0.0
      %2708 = vmatprep.subr.mxu0 0.0
      %2709 = vmatpush2.msra.mxu0 0.0
      %2710 = vmatprep.subr.mxu0 0.0
      %2711 = vmatpush2.msra.mxu0 0.0
      %2712 = vmatprep.subr.mxu0 0.0
      %2713 = vmatpush2.msra.mxu0 0.0
      %2714 = vmatprep.subr.mxu0 0.0
      %2715 = vmatpush2.msra.mxu0 0.0
      %2716 = vmatprep.subr.mxu0 0.0
      %2717 = vmatpush2.msra.mxu0 0.0
      %2718 = vmatprep.subr.mxu0 0.0
      %2719 = vmatpush2.msra.mxu0 0.0
      %2720 = vmatprep.subr.mxu0 0.0
      %2721 = vmatpush2.msra.mxu0 0.0
      %2722 = vmatprep.subr.mxu0 0.0
      %2723 = vmatpush2.msra.mxu0 0.0
      %2724 = vmatprep.subr.mxu0 0.0
      %2725 = vmatpush2.msra.mxu0 0.0
      %2726 = vmatprep.subr.mxu0 0.0
      %2727 = vmatpush2.msra.mxu0 0.0
      %2728 = vmatprep.subr.mxu0 0.0
      %2729 = vmatpush2.msra.mxu0 0.0
      %2730 = vmatprep.subr.mxu0 0.0
      %2731 = vmatpush2.msra.mxu0 0.0
      %2732 = vmatprep.mubr.f32.mxu0 0.0
      %2733 = vmatmul.mubr.f32.gmra.mxu0 %v800
      %v2734 = vpop.f32.mrf.mxu0
      %v2735 = vadd.f32 %v292, %v2734
      %v2736 = vpop.f32.mrf.mxu0
      %2737 = vmatprep.mubr.f32.mxu0 0.0
      %2738 = vmatmul.mubr.f32.gmra.mxu0 %v803
      %v2739 = vpop.f32.mrf.mxu0
      %v2740 = vadd.f32 %v297, %v2739
      %v2741 = vpop.f32.mrf.mxu0
      %2742 = vmatprep.mubr.f32.mxu0 0.0
      %2743 = vmatmul.mubr.f32.gmra.mxu0 %v806
      %v2744 = vpop.f32.mrf.mxu0
      %v2745 = vadd.f32 %v302, %v2744
      %v2746 = vpop.f32.mrf.mxu0
      %2747 = vmatprep.mubr.f32.mxu0 0.0
      %2748 = vmatmul.mubr.f32.gmra.mxu0 %v809
      %v2749 = vpop.f32.mrf.mxu0
      %v2750 = vadd.f32 %v307, %v2749
      %v2751 = vpop.f32.mrf.mxu0
      %2752 = vdwg.mxu0
      %v2753 = vand.u32 2147483647, %v2735
      %v2754 = vand.u32 2147483647, %v2740
      %v2755 = vand.u32 2147483647, %v2745
      %v2756 = vand.u32 2147483647, %v2750
      %v2757 = vsub.f32 0.0, %v2753
      %v2758 = vsub.f32 0.0, %v2754
      %v2759 = vsub.f32 0.0, %v2755
      %v2760 = vsub.f32 0.0, %v2756
      %v2761 = vmul.f32 %v2757, 1.442695
      %v2762 = vpow.pop %v2761
      %v2763 = vmul.f32 %v2758, 1.442695
      %v2764 = vpow.pop %v2763
      %v2765 = vmul.f32 %v2759, 1.442695
      %v2766 = vpow.pop %v2765
      %v2767 = vmul.f32 %v2760, 1.442695
      %v2768 = vpow.pop %v2767
      %v2769 = vadd.f32 %v2762, 1.0
      %v2770 = vadd.f32 %v2764, 1.0
      %v2771 = vadd.f32 %v2766, 1.0
      %v2772 = vadd.f32 %v2768, 1.0
      %v2773 = vrcp.pop %v2769
      %v2774 = vrcp.pop %v2770
      %v2775 = vrcp.pop %v2771
      %v2776 = vrcp.pop %v2772
      %v2777 = vmax.f32 %v2735, 0.0
      %v2778 = vmax.f32 %v2740, 0.0
      %v2779 = vmax.f32 %v2745, 0.0
      %v2780 = vmax.f32 %v2750, 0.0
      %v2781 = vlog2.pop %v2769
      %v2782 = vmul.f32 %v2781, 0.6931472
      %v2783 = vlog2.pop %v2770
      %v2784 = vmul.f32 %v2783, 0.6931472
      %v2785 = vlog2.pop %v2771
      %v2786 = vmul.f32 %v2785, 0.6931472
      %v2787 = vlog2.pop %v2772
      %v2788 = vmul.f32 %v2787, 0.6931472
      %v2789 = vadd.f32 %v2777, %v2782
      %v2790 = vadd.f32 %v2778, %v2784
      %v2791 = vadd.f32 %v2779, %v2786
      %v2792 = vadd.f32 %v2780, %v2788
      %vm2793 = vcmp.ge.f32.partialorder %v2735, 0.0
      %vm2794 = vcmp.ge.f32.partialorder %v2740, 0.0
      %vm2795 = vcmp.ge.f32.partialorder %v2745, 0.0
      %vm2796 = vcmp.ge.f32.partialorder %v2750, 0.0
      %v2797 = vmul.f32 %v2762, %v2773
      %v2798 = vmul.f32 %v2764, %v2774
      %v2799 = vmul.f32 %v2766, %v2775
      %v2800 = vmul.f32 %v2768, %v2776
      %v2801 = vsel %vm2793, %v2773, %v2797
      %v2802 = vsel %vm2794, %v2774, %v2798
      %v2803 = vsel %vm2795, %v2775, %v2799
      %v2804 = vsel %vm2796, %v2776, %v2800
      %v2805 = vmul.f32 %v2789, %v649
      %v2806 = vmul.f32 %v2790, %v650
      %v2807 = vmul.f32 %v2791, %v651
      %v2808 = vmul.f32 %v2792, %v652
      %v2809 = vmul.f32 %v2666, %v558
      %2810 = vmatprep.subr.mxu0 0.0
      %2811 = vmatpush1.msra.mxu0 0.0
      %2812 = vmatprep.subr.mxu0 0.0
      %2813 = vmatpush1.msra.mxu0 0.0
      %2814 = vmatprep.subr.mxu0 0.0
      %2815 = vmatpush1.msra.mxu0 0.0
      %2816 = vmatprep.subr.mxu0 0.0
      %2817 = vmatpush1.msra.mxu0 0.0
      %2818 = vmatprep.subr.mxu0 0.0
      %2819 = vmatpush1.msra.mxu0 0.0
      %2820 = vmatprep.subr.mxu0 0.0
      %2821 = vmatpush1.msra.mxu0 0.0
      %2822 = vmatprep.subr.mxu0 0.0
      %2823 = vmatpush1.msra.mxu0 0.0
      %2824 = vmatprep.subr.mxu0 0.0
      %2825 = vmatpush1.msra.mxu0 0.0
      %2826 = vmatprep.subr.mxu0 0.0
      %2827 = vmatpush1.msra.mxu0 0.0
      %2828 = vmatprep.subr.mxu0 0.0
      %2829 = vmatpush1.msra.mxu0 0.0
      %2830 = vmatprep.subr.mxu0 0.0
      %2831 = vmatpush1.msra.mxu0 0.0
      %2832 = vmatprep.subr.mxu0 0.0
      %2833 = vmatpush1.msra.mxu0 0.0
      %2834 = vmatprep.subr.mxu0 0.0
      %2835 = vmatpush1.msra.mxu0 0.0
      %2836 = vmatprep.subr.mxu0 0.0
      %2837 = vmatpush1.msra.mxu0 0.0
      %2838 = vmatprep.subr.mxu0 0.0
      %2839 = vmatpush1.msra.mxu0 0.0
      %2840 = vmatprep.subr.mxu0 0.0
      %2841 = vmatpush1.msra.mxu0 %v2809
      %2842 = vmatprep.subr.mxu0 0.0
      %2843 = vmatpush2.msra.mxu0 0.0
      %2844 = vmatprep.subr.mxu0 0.0
      %2845 = vmatpush2.msra.mxu0 0.0
      %2846 = vmatprep.subr.mxu0 0.0
      %2847 = vmatpush2.msra.mxu0 0.0
      %2848 = vmatprep.subr.mxu0 0.0
      %2849 = vmatpush2.msra.mxu0 0.0
      %2850 = vmatprep.subr.mxu0 0.0
      %2851 = vmatpush2.msra.mxu0 0.0
      %2852 = vmatprep.subr.mxu0 0.0
      %2853 = vmatpush2.msra.mxu0 0.0
      %2854 = vmatprep.subr.mxu0 0.0
      %2855 = vmatpush2.msra.mxu0 0.0
      %2856 = vmatprep.subr.mxu0 0.0
      %2857 = vmatpush2.msra.mxu0 0.0
      %2858 = vmatprep.subr.mxu0 0.0
      %2859 = vmatpush2.msra.mxu0 0.0
      %2860 = vmatprep.subr.mxu0 0.0
      %2861 = vmatpush2.msra.mxu0 0.0
      %2862 = vmatprep.subr.mxu0 0.0
      %2863 = vmatpush2.msra.mxu0 0.0
      %2864 = vmatprep.subr.mxu0 0.0
      %2865 = vmatpush2.msra.mxu0 0.0
      %2866 = vmatprep.subr.mxu0 0.0
      %2867 = vmatpush2.msra.mxu0 0.0
      %2868 = vmatprep.subr.mxu0 0.0
      %2869 = vmatpush2.msra.mxu0 0.0
      %2870 = vmatprep.subr.mxu0 0.0
      %2871 = vmatpush2.msra.mxu0 0.0
      %2872 = vmatprep.subr.mxu0 0.0
      %2873 = vmatpush2.msra.mxu0 0.0
      %2874 = vmatprep.mubr.f32.mxu0 0.0
      %2875 = vmatmul.mubr.f32.gmra.mxu0 %v954
      %v2876 = vpop.f32.mrf.mxu0
      %v2877 = vadd.f32 0.0, %v2876
      %v2878 = vpop.f32.mrf.mxu0
      %2879 = vmatprep.mubr.f32.mxu0 0.0
      %2880 = vmatmul.mubr.f32.gmra.mxu0 %v957
      %v2881 = vpop.f32.mrf.mxu0
      %v2882 = vadd.f32 0.0, %v2881
      %v2883 = vpop.f32.mrf.mxu0
      %2884 = vmatprep.mubr.f32.mxu0 0.0
      %2885 = vmatmul.mubr.f32.gmra.mxu0 %v960
      %v2886 = vpop.f32.mrf.mxu0
      %v2887 = vadd.f32 0.0, %v2886
      %v2888 = vpop.f32.mrf.mxu0
      %2889 = vmatprep.mubr.f32.mxu0 0.0
      %2890 = vmatmul.mubr.f32.gmra.mxu0 %v963
      %v2891 = vpop.f32.mrf.mxu0
      %v2892 = vadd.f32 0.0, %v2891
      %v2893 = vpop.f32.mrf.mxu0
      %2894 = vdwg.mxu0
      %2895 = vmatprep.subr.mxu0 0.0
      %2896 = vmatpush1.msra.mxu0 0.0
      %2897 = vmatprep.subr.mxu0 0.0
      %2898 = vmatpush1.msra.mxu0 0.0
      %2899 = vmatprep.subr.mxu0 0.0
      %2900 = vmatpush1.msra.mxu0 0.0
      %2901 = vmatprep.subr.mxu0 0.0
      %2902 = vmatpush1.msra.mxu0 0.0
      %2903 = vmatprep.subr.mxu0 0.0
      %2904 = vmatpush1.msra.mxu0 0.0
      %2905 = vmatprep.subr.mxu0 0.0
      %2906 = vmatpush1.msra.mxu0 0.0
      %2907 = vmatprep.subr.mxu0 0.0
      %2908 = vmatpush1.msra.mxu0 0.0
      %2909 = vmatprep.subr.mxu0 0.0
      %2910 = vmatpush1.msra.mxu0 0.0
      %2911 = vmatprep.subr.mxu0 0.0
      %2912 = vmatpush1.msra.mxu0 0.0
      %2913 = vmatprep.subr.mxu0 0.0
      %2914 = vmatpush1.msra.mxu0 0.0
      %2915 = vmatprep.subr.mxu0 0.0
      %2916 = vmatpush1.msra.mxu0 0.0
      %2917 = vmatprep.subr.mxu0 0.0
      %2918 = vmatpush1.msra.mxu0 0.0
      %2919 = vmatprep.subr.mxu0 0.0
      %2920 = vmatpush1.msra.mxu0 %v2808
      %2921 = vmatprep.subr.mxu0 0.0
      %2922 = vmatpush1.msra.mxu0 %v2807
      %2923 = vmatprep.subr.mxu0 0.0
      %2924 = vmatpush1.msra.mxu0 %v2806
      %2925 = vmatprep.subr.mxu0 0.0
      %2926 = vmatpush1.msra.mxu0 %v2805
      %2927 = vmatprep.subr.mxu0 0.0
      %2928 = vmatpush2.msra.mxu0 0.0
      %2929 = vmatprep.subr.mxu0 0.0
      %2930 = vmatpush2.msra.mxu0 0.0
      %2931 = vmatprep.subr.mxu0 0.0
      %2932 = vmatpush2.msra.mxu0 0.0
      %2933 = vmatprep.subr.mxu0 0.0
      %2934 = vmatpush2.msra.mxu0 0.0
      %2935 = vmatprep.subr.mxu0 0.0
      %2936 = vmatpush2.msra.mxu0 0.0
      %2937 = vmatprep.subr.mxu0 0.0
      %2938 = vmatpush2.msra.mxu0 0.0
      %2939 = vmatprep.subr.mxu0 0.0
      %2940 = vmatpush2.msra.mxu0 0.0
      %2941 = vmatprep.subr.mxu0 0.0
      %2942 = vmatpush2.msra.mxu0 0.0
      %2943 = vmatprep.subr.mxu0 0.0
      %2944 = vmatpush2.msra.mxu0 0.0
      %2945 = vmatprep.subr.mxu0 0.0
      %2946 = vmatpush2.msra.mxu0 0.0
      %2947 = vmatprep.subr.mxu0 0.0
      %2948 = vmatpush2.msra.mxu0 0.0
      %2949 = vmatprep.subr.mxu0 0.0
      %2950 = vmatpush2.msra.mxu0 0.0
      %2951 = vmatprep.subr.mxu0 0.0
      %2952 = vmatpush2.msra.mxu0 0.0
      %2953 = vmatprep.subr.mxu0 0.0
      %2954 = vmatpush2.msra.mxu0 0.0
      %2955 = vmatprep.subr.mxu0 0.0
      %2956 = vmatpush2.msra.mxu0 0.0
      %2957 = vmatprep.subr.mxu0 0.0
      %2958 = vmatpush2.msra.mxu0 0.0
      %2959 = vmatprep.mubr.f32.mxu0 0.0
      %2960 = vmatmul.mubr.f32.gmra.mxu0 %v1051
      %v2961 = vpop.f32.mrf.mxu0
      %v2962 = vadd.f32 %v2877, %v2961
      %v2963 = vpop.f32.mrf.mxu0
      %2964 = vmatprep.mubr.f32.mxu0 0.0
      %2965 = vmatmul.mubr.f32.gmra.mxu0 %v1054
      %v2966 = vpop.f32.mrf.mxu0
      %v2967 = vadd.f32 %v2882, %v2966
      %v2968 = vpop.f32.mrf.mxu0
      %2969 = vmatprep.mubr.f32.mxu0 0.0
      %2970 = vmatmul.mubr.f32.gmra.mxu0 %v1057
      %v2971 = vpop.f32.mrf.mxu0
      %v2972 = vadd.f32 %v2887, %v2971
      %v2973 = vpop.f32.mrf.mxu0
      %2974 = vmatprep.mubr.f32.mxu0 0.0
      %2975 = vmatmul.mubr.f32.gmra.mxu0 %v1060
      %v2976 = vpop.f32.mrf.mxu0
      %v2977 = vadd.f32 %v2892, %v2976
      %v2978 = vpop.f32.mrf.mxu0
      %2979 = vdwg.mxu0
      %v2980 = vadd.f32 %v2962, %v563
      %v2981 = vadd.f32 %v2967, %v568
      %v2982 = vadd.f32 %v2972, %v573
      %v2983 = vadd.f32 %v2977, %v578
      %v2984 = vand.u32 2147483647, %v2980
      %v2985 = vand.u32 2147483647, %v2981
      %v2986 = vand.u32 2147483647, %v2982
      %v2987 = vand.u32 2147483647, %v2983
      %v2988 = vsub.f32 0.0, %v2984
      %v2989 = vsub.f32 0.0, %v2985
      %v2990 = vsub.f32 0.0, %v2986
      %v2991 = vsub.f32 0.0, %v2987
      %v2992 = vmul.f32 %v2988, 1.442695
      %v2993 = vpow.pop %v2992
      %v2994 = vmul.f32 %v2989, 1.442695
      %v2995 = vpow.pop %v2994
      %v2996 = vmul.f32 %v2990, 1.442695
      %v2997 = vpow.pop %v2996
      %v2998 = vmul.f32 %v2991, 1.442695
      %v2999 = vpow.pop %v2998
      %v3000 = vadd.f32 %v2993, 1.0
      %v3001 = vadd.f32 %v2995, 1.0
      %v3002 = vadd.f32 %v2997, 1.0
      %v3003 = vadd.f32 %v2999, 1.0
      %v3004 = vrcp.pop %v3000
      %v3005 = vrcp.pop %v3001
      %v3006 = vrcp.pop %v3002
      %v3007 = vrcp.pop %v3003
      %vm3008 = vcmp.ge.f32.partialorder %v2980, 0.0
      %vm3009 = vcmp.ge.f32.partialorder %v2981, 0.0
      %vm3010 = vcmp.ge.f32.partialorder %v2982, 0.0
      %vm3011 = vcmp.ge.f32.partialorder %v2983, 0.0
      %v3012 = vmul.f32 %v2993, %v3004
      %v3013 = vmul.f32 %v2995, %v3005
      %v3014 = vmul.f32 %v2997, %v3006
      %v3015 = vmul.f32 %v2999, %v3007
      %v3016 = vsel %vm3008, %v3004, %v3012
      %v3017 = vsel %vm3009, %v3005, %v3013
      %v3018 = vsel %vm3010, %v3006, %v3014
      %v3019 = vsel %vm3011, %v3007, %v3015
      %v3020 = vadd.f32 %v2666, %v758
      %v3021 = vmul.f32 %v783, %v3016
      %v3022 = vmul.f32 %v784, %v3017
      %v3023 = vmul.f32 %v785, %v3018
      %v3024 = vmul.f32 %v786, %v3019
      %3025 = vmatprep.subr.mxu0 0.0
      %3026 = vmatpush1.msra.mxu0 0.0
      %3027 = vmatprep.subr.mxu0 0.0
      %3028 = vmatpush1.msra.mxu0 0.0
      %3029 = vmatprep.subr.mxu0 0.0
      %3030 = vmatpush1.msra.mxu0 0.0
      %3031 = vmatprep.subr.mxu0 0.0
      %3032 = vmatpush1.msra.mxu0 0.0
      %3033 = vmatprep.subr.mxu0 0.0
      %3034 = vmatpush1.msra.mxu0 0.0
      %3035 = vmatprep.subr.mxu0 0.0
      %3036 = vmatpush1.msra.mxu0 0.0
      %3037 = vmatprep.subr.mxu0 0.0
      %3038 = vmatpush1.msra.mxu0 0.0
      %3039 = vmatprep.subr.mxu0 0.0
      %3040 = vmatpush1.msra.mxu0 0.0
      %3041 = vmatprep.subr.mxu0 0.0
      %3042 = vmatpush1.msra.mxu0 0.0
      %3043 = vmatprep.subr.mxu0 0.0
      %3044 = vmatpush1.msra.mxu0 0.0
      %3045 = vmatprep.subr.mxu0 0.0
      %3046 = vmatpush1.msra.mxu0 0.0
      %3047 = vmatprep.subr.mxu0 0.0
      %3048 = vmatpush1.msra.mxu0 0.0
      %3049 = vmatprep.subr.mxu0 0.0
      %3050 = vmatpush1.msra.mxu0 %v3024
      %3051 = vmatprep.subr.mxu0 0.0
      %3052 = vmatpush1.msra.mxu0 %v3023
      %3053 = vmatprep.subr.mxu0 0.0
      %3054 = vmatpush1.msra.mxu0 %v3022
      %3055 = vmatprep.subr.mxu0 0.0
      %3056 = vmatpush1.msra.mxu0 %v3021
      %3057 = vmatprep.subr.mxu0 0.0
      %3058 = vmatpush2.msra.mxu0 0.0
      %3059 = vmatprep.subr.mxu0 0.0
      %3060 = vmatpush2.msra.mxu0 0.0
      %3061 = vmatprep.subr.mxu0 0.0
      %3062 = vmatpush2.msra.mxu0 0.0
      %3063 = vmatprep.subr.mxu0 0.0
      %3064 = vmatpush2.msra.mxu0 0.0
      %3065 = vmatprep.subr.mxu0 0.0
      %3066 = vmatpush2.msra.mxu0 0.0
      %3067 = vmatprep.subr.mxu0 0.0
      %3068 = vmatpush2.msra.mxu0 0.0
      %3069 = vmatprep.subr.mxu0 0.0
      %3070 = vmatpush2.msra.mxu0 0.0
      %3071 = vmatprep.subr.mxu0 0.0
      %3072 = vmatpush2.msra.mxu0 0.0
      %3073 = vmatprep.subr.mxu0 0.0
      %3074 = vmatpush2.msra.mxu0 0.0
      %3075 = vmatprep.subr.mxu0 0.0
      %3076 = vmatpush2.msra.mxu0 0.0
      %3077 = vmatprep.subr.mxu0 0.0
      %3078 = vmatpush2.msra.mxu0 0.0
      %3079 = vmatprep.subr.mxu0 0.0
      %3080 = vmatpush2.msra.mxu0 0.0
      %3081 = vmatprep.subr.mxu0 0.0
      %3082 = vmatpush2.msra.mxu0 0.0
      %3083 = vmatprep.subr.mxu0 0.0
      %3084 = vmatpush2.msra.mxu0 0.0
      %3085 = vmatprep.subr.mxu0 0.0
      %3086 = vmatpush2.msra.mxu0 0.0
      %3087 = vmatprep.subr.mxu0 0.0
      %3088 = vmatpush2.msra.mxu0 0.0
      %3089 = vmatprep.mubr.f32.mxu0 0.0
      %3090 = vmatmul.mubr.f32.gmra.mxu0 %v1193
      %v3091 = vpop.f32.mrf.mxu0
      %v3092 = vadd.f32 0.0, %v3091
      %v3093 = vpop.f32.mrf.mxu0
      %3094 = vmatprep.mubr.f32.mxu0 0.0
      %3095 = vmatmul.mubr.f32.gmra.mxu0 %v1196
      %v3096 = vpop.f32.mrf.mxu0
      %v3097 = vadd.f32 0.0, %v3096
      %v3098 = vpop.f32.mrf.mxu0
      %3099 = vmatprep.mubr.f32.mxu0 0.0
      %3100 = vmatmul.mubr.f32.gmra.mxu0 %v1199
      %v3101 = vpop.f32.mrf.mxu0
      %v3102 = vadd.f32 0.0, %v3101
      %v3103 = vpop.f32.mrf.mxu0
      %3104 = vmatprep.mubr.f32.mxu0 0.0
      %3105 = vmatmul.mubr.f32.gmra.mxu0 %v1202
      %v3106 = vpop.f32.mrf.mxu0
      %v3107 = vadd.f32 0.0, %v3106
      %v3108 = vpop.f32.mrf.mxu0
      %3109 = vdwg.mxu0
      %v3110 = vmul.f32 %v3092, %v649
      %v3111 = vmul.f32 %v3097, %v650
      %v3112 = vmul.f32 %v3102, %v651
      %v3113 = vmul.f32 %v3107, %v652
      %3114 = vmatprep.subr.mxu0 0.0
      %3115 = vmatpush1.msra.mxu0 0.0
      %3116 = vmatprep.subr.mxu0 0.0
      %3117 = vmatpush1.msra.mxu0 0.0
      %3118 = vmatprep.subr.mxu0 0.0
      %3119 = vmatpush1.msra.mxu0 0.0
      %3120 = vmatprep.subr.mxu0 0.0
      %3121 = vmatpush1.msra.mxu0 0.0
      %3122 = vmatprep.subr.mxu0 0.0
      %3123 = vmatpush1.msra.mxu0 0.0
      %3124 = vmatprep.subr.mxu0 0.0
      %3125 = vmatpush1.msra.mxu0 0.0
      %3126 = vmatprep.subr.mxu0 0.0
      %3127 = vmatpush1.msra.mxu0 0.0
      %3128 = vmatprep.subr.mxu0 0.0
      %3129 = vmatpush1.msra.mxu0 0.0
      %3130 = vmatprep.subr.mxu0 0.0
      %3131 = vmatpush1.msra.mxu0 0.0
      %3132 = vmatprep.subr.mxu0 0.0
      %3133 = vmatpush1.msra.mxu0 0.0
      %3134 = vmatprep.subr.mxu0 0.0
      %3135 = vmatpush1.msra.mxu0 0.0
      %3136 = vmatprep.subr.mxu0 0.0
      %3137 = vmatpush1.msra.mxu0 0.0
      %3138 = vmatprep.subr.mxu0 0.0
      %3139 = vmatpush1.msra.mxu0 %v3024
      %3140 = vmatprep.subr.mxu0 0.0
      %3141 = vmatpush1.msra.mxu0 %v3023
      %3142 = vmatprep.subr.mxu0 0.0
      %3143 = vmatpush1.msra.mxu0 %v3022
      %3144 = vmatprep.subr.mxu0 0.0
      %3145 = vmatpush1.msra.mxu0 %v3021
      %3146 = vmatprep.subr.mxu0 0.0
      %3147 = vmatpush2.msra.mxu0 0.0
      %3148 = vmatprep.subr.mxu0 0.0
      %3149 = vmatpush2.msra.mxu0 0.0
      %3150 = vmatprep.subr.mxu0 0.0
      %3151 = vmatpush2.msra.mxu0 0.0
      %3152 = vmatprep.subr.mxu0 0.0
      %3153 = vmatpush2.msra.mxu0 0.0
      %3154 = vmatprep.subr.mxu0 0.0
      %3155 = vmatpush2.msra.mxu0 0.0
      %3156 = vmatprep.subr.mxu0 0.0
      %3157 = vmatpush2.msra.mxu0 0.0
      %3158 = vmatprep.subr.mxu0 0.0
      %3159 = vmatpush2.msra.mxu0 0.0
      %3160 = vmatprep.subr.mxu0 0.0
      %3161 = vmatpush2.msra.mxu0 0.0
      %3162 = vmatprep.subr.mxu0 0.0
      %3163 = vmatpush2.msra.mxu0 0.0
      %3164 = vmatprep.subr.mxu0 0.0
      %3165 = vmatpush2.msra.mxu0 0.0
      %3166 = vmatprep.subr.mxu0 0.0
      %3167 = vmatpush2.msra.mxu0 0.0
      %3168 = vmatprep.subr.mxu0 0.0
      %3169 = vmatpush2.msra.mxu0 0.0
      %3170 = vmatprep.subr.mxu0 0.0
      %3171 = vmatpush2.msra.mxu0 0.0
      %3172 = vmatprep.subr.mxu0 0.0
      %3173 = vmatpush2.msra.mxu0 0.0
      %3174 = vmatprep.subr.mxu0 0.0
      %3175 = vmatpush2.msra.mxu0 0.0
      %3176 = vmatprep.subr.mxu0 0.0
      %3177 = vmatpush2.msra.mxu0 0.0
      %3178 = vmatprep.mubr.f32.mxu0 0.0
      %3179 = vmatmul.mubr.f32.gmra.mxu0 %v1294
      %v3180 = vpop.f32.mrf.mxu0
      %v3181 = vadd.f32 0.0, %v3180
      %v3182 = vpop.f32.mrf.mxu0
      %3183 = vdwg.mxu0
      %v3184 = vmul.f32 %v3181, %v558
      %v3185 = vadd.f32 %v3020, %v3184
      %v3186 = vmul.f32 %v3110, %v2801
      %v3187 = vmul.f32 %v3111, %v2802
      %v3188 = vmul.f32 %v3112, %v2803
      %v3189 = vmul.f32 %v3113, %v2804
      %3190 = vmatprep.subr.mxu0 0.0
      %3191 = vmatpush1.msra.mxu0 0.0
      %3192 = vmatprep.subr.mxu0 0.0
      %3193 = vmatpush1.msra.mxu0 0.0
      %3194 = vmatprep.subr.mxu0 0.0
      %3195 = vmatpush1.msra.mxu0 0.0
      %3196 = vmatprep.subr.mxu0 0.0
      %3197 = vmatpush1.msra.mxu0 0.0
      %3198 = vmatprep.subr.mxu0 0.0
      %3199 = vmatpush1.msra.mxu0 0.0
      %3200 = vmatprep.subr.mxu0 0.0
      %3201 = vmatpush1.msra.mxu0 0.0
      %3202 = vmatprep.subr.mxu0 0.0
      %3203 = vmatpush1.msra.mxu0 0.0
      %3204 = vmatprep.subr.mxu0 0.0
      %3205 = vmatpush1.msra.mxu0 0.0
      %3206 = vmatprep.subr.mxu0 0.0
      %3207 = vmatpush1.msra.mxu0 0.0
      %3208 = vmatprep.subr.mxu0 0.0
      %3209 = vmatpush1.msra.mxu0 0.0
      %3210 = vmatprep.subr.mxu0 0.0
      %3211 = vmatpush1.msra.mxu0 0.0
      %3212 = vmatprep.subr.mxu0 0.0
      %3213 = vmatpush1.msra.mxu0 0.0
      %3214 = vmatprep.subr.mxu0 0.0
      %3215 = vmatpush1.msra.mxu0 %v3189
      %3216 = vmatprep.subr.mxu0 0.0
      %3217 = vmatpush1.msra.mxu0 %v3188
      %3218 = vmatprep.subr.mxu0 0.0
      %3219 = vmatpush1.msra.mxu0 %v3187
      %3220 = vmatprep.subr.mxu0 0.0
      %3221 = vmatpush1.msra.mxu0 %v3186
      %3222 = vmatprep.subr.mxu0 0.0
      %3223 = vmatpush2.msra.mxu0 0.0
      %3224 = vmatprep.subr.mxu0 0.0
      %3225 = vmatpush2.msra.mxu0 0.0
      %3226 = vmatprep.subr.mxu0 0.0
      %3227 = vmatpush2.msra.mxu0 0.0
      %3228 = vmatprep.subr.mxu0 0.0
      %3229 = vmatpush2.msra.mxu0 0.0
      %3230 = vmatprep.subr.mxu0 0.0
      %3231 = vmatpush2.msra.mxu0 0.0
      %3232 = vmatprep.subr.mxu0 0.0
      %3233 = vmatpush2.msra.mxu0 0.0
      %3234 = vmatprep.subr.mxu0 0.0
      %3235 = vmatpush2.msra.mxu0 0.0
      %3236 = vmatprep.subr.mxu0 0.0
      %3237 = vmatpush2.msra.mxu0 0.0
      %3238 = vmatprep.subr.mxu0 0.0
      %3239 = vmatpush2.msra.mxu0 0.0
      %3240 = vmatprep.subr.mxu0 0.0
      %3241 = vmatpush2.msra.mxu0 0.0
      %3242 = vmatprep.subr.mxu0 0.0
      %3243 = vmatpush2.msra.mxu0 0.0
      %3244 = vmatprep.subr.mxu0 0.0
      %3245 = vmatpush2.msra.mxu0 0.0
      %3246 = vmatprep.subr.mxu0 0.0
      %3247 = vmatpush2.msra.mxu0 0.0
      %3248 = vmatprep.subr.mxu0 0.0
      %3249 = vmatpush2.msra.mxu0 0.0
      %3250 = vmatprep.subr.mxu0 0.0
      %3251 = vmatpush2.msra.mxu0 0.0
      %3252 = vmatprep.subr.mxu0 0.0
      %3253 = vmatpush2.msra.mxu0 0.0
      %3254 = vmatprep.mubr.f32.mxu0 0.0
      %3255 = vmatmul.mubr.f32.gmra.mxu0 %v1373
      %v3256 = vpop.f32.mrf.mxu0
      %v3257 = vadd.f32 0.0, %v3256
      %v3258 = vpop.f32.mrf.mxu0
      %3259 = vdwg.mxu0
      %v3260 = vmul.f32 %v3257, %v287
      %v3261 = vadd.f32 %v3185, %v3260
      %v3262 = vsub.f32 %v55, %v3261
      %s3263 = sadd.s32 %s797, 4
      %s3264 = scvt.s32.f32 %s3263
      %v3265 = vstv %s3264
      %v3266 = vrcp.pop %v3265
      %s3267 = vtos %v3266
      %s3268 = smul.f32 2.0, %s3267
      %v3269 = vstv %s3268
      %v3270 = vmul.f32 %v3269, %v3262
      %v3271 = vadd.f32 %v2666, %v3270
      %v3272 = vmul.f32 %v3262, %v3262
      %v3273 = vrot.slane %v3272, 4
      %v3274 = vadd.f32 %v3272, %v3273
      %v3275 = vrot.slane %v3274, 2
      %v3276 = vadd.f32 %v3274, %v3275
      %v3277 = vrot.slane %v3276, 1
      %v3278 = vadd.f32 %v3276, %v3277
      %v3279 = vrsqrt.pop %v3278
      %v3280 = vmul.f32 %v3278, %v3279
      %vm3281 = vcmp.eq.f32.partialorder %v3278, inf
      %v3282 = vsel %vm3281, %v3278, %v3280
      %vm3283 = vcmp.eq.f32.partialorder %v3278, 0.0
      %v3284 = vand.u32 %v3278, 2147483648
      %v3285 = vsel %vm3283, %v3284, %v3282
      %vm3286 = vcmask 1040384
      %v3287 = vsel %vm3286, %v3285, 0.0
      %3288 = vadd.xlane.f32.xlu0 %v3287
      %v3289 = vpop.xlane.xlu0 %3288
      %v3290 = vrot.slane %v3289, 4
      %v3291 = vadd.f32 %v3289, %v3290
      %v3292 = vrot.slane %v3291, 2
      %v3293 = vadd.f32 %v3291, %v3292
      %v3294 = vrot.slane %v3293, 1
      %v3295 = vadd.f32 %v3293, %v3294
      %s3296 = vtos %v3295
      %s3297 = smul.f32 %s3296, 0.0078125
      %s3298 = sadd.s32 %s788, 1
    $region70: #{tpu_custom_call.1} parent=1 // loop_footer
      _
    $region71: #{tpu_custom_call.1} parent=1 // loop_footer_branch
      %787 = sbr.rel target = $region67
    $region72: #{tpu_custom_call.1} parent=1 // loop_exit
      _
    %v3299 = vadd.f32 %v789, %v55
    %v3300 = vrot.slane %v3299, 4
    %v3301 = vadd.f32 %v3299, %v3300
    %v3302 = vrot.slane %v3301, 2
    %v3303 = vadd.f32 %v3301, %v3302
    %v3304 = vrot.slane %v3303, 1
    %v3305 = vadd.f32 %v3303, %v3304
    %v3306 = vrcp.pop 8.0
    %v3307 = vmul.f32 %v3305, %v3306
    %3308 = vst [vmem:[#allocation2] sm:$0x1] %v3307
    // Predicated region
    $region73: #{tpu_custom_call.1} parent=1 // pred_check
      _
    $region74: #{tpu_custom_call.1} parent=1 // pred_check_branch
      %3310 = sbr.rel (0) target = $region76
    $region75: #{tpu_custom_call.1} parent=1 // pred_region
      %s3312 = ssub.s32 16, 16
      %3313 = vsyncadd [#allocation3], %s3312
      %s3315 = sshll.u32 [#allocation2], 4
      %s3316 = int_to_ptr.vmem [resolvable:$true] %s3315
      %3318 = dma.vmem_to_hbm [thread:$0]  %s3316, 16, %s16, [#allocation3]
    $region76: #{tpu_custom_call.1} parent=1 // pred_fallthru
      _
    // Predicated region
    $region77: #{tpu_custom_call.1} parent=1 // pred_check
      _
    $region78: #{tpu_custom_call.1} parent=1 // pred_check_branch
      %3320 = sbr.rel (0) target = $region80
    $region79: #{tpu_custom_call.1} parent=1 // pred_region
      %3321 = dma.done [#allocation3], 16
    $region80: #{tpu_custom_call.1} parent=1 // pred_fallthru
      _
    %3322 = vsyncpa [#allocation3], 1

</llo_original>
